<compile_context>
chip_gen: v7x
topology: tpu7x:2x2x1
jax: 0.10.0
libtpu: 0.0.40
codegen_flags: <defaults>
</compile_context>

<pallas_src>
import math
import functools

import jax
import jax.numpy as jnp
import numpy as np
from jax.experimental import pallas as pl
from jax.experimental.pallas import tpu as pltpu


def _round_up(v, m):
    return ((v + m - 1) // m) * m


# ---------------------------------------------------------------------------
# Pallas kernel: one (group, batch, row-tile) step = one K-folded MXU matmul.
# ---------------------------------------------------------------------------
def _conv_rowtile_kernel(x_ref, w_ref, b_ref, o_ref, *,
                         row_tile, wo_pad, kh, kw, sh, sw, dh, dw, wp):
    """x_ref : (P, cin_p)            zero-padded channel-last image (flat pixels)
       w_ref : (kh*kw*cin_p, Np)     K-folded weights for this group
       b_ref : (1, Np)               bias row (f32)
       o_ref : (row_tile*wo_pad, Np) output tile (lane-dense Np)
    """
    rt = pl.program_id(2)
    # Flat pixel offset of the first output row of this tile (H-stride applied).
    tile_base = rt * (row_tile * sh * wp)

    rows = []
    for r in range(row_tile):                                  # static, unrolled
        row_base = r * sh * wp
        pieces = []
        for ki in range(kh):
            for kj in range(kw):
                start = tile_base + row_base + ki * dh * wp + kj * dw
                if sw == 1:
                    p = x_ref[pl.ds(start, wo_pad), :]
                else:
                    p = x_ref[pl.ds(start, wo_pad, stride=sw), :]
                pieces.append(p)
        # Fold the kh*kw taps into the contraction (lane) dimension.
        rows.append(pieces[0] if len(pieces) == 1
                    else jnp.concatenate(pieces, axis=-1))
    slab = rows[0] if len(rows) == 1 else jnp.concatenate(rows, axis=0)

    # Single MXU matmul over K = kh*kw*cin_p, f32 accumulation, bias epilogue.
    acc = jnp.dot(slab, w_ref[...], preferred_element_type=jnp.float32)
    acc = acc + b_ref[...]
    o_ref[...] = acc.astype(o_ref.dtype)


# ---------------------------------------------------------------------------
# Functional conv2d (F.conv2d semantics: NCHW in, OIHW weight, NCHW out).
# ---------------------------------------------------------------------------
@functools.partial(jax.jit, static_argnames=("stride", "padding", "dilation",
                                             "groups", "compute_dtype",
                                             "row_tile"))
def conv2d_pallas(x, weight, bias, *, stride, padding, dilation, groups,
                  compute_dtype=jnp.bfloat16, row_tile=None):
    Nb, Cin, H, W = x.shape
    Cout, cin_g, kh, kw = weight.shape
    G = groups
    coutg = Cout // G
    sh, sw = stride
    ph, pw = padding
    dh, dw = dilation

    Hp, Wp = H + 2 * ph, W + 2 * pw
    Ho = (Hp - dh * (kh - 1) - 1) // sh + 1
    Wo = (Wp - dw * (kw - 1) - 1) // sw + 1

    cin_p = _round_up(cin_g, 8)               # contraction sub-chunk per tap
    # Lane-dense out-channel padding; 256-wide when coutg exceeds one vreg row.
    # TODO(synk): pack multiple groups' coutg into one 256-lane block when
    #             coutg <= 128 to cut output write amplification further.
    n_pad = _round_up(coutg, 256) if coutg > 128 else 128
    K = kh * kw * cin_p

    sub_align = 8 if jnp.dtype(compute_dtype).itemsize >= 4 else 16
    wo_pad = _round_up(Wo, sub_align)
    if row_tile is None:
        row_tile = max(1, min(Ho, 512 // wo_pad, 64))
    rt_count = pl.cdiv(Ho, row_tile)
    ho_pad = rt_count * row_tile
    m_tile = row_tile * wo_pad

    # Flat padded pixel count + slack so every (row, tap, stride) slice —
    # including the padding rows of the last tile — stays in bounds (slack
    # rows are zero-filled, so padded outputs are harmless and sliced away).
    p_need = (((ho_pad - 1) * sh + (kh - 1) * dh) * Wp
              + (kw - 1) * dw + (wo_pad - 1) * sw + 1)
    P = _round_up(max(Hp * Wp, p_need), 8)

    # ---- activations: NCHW -> (Nb, G, P, cin_p) channel-last, compute dtype.
    # TODO(synk): move this pad+transpose into the kernel (NHWC input + copy
    #             into a zero-initialized VMEM scratch) to save one HBM pass.
    xg = x.reshape(Nb, G, cin_g, H, W)
    xg = jnp.pad(xg, ((0, 0), (0, 0), (0, cin_p - cin_g), (ph, ph), (pw, pw)))
    xg = xg.transpose(0, 1, 3, 4, 2)                      # (Nb,G,Hp,Wp,cin_p)
    x_flat = xg.reshape(Nb, G, Hp * Wp, cin_p)
    x_flat = jnp.pad(x_flat, ((0, 0), (0, 0), (0, P - Hp * Wp), (0, 0)))
    x_flat = x_flat.astype(compute_dtype)

    # ---- weights: (Cout, cin_g, kh, kw) -> K-folded (G, K, n_pad) ----------
    wg = weight.reshape(G, coutg, cin_g, kh, kw)
    wg = wg.transpose(0, 3, 4, 2, 1)                      # (G,kh,kw,cin_g,coutg)
    wg = jnp.pad(wg, ((0, 0), (0, 0), (0, 0),
                      (0, cin_p - cin_g), (0, n_pad - coutg)))
    w_fold = wg.reshape(G, K, n_pad).astype(compute_dtype)

    # ---- bias: (Cout,) -> (G, 1, n_pad) f32 --------------------------------
    bg = jnp.pad(bias.reshape(G, 1, coutg),
                 ((0, 0), (0, 0), (0, n_pad - coutg))).astype(jnp.float32)

    kernel = functools.partial(
        _conv_rowtile_kernel, row_tile=row_tile, wo_pad=wo_pad,
        kh=kh, kw=kw, sh=sh, sw=sw, dh=dh, dw=dw, wp=Wp)

    # Explicit scoped-VMEM budget sized from the actual (double-buffered) tiles.
    cd_size = jnp.dtype(compute_dtype).itemsize
    out_size = jnp.dtype(x.dtype).itemsize
    vmem_needed = (2 * P * cin_p * cd_size               # image
                   + 2 * K * n_pad * cd_size             # folded weights
                   + 2 * 8 * n_pad * 4                   # bias row
                   + 2 * m_tile * n_pad * out_size       # output tile
                   + 2 * (m_tile * K * cd_size + m_tile * n_pad * 4)  # slab/acc
                   + (4 << 20))
    vmem_limit = int(min(64 << 20, max(32 << 20, vmem_needed)))

    out_flat = pl.pallas_call(
        kernel,
        out_shape=jax.ShapeDtypeStruct((Nb, G, ho_pad * wo_pad, n_pad), x.dtype),
        grid_spec=pltpu.PrefetchScalarGridSpec(
            num_scalar_prefetch=0,
            grid=(G, Nb, rt_count),        # weights constant over (b, t);
            in_specs=[                     # image constant over t -> DMA'd once
                pl.BlockSpec((None, None, P, cin_p),
                             lambda g, b, t: (b, g, 0, 0)),    # image
                pl.BlockSpec((None, K, n_pad),
                             lambda g, b, t: (g, 0, 0)),       # folded weights
                pl.BlockSpec((None, 1, n_pad),
                             lambda g, b, t: (g, 0, 0)),       # bias
            ],
            out_specs=pl.BlockSpec((None, None, m_tile, n_pad),
                                   lambda g, b, t: (b, g, t, 0)),
        ),
        compiler_params=pltpu.CompilerParams(
            dimension_semantics=("parallel", "parallel", "parallel"),
            vmem_limit_bytes=vmem_limit),
    )(x_flat, w_fold, bg)

    # Dense output: just crop the pad rows/cols/channels and go back to NCHW.
    out = out_flat.reshape(Nb, G, ho_pad, wo_pad, n_pad)[:, :, :Ho, :Wo, :coutg]
    out = out.transpose(0, 1, 4, 2, 3).reshape(Nb, Cout, Ho, Wo)
    return out


# ---------------------------------------------------------------------------
# BayesianConv2d module (forward semantics of the PyTorch module)
# ---------------------------------------------------------------------------
class BayesianConv2d:
    def __init__(self, in_channels, out_channels, kernel_size, stride=1,
                 padding=0, dilation=1, groups=1, bias=True, ratio=0.25,
                 compute_dtype=jnp.bfloat16, key=None):
        def _pair(v):
            return (v, v) if isinstance(v, int) else tuple(v)

        if key is None:
            key = jax.random.PRNGKey(0)

        self.in_channels = in_channels
        self.out_channels = out_channels
        self.kernel_size = _pair(kernel_size)
        self.stride = _pair(stride)
        self.padding = _pair(padding)
        self.dilation = _pair(dilation)
        self.groups = groups
        self.compute_dtype = compute_dtype

        kh, kw = self.kernel_size
        receptive_field_size = kh * kw
        fan_out = out_channels * receptive_field_size
        total_var = 2.0 / fan_out
        noise_var = total_var * ratio
        mu_var = total_var - noise_var
        noise_std = math.sqrt(noise_var)
        mu_std = math.sqrt(mu_var)
        bound = math.sqrt(3) * mu_std
        rho_init = float(np.log(np.exp(noise_std) - 1.0))

        k_mu, self._sample_key = jax.random.split(key)
        self.weight_mu = jax.random.uniform(
            k_mu, (out_channels, in_channels // groups, kh, kw),
            dtype=jnp.float32, minval=-bound, maxval=bound)
        self.weight_rho = jnp.full((out_channels, 1, 1, 1), rho_init,
                                   dtype=jnp.float32)
        self.bias = jnp.zeros((out_channels,), dtype=jnp.float32)

    def _sampled_weight(self, key):
        sigma = jnp.log1p(jnp.exp(self.weight_rho))          # (Cout,1,1,1)
        eps = jax.random.normal(key, self.weight_mu.shape, dtype=jnp.float32)
        return self.weight_mu + sigma * eps

    def forward(self, x, sample=False, key=None):
        """x: (N, Cin, H, W) float32 -> (N, Cout, Ho, Wo) float32."""
        if sample:
            if key is None:
                # Fresh noise on every stochastic forward pass.
                self._sample_key, key = jax.random.split(self._sample_key)
            weight = self._sampled_weight(key)
        else:
            weight = self.weight_mu
        return conv2d_pallas(x, weight, self.bias,
                             stride=self.stride, padding=self.padding,
                             dilation=self.dilation, groups=self.groups,
                             compute_dtype=self.compute_dtype)


# ---------------------------------------------------------------------------
# main
# ---------------------------------------------------------------------------
if __name__ == "__main__":
    key = jax.random.PRNGKey(0)
    k_x, k_layer, k_sample, k_layer2, k_w3 = jax.random.split(key, 5)

    Nb, Cin, H, W = 2, 4, 16, 16
    Cout, ksize, stride, padding = 8, 3, 1, 1

    x = jax.random.normal(k_x, (Nb, Cin, H, W), dtype=jnp.float32)

    def conv_ref(xx, w, b, stride, padding, dilation, groups):
        return jax.lax.conv_general_dilated(
            xx, w, window_strides=stride,
            padding=[(padding[0], padding[0]), (padding[1], padding[1])],
            rhs_dilation=dilation,
            dimension_numbers=("NCHW", "OIHW", "NCHW"),
            feature_group_count=groups,
        ) + b.reshape(1, -1, 1, 1)

    # --- 1) default geometry, f32 MXU operands (tight tolerance) ------------
    layer = BayesianConv2d(Cin, Cout, ksize, stride=stride, padding=padding,
                           compute_dtype=jnp.float32, key=k_layer)
    out = jax.block_until_ready(layer.forward(x, sample=False))
    out_s = jax.block_until_ready(layer.forward(x, sample=True, key=k_sample))
    ref = conv_ref(x, layer.weight_mu, layer.bias, layer.stride, layer.padding,
                   layer.dilation, layer.groups)
    np.testing.assert_allclose(np.asarray(out), np.asarray(ref),
                               rtol=1e-5, atol=1e-5)
    assert out.shape == (Nb, Cout, H, W)
    assert out_s.shape == (Nb, Cout, H, W)

    # --- 2) grouped + strided + dilated (in-kernel stride path) -------------
    layer2 = BayesianConv2d(Cin, Cout, 3, stride=2, padding=2, dilation=2,
                            groups=2, compute_dtype=jnp.float32, key=k_layer2)
    out2 = jax.block_until_ready(layer2.forward(x, sample=False))
    ref2 = conv_ref(x, layer2.weight_mu, layer2.bias, layer2.stride,
                    layer2.padding, layer2.dilation, layer2.groups)
    np.testing.assert_allclose(np.asarray(out2), np.asarray(ref2),
                               rtol=1e-5, atol=1e-5)

    # --- 3) multi-row-tile + ragged Ho/Wo (exercises the row-tile grid axis) -
    x3 = jax.random.normal(k_x, (1, 3, 20, 20), dtype=jnp.float32)
    w3 = jax.random.normal(k_w3, (4, 3, 3, 3), dtype=jnp.float32) * 0.1
    b3 = jnp.zeros((4,), dtype=jnp.float32)
    out3 = jax.block_until_ready(conv2d_pallas(
        x3, w3, b3, stride=(1, 1), padding=(1, 1), dilation=(1, 1),
        groups=1, compute_dtype=jnp.float32, row_tile=8))
    ref3 = conv_ref(x3, w3, b3, (1, 1), (1, 1), (1, 1), 1)
    np.testing.assert_allclose(np.asarray(out3), np.asarray(ref3),
                               rtol=1e-5, atol=1e-5)

    # --- 4) default bf16 MXU-operand path (f32 accumulation), looser tol ----
    layer_bf16 = BayesianConv2d(Cin, Cout, ksize, stride=stride,
                                padding=padding, key=k_layer)
    out_bf16 = jax.block_until_ready(layer_bf16.forward(x, sample=False))
    np.testing.assert_allclose(np.asarray(out_bf16), np.asarray(ref),
                               rtol=3e-2, atol=3e-2)

    print("KERNEL_OK")
</pallas_src>

<mosaic_0001>
module attributes {stable_mosaic.version = 11 : i64} {
  func.func @_conv_rowtile_kernel(%arg0: i32, %arg1: i32, %arg2: i32, %arg3: memref<1x1x328x8xf32, #tpu.memory_space<vmem>>, %arg4: memref<1x72x128xf32, #tpu.memory_space<vmem>>, %arg5: memref<1x1x128xf32, #tpu.memory_space<vmem>>, %arg6: memref<1x1x256x128xf32, #tpu.memory_space<vmem>>) attributes {dimension_semantics = [#tpu.dimension_semantics<parallel>, #tpu.dimension_semantics<parallel>, #tpu.dimension_semantics<parallel>], iteration_bounds = array<i64: 1, 2, 1>, scalar_prefetch = 0 : i64, scratch_operands = 0 : i64, tpu.core_type = #tpu.core_type<tc>, window_params = [{transform_indices = @transform_0, window_bounds = array<i64: 1, 1, 328, 8>}, {transform_indices = @transform_1, window_bounds = array<i64: 1, 72, 128>}, {transform_indices = @transform_2, window_bounds = array<i64: 1, 1, 128>}, {transform_indices = @transform_3, window_bounds = array<i64: 1, 1, 256, 128>}]} {
    %c288_i32 = arith.constant 288 : i32
    %0 = arith.muli %arg2, %c288_i32 : i32
    %c0_i32 = arith.constant 0 : i32
    %1 = arith.addi %0, %c0_i32 : i32
    %c0_i32_0 = arith.constant 0 : i32
    %2 = arith.addi %1, %c0_i32_0 : i32
    %c0_i32_1 = arith.constant 0 : i32
    %3 = arith.addi %2, %c0_i32_1 : i32
    %c0 = arith.constant 0 : index
    %c0_2 = arith.constant 0 : index
    %4 = arith.index_cast %3 : i32 to index
    %c0_3 = arith.constant 0 : index
    %5 = vector.load %arg3[%c0, %c0_2, %4, %c0_3] : memref<1x1x328x8xf32, #tpu.memory_space<vmem>>, vector<1x1x16x8xf32>
    %6 = vector.shape_cast %5 : vector<1x1x16x8xf32> to vector<16x8xf32>
    %c0_i32_4 = arith.constant 0 : i32
    %7 = arith.addi %0, %c0_i32_4 : i32
    %c0_i32_5 = arith.constant 0 : i32
    %8 = arith.addi %7, %c0_i32_5 : i32
    %c1_i32 = arith.constant 1 : i32
    %9 = arith.addi %8, %c1_i32 : i32
    %c0_6 = arith.constant 0 : index
    %c0_7 = arith.constant 0 : index
    %10 = arith.index_cast %9 : i32 to index
    %c0_8 = arith.constant 0 : index
    %11 = vector.load %arg3[%c0_6, %c0_7, %10, %c0_8] : memref<1x1x328x8xf32, #tpu.memory_space<vmem>>, vector<1x1x16x8xf32>
    %12 = vector.shape_cast %11 : vector<1x1x16x8xf32> to vector<16x8xf32>
    %c0_i32_9 = arith.constant 0 : i32
    %13 = arith.addi %0, %c0_i32_9 : i32
    %c0_i32_10 = arith.constant 0 : i32
    %14 = arith.addi %13, %c0_i32_10 : i32
    %c2_i32 = arith.constant 2 : i32
    %15 = arith.addi %14, %c2_i32 : i32
    %c0_11 = arith.constant 0 : index
    %c0_12 = arith.constant 0 : index
    %16 = arith.index_cast %15 : i32 to index
    %c0_13 = arith.constant 0 : index
    %17 = vector.load %arg3[%c0_11, %c0_12, %16, %c0_13] : memref<1x1x328x8xf32, #tpu.memory_space<vmem>>, vector<1x1x16x8xf32>
    %18 = vector.shape_cast %17 : vector<1x1x16x8xf32> to vector<16x8xf32>
    %c0_i32_14 = arith.constant 0 : i32
    %19 = arith.addi %0, %c0_i32_14 : i32
    %c18_i32 = arith.constant 18 : i32
    %20 = arith.addi %19, %c18_i32 : i32
    %c0_i32_15 = arith.constant 0 : i32
    %21 = arith.addi %20, %c0_i32_15 : i32
    %c0_16 = arith.constant 0 : index
    %c0_17 = arith.constant 0 : index
    %22 = arith.index_cast %21 : i32 to index
    %c0_18 = arith.constant 0 : index
    %23 = vector.load %arg3[%c0_16, %c0_17, %22, %c0_18] : memref<1x1x328x8xf32, #tpu.memory_space<vmem>>, vector<1x1x16x8xf32>
    %24 = vector.shape_cast %23 : vector<1x1x16x8xf32> to vector<16x8xf32>
    %c0_i32_19 = arith.constant 0 : i32
    %25 = arith.addi %0, %c0_i32_19 : i32
    %c18_i32_20 = arith.constant 18 : i32
    %26 = arith.addi %25, %c18_i32_20 : i32
    %c1_i32_21 = arith.constant 1 : i32
    %27 = arith.addi %26, %c1_i32_21 : i32
    %c0_22 = arith.constant 0 : index
    %c0_23 = arith.constant 0 : index
    %28 = arith.index_cast %27 : i32 to index
    %c0_24 = arith.constant 0 : index
    %29 = vector.load %arg3[%c0_22, %c0_23, %28, %c0_24] : memref<1x1x328x8xf32, #tpu.memory_space<vmem>>, vector<1x1x16x8xf32>
    %30 = vector.shape_cast %29 : vector<1x1x16x8xf32> to vector<16x8xf32>
    %c0_i32_25 = arith.constant 0 : i32
    %31 = arith.addi %0, %c0_i32_25 : i32
    %c18_i32_26 = arith.constant 18 : i32
    %32 = arith.addi %31, %c18_i32_26 : i32
    %c2_i32_27 = arith.constant 2 : i32
    %33 = arith.addi %32, %c2_i32_27 : i32
    %c0_28 = arith.constant 0 : index
    %c0_29 = arith.constant 0 : index
    %34 = arith.index_cast %33 : i32 to index
    %c0_30 = arith.constant 0 : index
    %35 = vector.load %arg3[%c0_28, %c0_29, %34, %c0_30] : memref<1x1x328x8xf32, #tpu.memory_space<vmem>>, vector<1x1x16x8xf32>
    %36 = vector.shape_cast %35 : vector<1x1x16x8xf32> to vector<16x8xf32>
    %c0_i32_31 = arith.constant 0 : i32
    %37 = arith.addi %0, %c0_i32_31 : i32
    %c36_i32 = arith.constant 36 : i32
    %38 = arith.addi %37, %c36_i32 : i32
    %c0_i32_32 = arith.constant 0 : i32
    %39 = arith.addi %38, %c0_i32_32 : i32
    %c0_33 = arith.constant 0 : index
    %c0_34 = arith.constant 0 : index
    %40 = arith.index_cast %39 : i32 to index
    %c0_35 = arith.constant 0 : index
    %41 = vector.load %arg3[%c0_33, %c0_34, %40, %c0_35] : memref<1x1x328x8xf32, #tpu.memory_space<vmem>>, vector<1x1x16x8xf32>
    %42 = vector.shape_cast %41 : vector<1x1x16x8xf32> to vector<16x8xf32>
    %c0_i32_36 = arith.constant 0 : i32
    %43 = arith.addi %0, %c0_i32_36 : i32
    %c36_i32_37 = arith.constant 36 : i32
    %44 = arith.addi %43, %c36_i32_37 : i32
    %c1_i32_38 = arith.constant 1 : i32
    %45 = arith.addi %44, %c1_i32_38 : i32
    %c0_39 = arith.constant 0 : index
    %c0_40 = arith.constant 0 : index
    %46 = arith.index_cast %45 : i32 to index
    %c0_41 = arith.constant 0 : index
    %47 = vector.load %arg3[%c0_39, %c0_40, %46, %c0_41] : memref<1x1x328x8xf32, #tpu.memory_space<vmem>>, vector<1x1x16x8xf32>
    %48 = vector.shape_cast %47 : vector<1x1x16x8xf32> to vector<16x8xf32>
    %c0_i32_42 = arith.constant 0 : i32
    %49 = arith.addi %0, %c0_i32_42 : i32
    %c36_i32_43 = arith.constant 36 : i32
    %50 = arith.addi %49, %c36_i32_43 : i32
    %c2_i32_44 = arith.constant 2 : i32
    %51 = arith.addi %50, %c2_i32_44 : i32
    %c0_45 = arith.constant 0 : index
    %c0_46 = arith.constant 0 : index
    %52 = arith.index_cast %51 : i32 to index
    %c0_47 = arith.constant 0 : index
    %53 = vector.load %arg3[%c0_45, %c0_46, %52, %c0_47] : memref<1x1x328x8xf32, #tpu.memory_space<vmem>>, vector<1x1x16x8xf32>
    %54 = vector.shape_cast %53 : vector<1x1x16x8xf32> to vector<16x8xf32>
    %55 = tpu.concatenate %6, %12, %18, %24, %30, %36, %42, %48, %54 in 1 : vector<16x8xf32>, vector<16x8xf32>, vector<16x8xf32>, vector<16x8xf32>, vector<16x8xf32>, vector<16x8xf32>, vector<16x8xf32>, vector<16x8xf32>, vector<16x8xf32> -> vector<16x72xf32>
    %c18_i32_48 = arith.constant 18 : i32
    %56 = arith.addi %0, %c18_i32_48 : i32
    %c0_i32_49 = arith.constant 0 : i32
    %57 = arith.addi %56, %c0_i32_49 : i32
    %c0_i32_50 = arith.constant 0 : i32
    %58 = arith.addi %57, %c0_i32_50 : i32
    %c0_51 = arith.constant 0 : index
    %c0_52 = arith.constant 0 : index
    %59 = arith.index_cast %58 : i32 to index
    %c0_53 = arith.constant 0 : index
    %60 = vector.load %arg3[%c0_51, %c0_52, %59, %c0_53] : memref<1x1x328x8xf32, #tpu.memory_space<vmem>>, vector<1x1x16x8xf32>
    %61 = vector.shape_cast %60 : vector<1x1x16x8xf32> to vector<16x8xf32>
    %c18_i32_54 = arith.constant 18 : i32
    %62 = arith.addi %0, %c18_i32_54 : i32
    %c0_i32_55 = arith.constant 0 : i32
    %63 = arith.addi %62, %c0_i32_55 : i32
    %c1_i32_56 = arith.constant 1 : i32
    %64 = arith.addi %63, %c1_i32_56 : i32
    %c0_57 = arith.constant 0 : index
    %c0_58 = arith.constant 0 : index
    %65 = arith.index_cast %64 : i32 to index
    %c0_59 = arith.constant 0 : index
    %66 = vector.load %arg3[%c0_57, %c0_58, %65, %c0_59] : memref<1x1x328x8xf32, #tpu.memory_space<vmem>>, vector<1x1x16x8xf32>
    %67 = vector.shape_cast %66 : vector<1x1x16x8xf32> to vector<16x8xf32>
    %c18_i32_60 = arith.constant 18 : i32
    %68 = arith.addi %0, %c18_i32_60 : i32
    %c0_i32_61 = arith.constant 0 : i32
    %69 = arith.addi %68, %c0_i32_61 : i32
    %c2_i32_62 = arith.constant 2 : i32
    %70 = arith.addi %69, %c2_i32_62 : i32
    %c0_63 = arith.constant 0 : index
    %c0_64 = arith.constant 0 : index
    %71 = arith.index_cast %70 : i32 to index
    %c0_65 = arith.constant 0 : index
    %72 = vector.load %arg3[%c0_63, %c0_64, %71, %c0_65] : memref<1x1x328x8xf32, #tpu.memory_space<vmem>>, vector<1x1x16x8xf32>
    %73 = vector.shape_cast %72 : vector<1x1x16x8xf32> to vector<16x8xf32>
    %c18_i32_66 = arith.constant 18 : i32
    %74 = arith.addi %0, %c18_i32_66 : i32
    %c18_i32_67 = arith.constant 18 : i32
    %75 = arith.addi %74, %c18_i32_67 : i32
    %c0_i32_68 = arith.constant 0 : i32
    %76 = arith.addi %75, %c0_i32_68 : i32
    %c0_69 = arith.constant 0 : index
    %c0_70 = arith.constant 0 : index
    %77 = arith.index_cast %76 : i32 to index
    %c0_71 = arith.constant 0 : index
    %78 = vector.load %arg3[%c0_69, %c0_70, %77, %c0_71] : memref<1x1x328x8xf32, #tpu.memory_space<vmem>>, vector<1x1x16x8xf32>
    %79 = vector.shape_cast %78 : vector<1x1x16x8xf32> to vector<16x8xf32>
    %c18_i32_72 = arith.constant 18 : i32
    %80 = arith.addi %0, %c18_i32_72 : i32
    %c18_i32_73 = arith.constant 18 : i32
    %81 = arith.addi %80, %c18_i32_73 : i32
    %c1_i32_74 = arith.constant 1 : i32
    %82 = arith.addi %81, %c1_i32_74 : i32
    %c0_75 = arith.constant 0 : index
    %c0_76 = arith.constant 0 : index
    %83 = arith.index_cast %82 : i32 to index
    %c0_77 = arith.constant 0 : index
    %84 = vector.load %arg3[%c0_75, %c0_76, %83, %c0_77] : memref<1x1x328x8xf32, #tpu.memory_space<vmem>>, vector<1x1x16x8xf32>
    %85 = vector.shape_cast %84 : vector<1x1x16x8xf32> to vector<16x8xf32>
    %c18_i32_78 = arith.constant 18 : i32
    %86 = arith.addi %0, %c18_i32_78 : i32
    %c18_i32_79 = arith.constant 18 : i32
    %87 = arith.addi %86, %c18_i32_79 : i32
    %c2_i32_80 = arith.constant 2 : i32
    %88 = arith.addi %87, %c2_i32_80 : i32
    %c0_81 = arith.constant 0 : index
    %c0_82 = arith.constant 0 : index
    %89 = arith.index_cast %88 : i32 to index
    %c0_83 = arith.constant 0 : index
    %90 = vector.load %arg3[%c0_81, %c0_82, %89, %c0_83] : memref<1x1x328x8xf32, #tpu.memory_space<vmem>>, vector<1x1x16x8xf32>
    %91 = vector.shape_cast %90 : vector<1x1x16x8xf32> to vector<16x8xf32>
    %c18_i32_84 = arith.constant 18 : i32
    %92 = arith.addi %0, %c18_i32_84 : i32
    %c36_i32_85 = arith.constant 36 : i32
    %93 = arith.addi %92, %c36_i32_85 : i32
    %c0_i32_86 = arith.constant 0 : i32
    %94 = arith.addi %93, %c0_i32_86 : i32
    %c0_87 = arith.constant 0 : index
    %c0_88 = arith.constant 0 : index
    %95 = arith.index_cast %94 : i32 to index
    %c0_89 = arith.constant 0 : index
    %96 = vector.load %arg3[%c0_87, %c0_88, %95, %c0_89] : memref<1x1x328x8xf32, #tpu.memory_space<vmem>>, vector<1x1x16x8xf32>
    %97 = vector.shape_cast %96 : vector<1x1x16x8xf32> to vector<16x8xf32>
    %c18_i32_90 = arith.constant 18 : i32
    %98 = arith.addi %0, %c18_i32_90 : i32
    %c36_i32_91 = arith.constant 36 : i32
    %99 = arith.addi %98, %c36_i32_91 : i32
    %c1_i32_92 = arith.constant 1 : i32
    %100 = arith.addi %99, %c1_i32_92 : i32
    %c0_93 = arith.constant 0 : index
    %c0_94 = arith.constant 0 : index
    %101 = arith.index_cast %100 : i32 to index
    %c0_95 = arith.constant 0 : index
    %102 = vector.load %arg3[%c0_93, %c0_94, %101, %c0_95] : memref<1x1x328x8xf32, #tpu.memory_space<vmem>>, vector<1x1x16x8xf32>
    %103 = vector.shape_cast %102 : vector<1x1x16x8xf32> to vector<16x8xf32>
    %c18_i32_96 = arith.constant 18 : i32
    %104 = arith.addi %0, %c18_i32_96 : i32
    %c36_i32_97 = arith.constant 36 : i32
    %105 = arith.addi %104, %c36_i32_97 : i32
    %c2_i32_98 = arith.constant 2 : i32
    %106 = arith.addi %105, %c2_i32_98 : i32
    %c0_99 = arith.constant 0 : index
    %c0_100 = arith.constant 0 : index
    %107 = arith.index_cast %106 : i32 to index
    %c0_101 = arith.constant 0 : index
    %108 = vector.load %arg3[%c0_99, %c0_100, %107, %c0_101] : memref<1x1x328x8xf32, #tpu.memory_space<vmem>>, vector<1x1x16x8xf32>
    %109 = vector.shape_cast %108 : vector<1x1x16x8xf32> to vector<16x8xf32>
    %110 = tpu.concatenate %61, %67, %73, %79, %85, %91, %97, %103, %109 in 1 : vector<16x8xf32>, vector<16x8xf32>, vector<16x8xf32>, vector<16x8xf32>, vector<16x8xf32>, vector<16x8xf32>, vector<16x8xf32>, vector<16x8xf32>, vector<16x8xf32> -> vector<16x72xf32>
    %c36_i32_102 = arith.constant 36 : i32
    %111 = arith.addi %0, %c36_i32_102 : i32
    %c0_i32_103 = arith.constant 0 : i32
    %112 = arith.addi %111, %c0_i32_103 : i32
    %c0_i32_104 = arith.constant 0 : i32
    %113 = arith.addi %112, %c0_i32_104 : i32
    %c0_105 = arith.constant 0 : index
    %c0_106 = arith.constant 0 : index
    %114 = arith.index_cast %113 : i32 to index
    %c0_107 = arith.constant 0 : index
    %115 = vector.load %arg3[%c0_105, %c0_106, %114, %c0_107] : memref<1x1x328x8xf32, #tpu.memory_space<vmem>>, vector<1x1x16x8xf32>
    %116 = vector.shape_cast %115 : vector<1x1x16x8xf32> to vector<16x8xf32>
    %c36_i32_108 = arith.constant 36 : i32
    %117 = arith.addi %0, %c36_i32_108 : i32
    %c0_i32_109 = arith.constant 0 : i32
    %118 = arith.addi %117, %c0_i32_109 : i32
    %c1_i32_110 = arith.constant 1 : i32
    %119 = arith.addi %118, %c1_i32_110 : i32
    %c0_111 = arith.constant 0 : index
    %c0_112 = arith.constant 0 : index
    %120 = arith.index_cast %119 : i32 to index
    %c0_113 = arith.constant 0 : index
    %121 = vector.load %arg3[%c0_111, %c0_112, %120, %c0_113] : memref<1x1x328x8xf32, #tpu.memory_space<vmem>>, vector<1x1x16x8xf32>
    %122 = vector.shape_cast %121 : vector<1x1x16x8xf32> to vector<16x8xf32>
    %c36_i32_114 = arith.constant 36 : i32
    %123 = arith.addi %0, %c36_i32_114 : i32
    %c0_i32_115 = arith.constant 0 : i32
    %124 = arith.addi %123, %c0_i32_115 : i32
    %c2_i32_116 = arith.constant 2 : i32
    %125 = arith.addi %124, %c2_i32_116 : i32
    %c0_117 = arith.constant 0 : index
    %c0_118 = arith.constant 0 : index
    %126 = arith.index_cast %125 : i32 to index
    %c0_119 = arith.constant 0 : index
    %127 = vector.load %arg3[%c0_117, %c0_118, %126, %c0_119] : memref<1x1x328x8xf32, #tpu.memory_space<vmem>>, vector<1x1x16x8xf32>
    %128 = vector.shape_cast %127 : vector<1x1x16x8xf32> to vector<16x8xf32>
    %c36_i32_120 = arith.constant 36 : i32
    %129 = arith.addi %0, %c36_i32_120 : i32
    %c18_i32_121 = arith.constant 18 : i32
    %130 = arith.addi %129, %c18_i32_121 : i32
    %c0_i32_122 = arith.constant 0 : i32
    %131 = arith.addi %130, %c0_i32_122 : i32
    %c0_123 = arith.constant 0 : index
    %c0_124 = arith.constant 0 : index
    %132 = arith.index_cast %131 : i32 to index
    %c0_125 = arith.constant 0 : index
    %133 = vector.load %arg3[%c0_123, %c0_124, %132, %c0_125] : memref<1x1x328x8xf32, #tpu.memory_space<vmem>>, vector<1x1x16x8xf32>
    %134 = vector.shape_cast %133 : vector<1x1x16x8xf32> to vector<16x8xf32>
    %c36_i32_126 = arith.constant 36 : i32
    %135 = arith.addi %0, %c36_i32_126 : i32
    %c18_i32_127 = arith.constant 18 : i32
    %136 = arith.addi %135, %c18_i32_127 : i32
    %c1_i32_128 = arith.constant 1 : i32
    %137 = arith.addi %136, %c1_i32_128 : i32
    %c0_129 = arith.constant 0 : index
    %c0_130 = arith.constant 0 : index
    %138 = arith.index_cast %137 : i32 to index
    %c0_131 = arith.constant 0 : index
    %139 = vector.load %arg3[%c0_129, %c0_130, %138, %c0_131] : memref<1x1x328x8xf32, #tpu.memory_space<vmem>>, vector<1x1x16x8xf32>
    %140 = vector.shape_cast %139 : vector<1x1x16x8xf32> to vector<16x8xf32>
    %c36_i32_132 = arith.constant 36 : i32
    %141 = arith.addi %0, %c36_i32_132 : i32
    %c18_i32_133 = arith.constant 18 : i32
    %142 = arith.addi %141, %c18_i32_133 : i32
    %c2_i32_134 = arith.constant 2 : i32
    %143 = arith.addi %142, %c2_i32_134 : i32
    %c0_135 = arith.constant 0 : index
    %c0_136 = arith.constant 0 : index
    %144 = arith.index_cast %143 : i32 to index
    %c0_137 = arith.constant 0 : index
    %145 = vector.load %arg3[%c0_135, %c0_136, %144, %c0_137] : memref<1x1x328x8xf32, #tpu.memory_space<vmem>>, vector<1x1x16x8xf32>
    %146 = vector.shape_cast %145 : vector<1x1x16x8xf32> to vector<16x8xf32>
    %c36_i32_138 = arith.constant 36 : i32
    %147 = arith.addi %0, %c36_i32_138 : i32
    %c36_i32_139 = arith.constant 36 : i32
    %148 = arith.addi %147, %c36_i32_139 : i32
    %c0_i32_140 = arith.constant 0 : i32
    %149 = arith.addi %148, %c0_i32_140 : i32
    %c0_141 = arith.constant 0 : index
    %c0_142 = arith.constant 0 : index
    %150 = arith.index_cast %149 : i32 to index
    %c0_143 = arith.constant 0 : index
    %151 = vector.load %arg3[%c0_141, %c0_142, %150, %c0_143] : memref<1x1x328x8xf32, #tpu.memory_space<vmem>>, vector<1x1x16x8xf32>
    %152 = vector.shape_cast %151 : vector<1x1x16x8xf32> to vector<16x8xf32>
    %c36_i32_144 = arith.constant 36 : i32
    %153 = arith.addi %0, %c36_i32_144 : i32
    %c36_i32_145 = arith.constant 36 : i32
    %154 = arith.addi %153, %c36_i32_145 : i32
    %c1_i32_146 = arith.constant 1 : i32
    %155 = arith.addi %154, %c1_i32_146 : i32
    %c0_147 = arith.constant 0 : index
    %c0_148 = arith.constant 0 : index
    %156 = arith.index_cast %155 : i32 to index
    %c0_149 = arith.constant 0 : index
    %157 = vector.load %arg3[%c0_147, %c0_148, %156, %c0_149] : memref<1x1x328x8xf32, #tpu.memory_space<vmem>>, vector<1x1x16x8xf32>
    %158 = vector.shape_cast %157 : vector<1x1x16x8xf32> to vector<16x8xf32>
    %c36_i32_150 = arith.constant 36 : i32
    %159 = arith.addi %0, %c36_i32_150 : i32
    %c36_i32_151 = arith.constant 36 : i32
    %160 = arith.addi %159, %c36_i32_151 : i32
    %c2_i32_152 = arith.constant 2 : i32
    %161 = arith.addi %160, %c2_i32_152 : i32
    %c0_153 = arith.constant 0 : index
    %c0_154 = arith.constant 0 : index
    %162 = arith.index_cast %161 : i32 to index
    %c0_155 = arith.constant 0 : index
    %163 = vector.load %arg3[%c0_153, %c0_154, %162, %c0_155] : memref<1x1x328x8xf32, #tpu.memory_space<vmem>>, vector<1x1x16x8xf32>
    %164 = vector.shape_cast %163 : vector<1x1x16x8xf32> to vector<16x8xf32>
    %165 = tpu.concatenate %116, %122, %128, %134, %140, %146, %152, %158, %164 in 1 : vector<16x8xf32>, vector<16x8xf32>, vector<16x8xf32>, vector<16x8xf32>, vector<16x8xf32>, vector<16x8xf32>, vector<16x8xf32>, vector<16x8xf32>, vector<16x8xf32> -> vector<16x72xf32>
    %c54_i32 = arith.constant 54 : i32
    %166 = arith.addi %0, %c54_i32 : i32
    %c0_i32_156 = arith.constant 0 : i32
    %167 = arith.addi %166, %c0_i32_156 : i32
    %c0_i32_157 = arith.constant 0 : i32
    %168 = arith.addi %167, %c0_i32_157 : i32
    %c0_158 = arith.constant 0 : index
    %c0_159 = arith.constant 0 : index
    %169 = arith.index_cast %168 : i32 to index
    %c0_160 = arith.constant 0 : index
    %170 = vector.load %arg3[%c0_158, %c0_159, %169, %c0_160] : memref<1x1x328x8xf32, #tpu.memory_space<vmem>>, vector<1x1x16x8xf32>
    %171 = vector.shape_cast %170 : vector<1x1x16x8xf32> to vector<16x8xf32>
    %c54_i32_161 = arith.constant 54 : i32
    %172 = arith.addi %0, %c54_i32_161 : i32
    %c0_i32_162 = arith.constant 0 : i32
    %173 = arith.addi %172, %c0_i32_162 : i32
    %c1_i32_163 = arith.constant 1 : i32
    %174 = arith.addi %173, %c1_i32_163 : i32
    %c0_164 = arith.constant 0 : index
    %c0_165 = arith.constant 0 : index
    %175 = arith.index_cast %174 : i32 to index
    %c0_166 = arith.constant 0 : index
    %176 = vector.load %arg3[%c0_164, %c0_165, %175, %c0_166] : memref<1x1x328x8xf32, #tpu.memory_space<vmem>>, vector<1x1x16x8xf32>
    %177 = vector.shape_cast %176 : vector<1x1x16x8xf32> to vector<16x8xf32>
    %c54_i32_167 = arith.constant 54 : i32
    %178 = arith.addi %0, %c54_i32_167 : i32
    %c0_i32_168 = arith.constant 0 : i32
    %179 = arith.addi %178, %c0_i32_168 : i32
    %c2_i32_169 = arith.constant 2 : i32
    %180 = arith.addi %179, %c2_i32_169 : i32
    %c0_170 = arith.constant 0 : index
    %c0_171 = arith.constant 0 : index
    %181 = arith.index_cast %180 : i32 to index
    %c0_172 = arith.constant 0 : index
    %182 = vector.load %arg3[%c0_170, %c0_171, %181, %c0_172] : memref<1x1x328x8xf32, #tpu.memory_space<vmem>>, vector<1x1x16x8xf32>
    %183 = vector.shape_cast %182 : vector<1x1x16x8xf32> to vector<16x8xf32>
    %c54_i32_173 = arith.constant 54 : i32
    %184 = arith.addi %0, %c54_i32_173 : i32
    %c18_i32_174 = arith.constant 18 : i32
    %185 = arith.addi %184, %c18_i32_174 : i32
    %c0_i32_175 = arith.constant 0 : i32
    %186 = arith.addi %185, %c0_i32_175 : i32
    %c0_176 = arith.constant 0 : index
    %c0_177 = arith.constant 0 : index
    %187 = arith.index_cast %186 : i32 to index
    %c0_178 = arith.constant 0 : index
    %188 = vector.load %arg3[%c0_176, %c0_177, %187, %c0_178] : memref<1x1x328x8xf32, #tpu.memory_space<vmem>>, vector<1x1x16x8xf32>
    %189 = vector.shape_cast %188 : vector<1x1x16x8xf32> to vector<16x8xf32>
    %c54_i32_179 = arith.constant 54 : i32
    %190 = arith.addi %0, %c54_i32_179 : i32
    %c18_i32_180 = arith.constant 18 : i32
    %191 = arith.addi %190, %c18_i32_180 : i32
    %c1_i32_181 = arith.constant 1 : i32
    %192 = arith.addi %191, %c1_i32_181 : i32
    %c0_182 = arith.constant 0 : index
    %c0_183 = arith.constant 0 : index
    %193 = arith.index_cast %192 : i32 to index
    %c0_184 = arith.constant 0 : index
    %194 = vector.load %arg3[%c0_182, %c0_183, %193, %c0_184] : memref<1x1x328x8xf32, #tpu.memory_space<vmem>>, vector<1x1x16x8xf32>
    %195 = vector.shape_cast %194 : vector<1x1x16x8xf32> to vector<16x8xf32>
    %c54_i32_185 = arith.constant 54 : i32
    %196 = arith.addi %0, %c54_i32_185 : i32
    %c18_i32_186 = arith.constant 18 : i32
    %197 = arith.addi %196, %c18_i32_186 : i32
    %c2_i32_187 = arith.constant 2 : i32
    %198 = arith.addi %197, %c2_i32_187 : i32
    %c0_188 = arith.constant 0 : index
    %c0_189 = arith.constant 0 : index
    %199 = arith.index_cast %198 : i32 to index
    %c0_190 = arith.constant 0 : index
    %200 = vector.load %arg3[%c0_188, %c0_189, %199, %c0_190] : memref<1x1x328x8xf32, #tpu.memory_space<vmem>>, vector<1x1x16x8xf32>
    %201 = vector.shape_cast %200 : vector<1x1x16x8xf32> to vector<16x8xf32>
    %c54_i32_191 = arith.constant 54 : i32
    %202 = arith.addi %0, %c54_i32_191 : i32
    %c36_i32_192 = arith.constant 36 : i32
    %203 = arith.addi %202, %c36_i32_192 : i32
    %c0_i32_193 = arith.constant 0 : i32
    %204 = arith.addi %203, %c0_i32_193 : i32
    %c0_194 = arith.constant 0 : index
    %c0_195 = arith.constant 0 : index
    %205 = arith.index_cast %204 : i32 to index
    %c0_196 = arith.constant 0 : index
    %206 = vector.load %arg3[%c0_194, %c0_195, %205, %c0_196] : memref<1x1x328x8xf32, #tpu.memory_space<vmem>>, vector<1x1x16x8xf32>
    %207 = vector.shape_cast %206 : vector<1x1x16x8xf32> to vector<16x8xf32>
    %c54_i32_197 = arith.constant 54 : i32
    %208 = arith.addi %0, %c54_i32_197 : i32
    %c36_i32_198 = arith.constant 36 : i32
    %209 = arith.addi %208, %c36_i32_198 : i32
    %c1_i32_199 = arith.constant 1 : i32
    %210 = arith.addi %209, %c1_i32_199 : i32
    %c0_200 = arith.constant 0 : index
    %c0_201 = arith.constant 0 : index
    %211 = arith.index_cast %210 : i32 to index
    %c0_202 = arith.constant 0 : index
    %212 = vector.load %arg3[%c0_200, %c0_201, %211, %c0_202] : memref<1x1x328x8xf32, #tpu.memory_space<vmem>>, vector<1x1x16x8xf32>
    %213 = vector.shape_cast %212 : vector<1x1x16x8xf32> to vector<16x8xf32>
    %c54_i32_203 = arith.constant 54 : i32
    %214 = arith.addi %0, %c54_i32_203 : i32
    %c36_i32_204 = arith.constant 36 : i32
    %215 = arith.addi %214, %c36_i32_204 : i32
    %c2_i32_205 = arith.constant 2 : i32
    %216 = arith.addi %215, %c2_i32_205 : i32
    %c0_206 = arith.constant 0 : index
    %c0_207 = arith.constant 0 : index
    %217 = arith.index_cast %216 : i32 to index
    %c0_208 = arith.constant 0 : index
    %218 = vector.load %arg3[%c0_206, %c0_207, %217, %c0_208] : memref<1x1x328x8xf32, #tpu.memory_space<vmem>>, vector<1x1x16x8xf32>
    %219 = vector.shape_cast %218 : vector<1x1x16x8xf32> to vector<16x8xf32>
    %220 = tpu.concatenate %171, %177, %183, %189, %195, %201, %207, %213, %219 in 1 : vector<16x8xf32>, vector<16x8xf32>, vector<16x8xf32>, vector<16x8xf32>, vector<16x8xf32>, vector<16x8xf32>, vector<16x8xf32>, vector<16x8xf32>, vector<16x8xf32> -> vector<16x72xf32>
    %c72_i32 = arith.constant 72 : i32
    %221 = arith.addi %0, %c72_i32 : i32
    %c0_i32_209 = arith.constant 0 : i32
    %222 = arith.addi %221, %c0_i32_209 : i32
    %c0_i32_210 = arith.constant 0 : i32
    %223 = arith.addi %222, %c0_i32_210 : i32
    %c0_211 = arith.constant 0 : index
    %c0_212 = arith.constant 0 : index
    %224 = arith.index_cast %223 : i32 to index
    %c0_213 = arith.constant 0 : index
    %225 = vector.load %arg3[%c0_211, %c0_212, %224, %c0_213] : memref<1x1x328x8xf32, #tpu.memory_space<vmem>>, vector<1x1x16x8xf32>
    %226 = vector.shape_cast %225 : vector<1x1x16x8xf32> to vector<16x8xf32>
    %c72_i32_214 = arith.constant 72 : i32
    %227 = arith.addi %0, %c72_i32_214 : i32
    %c0_i32_215 = arith.constant 0 : i32
    %228 = arith.addi %227, %c0_i32_215 : i32
    %c1_i32_216 = arith.constant 1 : i32
    %229 = arith.addi %228, %c1_i32_216 : i32
    %c0_217 = arith.constant 0 : index
    %c0_218 = arith.constant 0 : index
    %230 = arith.index_cast %229 : i32 to index
    %c0_219 = arith.constant 0 : index
    %231 = vector.load %arg3[%c0_217, %c0_218, %230, %c0_219] : memref<1x1x328x8xf32, #tpu.memory_space<vmem>>, vector<1x1x16x8xf32>
    %232 = vector.shape_cast %231 : vector<1x1x16x8xf32> to vector<16x8xf32>
    %c72_i32_220 = arith.constant 72 : i32
    %233 = arith.addi %0, %c72_i32_220 : i32
    %c0_i32_221 = arith.constant 0 : i32
    %234 = arith.addi %233, %c0_i32_221 : i32
    %c2_i32_222 = arith.constant 2 : i32
    %235 = arith.addi %234, %c2_i32_222 : i32
    %c0_223 = arith.constant 0 : index
    %c0_224 = arith.constant 0 : index
    %236 = arith.index_cast %235 : i32 to index
    %c0_225 = arith.constant 0 : index
    %237 = vector.load %arg3[%c0_223, %c0_224, %236, %c0_225] : memref<1x1x328x8xf32, #tpu.memory_space<vmem>>, vector<1x1x16x8xf32>
    %238 = vector.shape_cast %237 : vector<1x1x16x8xf32> to vector<16x8xf32>
    %c72_i32_226 = arith.constant 72 : i32
    %239 = arith.addi %0, %c72_i32_226 : i32
    %c18_i32_227 = arith.constant 18 : i32
    %240 = arith.addi %239, %c18_i32_227 : i32
    %c0_i32_228 = arith.constant 0 : i32
    %241 = arith.addi %240, %c0_i32_228 : i32
    %c0_229 = arith.constant 0 : index
    %c0_230 = arith.constant 0 : index
    %242 = arith.index_cast %241 : i32 to index
    %c0_231 = arith.constant 0 : index
    %243 = vector.load %arg3[%c0_229, %c0_230, %242, %c0_231] : memref<1x1x328x8xf32, #tpu.memory_space<vmem>>, vector<1x1x16x8xf32>
    %244 = vector.shape_cast %243 : vector<1x1x16x8xf32> to vector<16x8xf32>
    %c72_i32_232 = arith.constant 72 : i32
    %245 = arith.addi %0, %c72_i32_232 : i32
    %c18_i32_233 = arith.constant 18 : i32
    %246 = arith.addi %245, %c18_i32_233 : i32
    %c1_i32_234 = arith.constant 1 : i32
    %247 = arith.addi %246, %c1_i32_234 : i32
    %c0_235 = arith.constant 0 : index
    %c0_236 = arith.constant 0 : index
    %248 = arith.index_cast %247 : i32 to index
    %c0_237 = arith.constant 0 : index
    %249 = vector.load %arg3[%c0_235, %c0_236, %248, %c0_237] : memref<1x1x328x8xf32, #tpu.memory_space<vmem>>, vector<1x1x16x8xf32>
    %250 = vector.shape_cast %249 : vector<1x1x16x8xf32> to vector<16x8xf32>
    %c72_i32_238 = arith.constant 72 : i32
    %251 = arith.addi %0, %c72_i32_238 : i32
    %c18_i32_239 = arith.constant 18 : i32
    %252 = arith.addi %251, %c18_i32_239 : i32
    %c2_i32_240 = arith.constant 2 : i32
    %253 = arith.addi %252, %c2_i32_240 : i32
    %c0_241 = arith.constant 0 : index
    %c0_242 = arith.constant 0 : index
    %254 = arith.index_cast %253 : i32 to index
    %c0_243 = arith.constant 0 : index
    %255 = vector.load %arg3[%c0_241, %c0_242, %254, %c0_243] : memref<1x1x328x8xf32, #tpu.memory_space<vmem>>, vector<1x1x16x8xf32>
    %256 = vector.shape_cast %255 : vector<1x1x16x8xf32> to vector<16x8xf32>
    %c72_i32_244 = arith.constant 72 : i32
    %257 = arith.addi %0, %c72_i32_244 : i32
    %c36_i32_245 = arith.constant 36 : i32
    %258 = arith.addi %257, %c36_i32_245 : i32
    %c0_i32_246 = arith.constant 0 : i32
    %259 = arith.addi %258, %c0_i32_246 : i32
    %c0_247 = arith.constant 0 : index
    %c0_248 = arith.constant 0 : index
    %260 = arith.index_cast %259 : i32 to index
    %c0_249 = arith.constant 0 : index
    %261 = vector.load %arg3[%c0_247, %c0_248, %260, %c0_249] : memref<1x1x328x8xf32, #tpu.memory_space<vmem>>, vector<1x1x16x8xf32>
    %262 = vector.shape_cast %261 : vector<1x1x16x8xf32> to vector<16x8xf32>
    %c72_i32_250 = arith.constant 72 : i32
    %263 = arith.addi %0, %c72_i32_250 : i32
    %c36_i32_251 = arith.constant 36 : i32
    %264 = arith.addi %263, %c36_i32_251 : i32
    %c1_i32_252 = arith.constant 1 : i32
    %265 = arith.addi %264, %c1_i32_252 : i32
    %c0_253 = arith.constant 0 : index
    %c0_254 = arith.constant 0 : index
    %266 = arith.index_cast %265 : i32 to index
    %c0_255 = arith.constant 0 : index
    %267 = vector.load %arg3[%c0_253, %c0_254, %266, %c0_255] : memref<1x1x328x8xf32, #tpu.memory_space<vmem>>, vector<1x1x16x8xf32>
    %268 = vector.shape_cast %267 : vector<1x1x16x8xf32> to vector<16x8xf32>
    %c72_i32_256 = arith.constant 72 : i32
    %269 = arith.addi %0, %c72_i32_256 : i32
    %c36_i32_257 = arith.constant 36 : i32
    %270 = arith.addi %269, %c36_i32_257 : i32
    %c2_i32_258 = arith.constant 2 : i32
    %271 = arith.addi %270, %c2_i32_258 : i32
    %c0_259 = arith.constant 0 : index
    %c0_260 = arith.constant 0 : index
    %272 = arith.index_cast %271 : i32 to index
    %c0_261 = arith.constant 0 : index
    %273 = vector.load %arg3[%c0_259, %c0_260, %272, %c0_261] : memref<1x1x328x8xf32, #tpu.memory_space<vmem>>, vector<1x1x16x8xf32>
    %274 = vector.shape_cast %273 : vector<1x1x16x8xf32> to vector<16x8xf32>
    %275 = tpu.concatenate %226, %232, %238, %244, %250, %256, %262, %268, %274 in 1 : vector<16x8xf32>, vector<16x8xf32>, vector<16x8xf32>, vector<16x8xf32>, vector<16x8xf32>, vector<16x8xf32>, vector<16x8xf32>, vector<16x8xf32>, vector<16x8xf32> -> vector<16x72xf32>
    %c90_i32 = arith.constant 90 : i32
    %276 = arith.addi %0, %c90_i32 : i32
    %c0_i32_262 = arith.constant 0 : i32
    %277 = arith.addi %276, %c0_i32_262 : i32
    %c0_i32_263 = arith.constant 0 : i32
    %278 = arith.addi %277, %c0_i32_263 : i32
    %c0_264 = arith.constant 0 : index
    %c0_265 = arith.constant 0 : index
    %279 = arith.index_cast %278 : i32 to index
    %c0_266 = arith.constant 0 : index
    %280 = vector.load %arg3[%c0_264, %c0_265, %279, %c0_266] : memref<1x1x328x8xf32, #tpu.memory_space<vmem>>, vector<1x1x16x8xf32>
    %281 = vector.shape_cast %280 : vector<1x1x16x8xf32> to vector<16x8xf32>
    %c90_i32_267 = arith.constant 90 : i32
    %282 = arith.addi %0, %c90_i32_267 : i32
    %c0_i32_268 = arith.constant 0 : i32
    %283 = arith.addi %282, %c0_i32_268 : i32
    %c1_i32_269 = arith.constant 1 : i32
    %284 = arith.addi %283, %c1_i32_269 : i32
    %c0_270 = arith.constant 0 : index
    %c0_271 = arith.constant 0 : index
    %285 = arith.index_cast %284 : i32 to index
    %c0_272 = arith.constant 0 : index
    %286 = vector.load %arg3[%c0_270, %c0_271, %285, %c0_272] : memref<1x1x328x8xf32, #tpu.memory_space<vmem>>, vector<1x1x16x8xf32>
    %287 = vector.shape_cast %286 : vector<1x1x16x8xf32> to vector<16x8xf32>
    %c90_i32_273 = arith.constant 90 : i32
    %288 = arith.addi %0, %c90_i32_273 : i32
    %c0_i32_274 = arith.constant 0 : i32
    %289 = arith.addi %288, %c0_i32_274 : i32
    %c2_i32_275 = arith.constant 2 : i32
    %290 = arith.addi %289, %c2_i32_275 : i32
    %c0_276 = arith.constant 0 : index
    %c0_277 = arith.constant 0 : index
    %291 = arith.index_cast %290 : i32 to index
    %c0_278 = arith.constant 0 : index
    %292 = vector.load %arg3[%c0_276, %c0_277, %291, %c0_278] : memref<1x1x328x8xf32, #tpu.memory_space<vmem>>, vector<1x1x16x8xf32>
    %293 = vector.shape_cast %292 : vector<1x1x16x8xf32> to vector<16x8xf32>
    %c90_i32_279 = arith.constant 90 : i32
    %294 = arith.addi %0, %c90_i32_279 : i32
    %c18_i32_280 = arith.constant 18 : i32
    %295 = arith.addi %294, %c18_i32_280 : i32
    %c0_i32_281 = arith.constant 0 : i32
    %296 = arith.addi %295, %c0_i32_281 : i32
    %c0_282 = arith.constant 0 : index
    %c0_283 = arith.constant 0 : index
    %297 = arith.index_cast %296 : i32 to index
    %c0_284 = arith.constant 0 : index
    %298 = vector.load %arg3[%c0_282, %c0_283, %297, %c0_284] : memref<1x1x328x8xf32, #tpu.memory_space<vmem>>, vector<1x1x16x8xf32>
    %299 = vector.shape_cast %298 : vector<1x1x16x8xf32> to vector<16x8xf32>
    %c90_i32_285 = arith.constant 90 : i32
    %300 = arith.addi %0, %c90_i32_285 : i32
    %c18_i32_286 = arith.constant 18 : i32
    %301 = arith.addi %300, %c18_i32_286 : i32
    %c1_i32_287 = arith.constant 1 : i32
    %302 = arith.addi %301, %c1_i32_287 : i32
    %c0_288 = arith.constant 0 : index
    %c0_289 = arith.constant 0 : index
    %303 = arith.index_cast %302 : i32 to index
    %c0_290 = arith.constant 0 : index
    %304 = vector.load %arg3[%c0_288, %c0_289, %303, %c0_290] : memref<1x1x328x8xf32, #tpu.memory_space<vmem>>, vector<1x1x16x8xf32>
    %305 = vector.shape_cast %304 : vector<1x1x16x8xf32> to vector<16x8xf32>
    %c90_i32_291 = arith.constant 90 : i32
    %306 = arith.addi %0, %c90_i32_291 : i32
    %c18_i32_292 = arith.constant 18 : i32
    %307 = arith.addi %306, %c18_i32_292 : i32
    %c2_i32_293 = arith.constant 2 : i32
    %308 = arith.addi %307, %c2_i32_293 : i32
    %c0_294 = arith.constant 0 : index
    %c0_295 = arith.constant 0 : index
    %309 = arith.index_cast %308 : i32 to index
    %c0_296 = arith.constant 0 : index
    %310 = vector.load %arg3[%c0_294, %c0_295, %309, %c0_296] : memref<1x1x328x8xf32, #tpu.memory_space<vmem>>, vector<1x1x16x8xf32>
    %311 = vector.shape_cast %310 : vector<1x1x16x8xf32> to vector<16x8xf32>
    %c90_i32_297 = arith.constant 90 : i32
    %312 = arith.addi %0, %c90_i32_297 : i32
    %c36_i32_298 = arith.constant 36 : i32
    %313 = arith.addi %312, %c36_i32_298 : i32
    %c0_i32_299 = arith.constant 0 : i32
    %314 = arith.addi %313, %c0_i32_299 : i32
    %c0_300 = arith.constant 0 : index
    %c0_301 = arith.constant 0 : index
    %315 = arith.index_cast %314 : i32 to index
    %c0_302 = arith.constant 0 : index
    %316 = vector.load %arg3[%c0_300, %c0_301, %315, %c0_302] : memref<1x1x328x8xf32, #tpu.memory_space<vmem>>, vector<1x1x16x8xf32>
    %317 = vector.shape_cast %316 : vector<1x1x16x8xf32> to vector<16x8xf32>
    %c90_i32_303 = arith.constant 90 : i32
    %318 = arith.addi %0, %c90_i32_303 : i32
    %c36_i32_304 = arith.constant 36 : i32
    %319 = arith.addi %318, %c36_i32_304 : i32
    %c1_i32_305 = arith.constant 1 : i32
    %320 = arith.addi %319, %c1_i32_305 : i32
    %c0_306 = arith.constant 0 : index
    %c0_307 = arith.constant 0 : index
    %321 = arith.index_cast %320 : i32 to index
    %c0_308 = arith.constant 0 : index
    %322 = vector.load %arg3[%c0_306, %c0_307, %321, %c0_308] : memref<1x1x328x8xf32, #tpu.memory_space<vmem>>, vector<1x1x16x8xf32>
    %323 = vector.shape_cast %322 : vector<1x1x16x8xf32> to vector<16x8xf32>
    %c90_i32_309 = arith.constant 90 : i32
    %324 = arith.addi %0, %c90_i32_309 : i32
    %c36_i32_310 = arith.constant 36 : i32
    %325 = arith.addi %324, %c36_i32_310 : i32
    %c2_i32_311 = arith.constant 2 : i32
    %326 = arith.addi %325, %c2_i32_311 : i32
    %c0_312 = arith.constant 0 : index
    %c0_313 = arith.constant 0 : index
    %327 = arith.index_cast %326 : i32 to index
    %c0_314 = arith.constant 0 : index
    %328 = vector.load %arg3[%c0_312, %c0_313, %327, %c0_314] : memref<1x1x328x8xf32, #tpu.memory_space<vmem>>, vector<1x1x16x8xf32>
    %329 = vector.shape_cast %328 : vector<1x1x16x8xf32> to vector<16x8xf32>
    %330 = tpu.concatenate %281, %287, %293, %299, %305, %311, %317, %323, %329 in 1 : vector<16x8xf32>, vector<16x8xf32>, vector<16x8xf32>, vector<16x8xf32>, vector<16x8xf32>, vector<16x8xf32>, vector<16x8xf32>, vector<16x8xf32>, vector<16x8xf32> -> vector<16x72xf32>
    %c108_i32 = arith.constant 108 : i32
    %331 = arith.addi %0, %c108_i32 : i32
    %c0_i32_315 = arith.constant 0 : i32
    %332 = arith.addi %331, %c0_i32_315 : i32
    %c0_i32_316 = arith.constant 0 : i32
    %333 = arith.addi %332, %c0_i32_316 : i32
    %c0_317 = arith.constant 0 : index
    %c0_318 = arith.constant 0 : index
    %334 = arith.index_cast %333 : i32 to index
    %c0_319 = arith.constant 0 : index
    %335 = vector.load %arg3[%c0_317, %c0_318, %334, %c0_319] : memref<1x1x328x8xf32, #tpu.memory_space<vmem>>, vector<1x1x16x8xf32>
    %336 = vector.shape_cast %335 : vector<1x1x16x8xf32> to vector<16x8xf32>
    %c108_i32_320 = arith.constant 108 : i32
    %337 = arith.addi %0, %c108_i32_320 : i32
    %c0_i32_321 = arith.constant 0 : i32
    %338 = arith.addi %337, %c0_i32_321 : i32
    %c1_i32_322 = arith.constant 1 : i32
    %339 = arith.addi %338, %c1_i32_322 : i32
    %c0_323 = arith.constant 0 : index
    %c0_324 = arith.constant 0 : index
    %340 = arith.index_cast %339 : i32 to index
    %c0_325 = arith.constant 0 : index
    %341 = vector.load %arg3[%c0_323, %c0_324, %340, %c0_325] : memref<1x1x328x8xf32, #tpu.memory_space<vmem>>, vector<1x1x16x8xf32>
    %342 = vector.shape_cast %341 : vector<1x1x16x8xf32> to vector<16x8xf32>
    %c108_i32_326 = arith.constant 108 : i32
    %343 = arith.addi %0, %c108_i32_326 : i32
    %c0_i32_327 = arith.constant 0 : i32
    %344 = arith.addi %343, %c0_i32_327 : i32
    %c2_i32_328 = arith.constant 2 : i32
    %345 = arith.addi %344, %c2_i32_328 : i32
    %c0_329 = arith.constant 0 : index
    %c0_330 = arith.constant 0 : index
    %346 = arith.index_cast %345 : i32 to index
    %c0_331 = arith.constant 0 : index
    %347 = vector.load %arg3[%c0_329, %c0_330, %346, %c0_331] : memref<1x1x328x8xf32, #tpu.memory_space<vmem>>, vector<1x1x16x8xf32>
    %348 = vector.shape_cast %347 : vector<1x1x16x8xf32> to vector<16x8xf32>
    %c108_i32_332 = arith.constant 108 : i32
    %349 = arith.addi %0, %c108_i32_332 : i32
    %c18_i32_333 = arith.constant 18 : i32
    %350 = arith.addi %349, %c18_i32_333 : i32
    %c0_i32_334 = arith.constant 0 : i32
    %351 = arith.addi %350, %c0_i32_334 : i32
    %c0_335 = arith.constant 0 : index
    %c0_336 = arith.constant 0 : index
    %352 = arith.index_cast %351 : i32 to index
    %c0_337 = arith.constant 0 : index
    %353 = vector.load %arg3[%c0_335, %c0_336, %352, %c0_337] : memref<1x1x328x8xf32, #tpu.memory_space<vmem>>, vector<1x1x16x8xf32>
    %354 = vector.shape_cast %353 : vector<1x1x16x8xf32> to vector<16x8xf32>
    %c108_i32_338 = arith.constant 108 : i32
    %355 = arith.addi %0, %c108_i32_338 : i32
    %c18_i32_339 = arith.constant 18 : i32
    %356 = arith.addi %355, %c18_i32_339 : i32
    %c1_i32_340 = arith.constant 1 : i32
    %357 = arith.addi %356, %c1_i32_340 : i32
    %c0_341 = arith.constant 0 : index
    %c0_342 = arith.constant 0 : index
    %358 = arith.index_cast %357 : i32 to index
    %c0_343 = arith.constant 0 : index
    %359 = vector.load %arg3[%c0_341, %c0_342, %358, %c0_343] : memref<1x1x328x8xf32, #tpu.memory_space<vmem>>, vector<1x1x16x8xf32>
    %360 = vector.shape_cast %359 : vector<1x1x16x8xf32> to vector<16x8xf32>
    %c108_i32_344 = arith.constant 108 : i32
    %361 = arith.addi %0, %c108_i32_344 : i32
    %c18_i32_345 = arith.constant 18 : i32
    %362 = arith.addi %361, %c18_i32_345 : i32
    %c2_i32_346 = arith.constant 2 : i32
    %363 = arith.addi %362, %c2_i32_346 : i32
    %c0_347 = arith.constant 0 : index
    %c0_348 = arith.constant 0 : index
    %364 = arith.index_cast %363 : i32 to index
    %c0_349 = arith.constant 0 : index
    %365 = vector.load %arg3[%c0_347, %c0_348, %364, %c0_349] : memref<1x1x328x8xf32, #tpu.memory_space<vmem>>, vector<1x1x16x8xf32>
    %366 = vector.shape_cast %365 : vector<1x1x16x8xf32> to vector<16x8xf32>
    %c108_i32_350 = arith.constant 108 : i32
    %367 = arith.addi %0, %c108_i32_350 : i32
    %c36_i32_351 = arith.constant 36 : i32
    %368 = arith.addi %367, %c36_i32_351 : i32
    %c0_i32_352 = arith.constant 0 : i32
    %369 = arith.addi %368, %c0_i32_352 : i32
    %c0_353 = arith.constant 0 : index
    %c0_354 = arith.constant 0 : index
    %370 = arith.index_cast %369 : i32 to index
    %c0_355 = arith.constant 0 : index
    %371 = vector.load %arg3[%c0_353, %c0_354, %370, %c0_355] : memref<1x1x328x8xf32, #tpu.memory_space<vmem>>, vector<1x1x16x8xf32>
    %372 = vector.shape_cast %371 : vector<1x1x16x8xf32> to vector<16x8xf32>
    %c108_i32_356 = arith.constant 108 : i32
    %373 = arith.addi %0, %c108_i32_356 : i32
    %c36_i32_357 = arith.constant 36 : i32
    %374 = arith.addi %373, %c36_i32_357 : i32
    %c1_i32_358 = arith.constant 1 : i32
    %375 = arith.addi %374, %c1_i32_358 : i32
    %c0_359 = arith.constant 0 : index
    %c0_360 = arith.constant 0 : index
    %376 = arith.index_cast %375 : i32 to index
    %c0_361 = arith.constant 0 : index
    %377 = vector.load %arg3[%c0_359, %c0_360, %376, %c0_361] : memref<1x1x328x8xf32, #tpu.memory_space<vmem>>, vector<1x1x16x8xf32>
    %378 = vector.shape_cast %377 : vector<1x1x16x8xf32> to vector<16x8xf32>
    %c108_i32_362 = arith.constant 108 : i32
    %379 = arith.addi %0, %c108_i32_362 : i32
    %c36_i32_363 = arith.constant 36 : i32
    %380 = arith.addi %379, %c36_i32_363 : i32
    %c2_i32_364 = arith.constant 2 : i32
    %381 = arith.addi %380, %c2_i32_364 : i32
    %c0_365 = arith.constant 0 : index
    %c0_366 = arith.constant 0 : index
    %382 = arith.index_cast %381 : i32 to index
    %c0_367 = arith.constant 0 : index
    %383 = vector.load %arg3[%c0_365, %c0_366, %382, %c0_367] : memref<1x1x328x8xf32, #tpu.memory_space<vmem>>, vector<1x1x16x8xf32>
    %384 = vector.shape_cast %383 : vector<1x1x16x8xf32> to vector<16x8xf32>
    %385 = tpu.concatenate %336, %342, %348, %354, %360, %366, %372, %378, %384 in 1 : vector<16x8xf32>, vector<16x8xf32>, vector<16x8xf32>, vector<16x8xf32>, vector<16x8xf32>, vector<16x8xf32>, vector<16x8xf32>, vector<16x8xf32>, vector<16x8xf32> -> vector<16x72xf32>
    %c126_i32 = arith.constant 126 : i32
    %386 = arith.addi %0, %c126_i32 : i32
    %c0_i32_368 = arith.constant 0 : i32
    %387 = arith.addi %386, %c0_i32_368 : i32
    %c0_i32_369 = arith.constant 0 : i32
    %388 = arith.addi %387, %c0_i32_369 : i32
    %c0_370 = arith.constant 0 : index
    %c0_371 = arith.constant 0 : index
    %389 = arith.index_cast %388 : i32 to index
    %c0_372 = arith.constant 0 : index
    %390 = vector.load %arg3[%c0_370, %c0_371, %389, %c0_372] : memref<1x1x328x8xf32, #tpu.memory_space<vmem>>, vector<1x1x16x8xf32>
    %391 = vector.shape_cast %390 : vector<1x1x16x8xf32> to vector<16x8xf32>
    %c126_i32_373 = arith.constant 126 : i32
    %392 = arith.addi %0, %c126_i32_373 : i32
    %c0_i32_374 = arith.constant 0 : i32
    %393 = arith.addi %392, %c0_i32_374 : i32
    %c1_i32_375 = arith.constant 1 : i32
    %394 = arith.addi %393, %c1_i32_375 : i32
    %c0_376 = arith.constant 0 : index
    %c0_377 = arith.constant 0 : index
    %395 = arith.index_cast %394 : i32 to index
    %c0_378 = arith.constant 0 : index
    %396 = vector.load %arg3[%c0_376, %c0_377, %395, %c0_378] : memref<1x1x328x8xf32, #tpu.memory_space<vmem>>, vector<1x1x16x8xf32>
    %397 = vector.shape_cast %396 : vector<1x1x16x8xf32> to vector<16x8xf32>
    %c126_i32_379 = arith.constant 126 : i32
    %398 = arith.addi %0, %c126_i32_379 : i32
    %c0_i32_380 = arith.constant 0 : i32
    %399 = arith.addi %398, %c0_i32_380 : i32
    %c2_i32_381 = arith.constant 2 : i32
    %400 = arith.addi %399, %c2_i32_381 : i32
    %c0_382 = arith.constant 0 : index
    %c0_383 = arith.constant 0 : index
    %401 = arith.index_cast %400 : i32 to index
    %c0_384 = arith.constant 0 : index
    %402 = vector.load %arg3[%c0_382, %c0_383, %401, %c0_384] : memref<1x1x328x8xf32, #tpu.memory_space<vmem>>, vector<1x1x16x8xf32>
    %403 = vector.shape_cast %402 : vector<1x1x16x8xf32> to vector<16x8xf32>
    %c126_i32_385 = arith.constant 126 : i32
    %404 = arith.addi %0, %c126_i32_385 : i32
    %c18_i32_386 = arith.constant 18 : i32
    %405 = arith.addi %404, %c18_i32_386 : i32
    %c0_i32_387 = arith.constant 0 : i32
    %406 = arith.addi %405, %c0_i32_387 : i32
    %c0_388 = arith.constant 0 : index
    %c0_389 = arith.constant 0 : index
    %407 = arith.index_cast %406 : i32 to index
    %c0_390 = arith.constant 0 : index
    %408 = vector.load %arg3[%c0_388, %c0_389, %407, %c0_390] : memref<1x1x328x8xf32, #tpu.memory_space<vmem>>, vector<1x1x16x8xf32>
    %409 = vector.shape_cast %408 : vector<1x1x16x8xf32> to vector<16x8xf32>
    %c126_i32_391 = arith.constant 126 : i32
    %410 = arith.addi %0, %c126_i32_391 : i32
    %c18_i32_392 = arith.constant 18 : i32
    %411 = arith.addi %410, %c18_i32_392 : i32
    %c1_i32_393 = arith.constant 1 : i32
    %412 = arith.addi %411, %c1_i32_393 : i32
    %c0_394 = arith.constant 0 : index
    %c0_395 = arith.constant 0 : index
    %413 = arith.index_cast %412 : i32 to index
    %c0_396 = arith.constant 0 : index
    %414 = vector.load %arg3[%c0_394, %c0_395, %413, %c0_396] : memref<1x1x328x8xf32, #tpu.memory_space<vmem>>, vector<1x1x16x8xf32>
    %415 = vector.shape_cast %414 : vector<1x1x16x8xf32> to vector<16x8xf32>
    %c126_i32_397 = arith.constant 126 : i32
    %416 = arith.addi %0, %c126_i32_397 : i32
    %c18_i32_398 = arith.constant 18 : i32
    %417 = arith.addi %416, %c18_i32_398 : i32
    %c2_i32_399 = arith.constant 2 : i32
    %418 = arith.addi %417, %c2_i32_399 : i32
    %c0_400 = arith.constant 0 : index
    %c0_401 = arith.constant 0 : index
    %419 = arith.index_cast %418 : i32 to index
    %c0_402 = arith.constant 0 : index
    %420 = vector.load %arg3[%c0_400, %c0_401, %419, %c0_402] : memref<1x1x328x8xf32, #tpu.memory_space<vmem>>, vector<1x1x16x8xf32>
    %421 = vector.shape_cast %420 : vector<1x1x16x8xf32> to vector<16x8xf32>
    %c126_i32_403 = arith.constant 126 : i32
    %422 = arith.addi %0, %c126_i32_403 : i32
    %c36_i32_404 = arith.constant 36 : i32
    %423 = arith.addi %422, %c36_i32_404 : i32
    %c0_i32_405 = arith.constant 0 : i32
    %424 = arith.addi %423, %c0_i32_405 : i32
    %c0_406 = arith.constant 0 : index
    %c0_407 = arith.constant 0 : index
    %425 = arith.index_cast %424 : i32 to index
    %c0_408 = arith.constant 0 : index
    %426 = vector.load %arg3[%c0_406, %c0_407, %425, %c0_408] : memref<1x1x328x8xf32, #tpu.memory_space<vmem>>, vector<1x1x16x8xf32>
    %427 = vector.shape_cast %426 : vector<1x1x16x8xf32> to vector<16x8xf32>
    %c126_i32_409 = arith.constant 126 : i32
    %428 = arith.addi %0, %c126_i32_409 : i32
    %c36_i32_410 = arith.constant 36 : i32
    %429 = arith.addi %428, %c36_i32_410 : i32
    %c1_i32_411 = arith.constant 1 : i32
    %430 = arith.addi %429, %c1_i32_411 : i32
    %c0_412 = arith.constant 0 : index
    %c0_413 = arith.constant 0 : index
    %431 = arith.index_cast %430 : i32 to index
    %c0_414 = arith.constant 0 : index
    %432 = vector.load %arg3[%c0_412, %c0_413, %431, %c0_414] : memref<1x1x328x8xf32, #tpu.memory_space<vmem>>, vector<1x1x16x8xf32>
    %433 = vector.shape_cast %432 : vector<1x1x16x8xf32> to vector<16x8xf32>
    %c126_i32_415 = arith.constant 126 : i32
    %434 = arith.addi %0, %c126_i32_415 : i32
    %c36_i32_416 = arith.constant 36 : i32
    %435 = arith.addi %434, %c36_i32_416 : i32
    %c2_i32_417 = arith.constant 2 : i32
    %436 = arith.addi %435, %c2_i32_417 : i32
    %c0_418 = arith.constant 0 : index
    %c0_419 = arith.constant 0 : index
    %437 = arith.index_cast %436 : i32 to index
    %c0_420 = arith.constant 0 : index
    %438 = vector.load %arg3[%c0_418, %c0_419, %437, %c0_420] : memref<1x1x328x8xf32, #tpu.memory_space<vmem>>, vector<1x1x16x8xf32>
    %439 = vector.shape_cast %438 : vector<1x1x16x8xf32> to vector<16x8xf32>
    %440 = tpu.concatenate %391, %397, %403, %409, %415, %421, %427, %433, %439 in 1 : vector<16x8xf32>, vector<16x8xf32>, vector<16x8xf32>, vector<16x8xf32>, vector<16x8xf32>, vector<16x8xf32>, vector<16x8xf32>, vector<16x8xf32>, vector<16x8xf32> -> vector<16x72xf32>
    %c144_i32 = arith.constant 144 : i32
    %441 = arith.addi %0, %c144_i32 : i32
    %c0_i32_421 = arith.constant 0 : i32
    %442 = arith.addi %441, %c0_i32_421 : i32
    %c0_i32_422 = arith.constant 0 : i32
    %443 = arith.addi %442, %c0_i32_422 : i32
    %c0_423 = arith.constant 0 : index
    %c0_424 = arith.constant 0 : index
    %444 = arith.index_cast %443 : i32 to index
    %c0_425 = arith.constant 0 : index
    %445 = vector.load %arg3[%c0_423, %c0_424, %444, %c0_425] : memref<1x1x328x8xf32, #tpu.memory_space<vmem>>, vector<1x1x16x8xf32>
    %446 = vector.shape_cast %445 : vector<1x1x16x8xf32> to vector<16x8xf32>
    %c144_i32_426 = arith.constant 144 : i32
    %447 = arith.addi %0, %c144_i32_426 : i32
    %c0_i32_427 = arith.constant 0 : i32
    %448 = arith.addi %447, %c0_i32_427 : i32
    %c1_i32_428 = arith.constant 1 : i32
    %449 = arith.addi %448, %c1_i32_428 : i32
    %c0_429 = arith.constant 0 : index
    %c0_430 = arith.constant 0 : index
    %450 = arith.index_cast %449 : i32 to index
    %c0_431 = arith.constant 0 : index
    %451 = vector.load %arg3[%c0_429, %c0_430, %450, %c0_431] : memref<1x1x328x8xf32, #tpu.memory_space<vmem>>, vector<1x1x16x8xf32>
    %452 = vector.shape_cast %451 : vector<1x1x16x8xf32> to vector<16x8xf32>
    %c144_i32_432 = arith.constant 144 : i32
    %453 = arith.addi %0, %c144_i32_432 : i32
    %c0_i32_433 = arith.constant 0 : i32
    %454 = arith.addi %453, %c0_i32_433 : i32
    %c2_i32_434 = arith.constant 2 : i32
    %455 = arith.addi %454, %c2_i32_434 : i32
    %c0_435 = arith.constant 0 : index
    %c0_436 = arith.constant 0 : index
    %456 = arith.index_cast %455 : i32 to index
    %c0_437 = arith.constant 0 : index
    %457 = vector.load %arg3[%c0_435, %c0_436, %456, %c0_437] : memref<1x1x328x8xf32, #tpu.memory_space<vmem>>, vector<1x1x16x8xf32>
    %458 = vector.shape_cast %457 : vector<1x1x16x8xf32> to vector<16x8xf32>
    %c144_i32_438 = arith.constant 144 : i32
    %459 = arith.addi %0, %c144_i32_438 : i32
    %c18_i32_439 = arith.constant 18 : i32
    %460 = arith.addi %459, %c18_i32_439 : i32
    %c0_i32_440 = arith.constant 0 : i32
    %461 = arith.addi %460, %c0_i32_440 : i32
    %c0_441 = arith.constant 0 : index
    %c0_442 = arith.constant 0 : index
    %462 = arith.index_cast %461 : i32 to index
    %c0_443 = arith.constant 0 : index
    %463 = vector.load %arg3[%c0_441, %c0_442, %462, %c0_443] : memref<1x1x328x8xf32, #tpu.memory_space<vmem>>, vector<1x1x16x8xf32>
    %464 = vector.shape_cast %463 : vector<1x1x16x8xf32> to vector<16x8xf32>
    %c144_i32_444 = arith.constant 144 : i32
    %465 = arith.addi %0, %c144_i32_444 : i32
    %c18_i32_445 = arith.constant 18 : i32
    %466 = arith.addi %465, %c18_i32_445 : i32
    %c1_i32_446 = arith.constant 1 : i32
    %467 = arith.addi %466, %c1_i32_446 : i32
    %c0_447 = arith.constant 0 : index
    %c0_448 = arith.constant 0 : index
    %468 = arith.index_cast %467 : i32 to index
    %c0_449 = arith.constant 0 : index
    %469 = vector.load %arg3[%c0_447, %c0_448, %468, %c0_449] : memref<1x1x328x8xf32, #tpu.memory_space<vmem>>, vector<1x1x16x8xf32>
    %470 = vector.shape_cast %469 : vector<1x1x16x8xf32> to vector<16x8xf32>
    %c144_i32_450 = arith.constant 144 : i32
    %471 = arith.addi %0, %c144_i32_450 : i32
    %c18_i32_451 = arith.constant 18 : i32
    %472 = arith.addi %471, %c18_i32_451 : i32
    %c2_i32_452 = arith.constant 2 : i32
    %473 = arith.addi %472, %c2_i32_452 : i32
    %c0_453 = arith.constant 0 : index
    %c0_454 = arith.constant 0 : index
    %474 = arith.index_cast %473 : i32 to index
    %c0_455 = arith.constant 0 : index
    %475 = vector.load %arg3[%c0_453, %c0_454, %474, %c0_455] : memref<1x1x328x8xf32, #tpu.memory_space<vmem>>, vector<1x1x16x8xf32>
    %476 = vector.shape_cast %475 : vector<1x1x16x8xf32> to vector<16x8xf32>
    %c144_i32_456 = arith.constant 144 : i32
    %477 = arith.addi %0, %c144_i32_456 : i32
    %c36_i32_457 = arith.constant 36 : i32
    %478 = arith.addi %477, %c36_i32_457 : i32
    %c0_i32_458 = arith.constant 0 : i32
    %479 = arith.addi %478, %c0_i32_458 : i32
    %c0_459 = arith.constant 0 : index
    %c0_460 = arith.constant 0 : index
    %480 = arith.index_cast %479 : i32 to index
    %c0_461 = arith.constant 0 : index
    %481 = vector.load %arg3[%c0_459, %c0_460, %480, %c0_461] : memref<1x1x328x8xf32, #tpu.memory_space<vmem>>, vector<1x1x16x8xf32>
    %482 = vector.shape_cast %481 : vector<1x1x16x8xf32> to vector<16x8xf32>
    %c144_i32_462 = arith.constant 144 : i32
    %483 = arith.addi %0, %c144_i32_462 : i32
    %c36_i32_463 = arith.constant 36 : i32
    %484 = arith.addi %483, %c36_i32_463 : i32
    %c1_i32_464 = arith.constant 1 : i32
    %485 = arith.addi %484, %c1_i32_464 : i32
    %c0_465 = arith.constant 0 : index
    %c0_466 = arith.constant 0 : index
    %486 = arith.index_cast %485 : i32 to index
    %c0_467 = arith.constant 0 : index
    %487 = vector.load %arg3[%c0_465, %c0_466, %486, %c0_467] : memref<1x1x328x8xf32, #tpu.memory_space<vmem>>, vector<1x1x16x8xf32>
    %488 = vector.shape_cast %487 : vector<1x1x16x8xf32> to vector<16x8xf32>
    %c144_i32_468 = arith.constant 144 : i32
    %489 = arith.addi %0, %c144_i32_468 : i32
    %c36_i32_469 = arith.constant 36 : i32
    %490 = arith.addi %489, %c36_i32_469 : i32
    %c2_i32_470 = arith.constant 2 : i32
    %491 = arith.addi %490, %c2_i32_470 : i32
    %c0_471 = arith.constant 0 : index
    %c0_472 = arith.constant 0 : index
    %492 = arith.index_cast %491 : i32 to index
    %c0_473 = arith.constant 0 : index
    %493 = vector.load %arg3[%c0_471, %c0_472, %492, %c0_473] : memref<1x1x328x8xf32, #tpu.memory_space<vmem>>, vector<1x1x16x8xf32>
    %494 = vector.shape_cast %493 : vector<1x1x16x8xf32> to vector<16x8xf32>
    %495 = tpu.concatenate %446, %452, %458, %464, %470, %476, %482, %488, %494 in 1 : vector<16x8xf32>, vector<16x8xf32>, vector<16x8xf32>, vector<16x8xf32>, vector<16x8xf32>, vector<16x8xf32>, vector<16x8xf32>, vector<16x8xf32>, vector<16x8xf32> -> vector<16x72xf32>
    %c162_i32 = arith.constant 162 : i32
    %496 = arith.addi %0, %c162_i32 : i32
    %c0_i32_474 = arith.constant 0 : i32
    %497 = arith.addi %496, %c0_i32_474 : i32
    %c0_i32_475 = arith.constant 0 : i32
    %498 = arith.addi %497, %c0_i32_475 : i32
    %c0_476 = arith.constant 0 : index
    %c0_477 = arith.constant 0 : index
    %499 = arith.index_cast %498 : i32 to index
    %c0_478 = arith.constant 0 : index
    %500 = vector.load %arg3[%c0_476, %c0_477, %499, %c0_478] : memref<1x1x328x8xf32, #tpu.memory_space<vmem>>, vector<1x1x16x8xf32>
    %501 = vector.shape_cast %500 : vector<1x1x16x8xf32> to vector<16x8xf32>
    %c162_i32_479 = arith.constant 162 : i32
    %502 = arith.addi %0, %c162_i32_479 : i32
    %c0_i32_480 = arith.constant 0 : i32
    %503 = arith.addi %502, %c0_i32_480 : i32
    %c1_i32_481 = arith.constant 1 : i32
    %504 = arith.addi %503, %c1_i32_481 : i32
    %c0_482 = arith.constant 0 : index
    %c0_483 = arith.constant 0 : index
    %505 = arith.index_cast %504 : i32 to index
    %c0_484 = arith.constant 0 : index
    %506 = vector.load %arg3[%c0_482, %c0_483, %505, %c0_484] : memref<1x1x328x8xf32, #tpu.memory_space<vmem>>, vector<1x1x16x8xf32>
    %507 = vector.shape_cast %506 : vector<1x1x16x8xf32> to vector<16x8xf32>
    %c162_i32_485 = arith.constant 162 : i32
    %508 = arith.addi %0, %c162_i32_485 : i32
    %c0_i32_486 = arith.constant 0 : i32
    %509 = arith.addi %508, %c0_i32_486 : i32
    %c2_i32_487 = arith.constant 2 : i32
    %510 = arith.addi %509, %c2_i32_487 : i32
    %c0_488 = arith.constant 0 : index
    %c0_489 = arith.constant 0 : index
    %511 = arith.index_cast %510 : i32 to index
    %c0_490 = arith.constant 0 : index
    %512 = vector.load %arg3[%c0_488, %c0_489, %511, %c0_490] : memref<1x1x328x8xf32, #tpu.memory_space<vmem>>, vector<1x1x16x8xf32>
    %513 = vector.shape_cast %512 : vector<1x1x16x8xf32> to vector<16x8xf32>
    %c162_i32_491 = arith.constant 162 : i32
    %514 = arith.addi %0, %c162_i32_491 : i32
    %c18_i32_492 = arith.constant 18 : i32
    %515 = arith.addi %514, %c18_i32_492 : i32
    %c0_i32_493 = arith.constant 0 : i32
    %516 = arith.addi %515, %c0_i32_493 : i32
    %c0_494 = arith.constant 0 : index
    %c0_495 = arith.constant 0 : index
    %517 = arith.index_cast %516 : i32 to index
    %c0_496 = arith.constant 0 : index
    %518 = vector.load %arg3[%c0_494, %c0_495, %517, %c0_496] : memref<1x1x328x8xf32, #tpu.memory_space<vmem>>, vector<1x1x16x8xf32>
    %519 = vector.shape_cast %518 : vector<1x1x16x8xf32> to vector<16x8xf32>
    %c162_i32_497 = arith.constant 162 : i32
    %520 = arith.addi %0, %c162_i32_497 : i32
    %c18_i32_498 = arith.constant 18 : i32
    %521 = arith.addi %520, %c18_i32_498 : i32
    %c1_i32_499 = arith.constant 1 : i32
    %522 = arith.addi %521, %c1_i32_499 : i32
    %c0_500 = arith.constant 0 : index
    %c0_501 = arith.constant 0 : index
    %523 = arith.index_cast %522 : i32 to index
    %c0_502 = arith.constant 0 : index
    %524 = vector.load %arg3[%c0_500, %c0_501, %523, %c0_502] : memref<1x1x328x8xf32, #tpu.memory_space<vmem>>, vector<1x1x16x8xf32>
    %525 = vector.shape_cast %524 : vector<1x1x16x8xf32> to vector<16x8xf32>
    %c162_i32_503 = arith.constant 162 : i32
    %526 = arith.addi %0, %c162_i32_503 : i32
    %c18_i32_504 = arith.constant 18 : i32
    %527 = arith.addi %526, %c18_i32_504 : i32
    %c2_i32_505 = arith.constant 2 : i32
    %528 = arith.addi %527, %c2_i32_505 : i32
    %c0_506 = arith.constant 0 : index
    %c0_507 = arith.constant 0 : index
    %529 = arith.index_cast %528 : i32 to index
    %c0_508 = arith.constant 0 : index
    %530 = vector.load %arg3[%c0_506, %c0_507, %529, %c0_508] : memref<1x1x328x8xf32, #tpu.memory_space<vmem>>, vector<1x1x16x8xf32>
    %531 = vector.shape_cast %530 : vector<1x1x16x8xf32> to vector<16x8xf32>
    %c162_i32_509 = arith.constant 162 : i32
    %532 = arith.addi %0, %c162_i32_509 : i32
    %c36_i32_510 = arith.constant 36 : i32
    %533 = arith.addi %532, %c36_i32_510 : i32
    %c0_i32_511 = arith.constant 0 : i32
    %534 = arith.addi %533, %c0_i32_511 : i32
    %c0_512 = arith.constant 0 : index
    %c0_513 = arith.constant 0 : index
    %535 = arith.index_cast %534 : i32 to index
    %c0_514 = arith.constant 0 : index
    %536 = vector.load %arg3[%c0_512, %c0_513, %535, %c0_514] : memref<1x1x328x8xf32, #tpu.memory_space<vmem>>, vector<1x1x16x8xf32>
    %537 = vector.shape_cast %536 : vector<1x1x16x8xf32> to vector<16x8xf32>
    %c162_i32_515 = arith.constant 162 : i32
    %538 = arith.addi %0, %c162_i32_515 : i32
    %c36_i32_516 = arith.constant 36 : i32
    %539 = arith.addi %538, %c36_i32_516 : i32
    %c1_i32_517 = arith.constant 1 : i32
    %540 = arith.addi %539, %c1_i32_517 : i32
    %c0_518 = arith.constant 0 : index
    %c0_519 = arith.constant 0 : index
    %541 = arith.index_cast %540 : i32 to index
    %c0_520 = arith.constant 0 : index
    %542 = vector.load %arg3[%c0_518, %c0_519, %541, %c0_520] : memref<1x1x328x8xf32, #tpu.memory_space<vmem>>, vector<1x1x16x8xf32>
    %543 = vector.shape_cast %542 : vector<1x1x16x8xf32> to vector<16x8xf32>
    %c162_i32_521 = arith.constant 162 : i32
    %544 = arith.addi %0, %c162_i32_521 : i32
    %c36_i32_522 = arith.constant 36 : i32
    %545 = arith.addi %544, %c36_i32_522 : i32
    %c2_i32_523 = arith.constant 2 : i32
    %546 = arith.addi %545, %c2_i32_523 : i32
    %c0_524 = arith.constant 0 : index
    %c0_525 = arith.constant 0 : index
    %547 = arith.index_cast %546 : i32 to index
    %c0_526 = arith.constant 0 : index
    %548 = vector.load %arg3[%c0_524, %c0_525, %547, %c0_526] : memref<1x1x328x8xf32, #tpu.memory_space<vmem>>, vector<1x1x16x8xf32>
    %549 = vector.shape_cast %548 : vector<1x1x16x8xf32> to vector<16x8xf32>
    %550 = tpu.concatenate %501, %507, %513, %519, %525, %531, %537, %543, %549 in 1 : vector<16x8xf32>, vector<16x8xf32>, vector<16x8xf32>, vector<16x8xf32>, vector<16x8xf32>, vector<16x8xf32>, vector<16x8xf32>, vector<16x8xf32>, vector<16x8xf32> -> vector<16x72xf32>
    %c180_i32 = arith.constant 180 : i32
    %551 = arith.addi %0, %c180_i32 : i32
    %c0_i32_527 = arith.constant 0 : i32
    %552 = arith.addi %551, %c0_i32_527 : i32
    %c0_i32_528 = arith.constant 0 : i32
    %553 = arith.addi %552, %c0_i32_528 : i32
    %c0_529 = arith.constant 0 : index
    %c0_530 = arith.constant 0 : index
    %554 = arith.index_cast %553 : i32 to index
    %c0_531 = arith.constant 0 : index
    %555 = vector.load %arg3[%c0_529, %c0_530, %554, %c0_531] : memref<1x1x328x8xf32, #tpu.memory_space<vmem>>, vector<1x1x16x8xf32>
    %556 = vector.shape_cast %555 : vector<1x1x16x8xf32> to vector<16x8xf32>
    %c180_i32_532 = arith.constant 180 : i32
    %557 = arith.addi %0, %c180_i32_532 : i32
    %c0_i32_533 = arith.constant 0 : i32
    %558 = arith.addi %557, %c0_i32_533 : i32
    %c1_i32_534 = arith.constant 1 : i32
    %559 = arith.addi %558, %c1_i32_534 : i32
    %c0_535 = arith.constant 0 : index
    %c0_536 = arith.constant 0 : index
    %560 = arith.index_cast %559 : i32 to index
    %c0_537 = arith.constant 0 : index
    %561 = vector.load %arg3[%c0_535, %c0_536, %560, %c0_537] : memref<1x1x328x8xf32, #tpu.memory_space<vmem>>, vector<1x1x16x8xf32>
    %562 = vector.shape_cast %561 : vector<1x1x16x8xf32> to vector<16x8xf32>
    %c180_i32_538 = arith.constant 180 : i32
    %563 = arith.addi %0, %c180_i32_538 : i32
    %c0_i32_539 = arith.constant 0 : i32
    %564 = arith.addi %563, %c0_i32_539 : i32
    %c2_i32_540 = arith.constant 2 : i32
    %565 = arith.addi %564, %c2_i32_540 : i32
    %c0_541 = arith.constant 0 : index
    %c0_542 = arith.constant 0 : index
    %566 = arith.index_cast %565 : i32 to index
    %c0_543 = arith.constant 0 : index
    %567 = vector.load %arg3[%c0_541, %c0_542, %566, %c0_543] : memref<1x1x328x8xf32, #tpu.memory_space<vmem>>, vector<1x1x16x8xf32>
    %568 = vector.shape_cast %567 : vector<1x1x16x8xf32> to vector<16x8xf32>
    %c180_i32_544 = arith.constant 180 : i32
    %569 = arith.addi %0, %c180_i32_544 : i32
    %c18_i32_545 = arith.constant 18 : i32
    %570 = arith.addi %569, %c18_i32_545 : i32
    %c0_i32_546 = arith.constant 0 : i32
    %571 = arith.addi %570, %c0_i32_546 : i32
    %c0_547 = arith.constant 0 : index
    %c0_548 = arith.constant 0 : index
    %572 = arith.index_cast %571 : i32 to index
    %c0_549 = arith.constant 0 : index
    %573 = vector.load %arg3[%c0_547, %c0_548, %572, %c0_549] : memref<1x1x328x8xf32, #tpu.memory_space<vmem>>, vector<1x1x16x8xf32>
    %574 = vector.shape_cast %573 : vector<1x1x16x8xf32> to vector<16x8xf32>
    %c180_i32_550 = arith.constant 180 : i32
    %575 = arith.addi %0, %c180_i32_550 : i32
    %c18_i32_551 = arith.constant 18 : i32
    %576 = arith.addi %575, %c18_i32_551 : i32
    %c1_i32_552 = arith.constant 1 : i32
    %577 = arith.addi %576, %c1_i32_552 : i32
    %c0_553 = arith.constant 0 : index
    %c0_554 = arith.constant 0 : index
    %578 = arith.index_cast %577 : i32 to index
    %c0_555 = arith.constant 0 : index
    %579 = vector.load %arg3[%c0_553, %c0_554, %578, %c0_555] : memref<1x1x328x8xf32, #tpu.memory_space<vmem>>, vector<1x1x16x8xf32>
    %580 = vector.shape_cast %579 : vector<1x1x16x8xf32> to vector<16x8xf32>
    %c180_i32_556 = arith.constant 180 : i32
    %581 = arith.addi %0, %c180_i32_556 : i32
    %c18_i32_557 = arith.constant 18 : i32
    %582 = arith.addi %581, %c18_i32_557 : i32
    %c2_i32_558 = arith.constant 2 : i32
    %583 = arith.addi %582, %c2_i32_558 : i32
    %c0_559 = arith.constant 0 : index
    %c0_560 = arith.constant 0 : index
    %584 = arith.index_cast %583 : i32 to index
    %c0_561 = arith.constant 0 : index
    %585 = vector.load %arg3[%c0_559, %c0_560, %584, %c0_561] : memref<1x1x328x8xf32, #tpu.memory_space<vmem>>, vector<1x1x16x8xf32>
    %586 = vector.shape_cast %585 : vector<1x1x16x8xf32> to vector<16x8xf32>
    %c180_i32_562 = arith.constant 180 : i32
    %587 = arith.addi %0, %c180_i32_562 : i32
    %c36_i32_563 = arith.constant 36 : i32
    %588 = arith.addi %587, %c36_i32_563 : i32
    %c0_i32_564 = arith.constant 0 : i32
    %589 = arith.addi %588, %c0_i32_564 : i32
    %c0_565 = arith.constant 0 : index
    %c0_566 = arith.constant 0 : index
    %590 = arith.index_cast %589 : i32 to index
    %c0_567 = arith.constant 0 : index
    %591 = vector.load %arg3[%c0_565, %c0_566, %590, %c0_567] : memref<1x1x328x8xf32, #tpu.memory_space<vmem>>, vector<1x1x16x8xf32>
    %592 = vector.shape_cast %591 : vector<1x1x16x8xf32> to vector<16x8xf32>
    %c180_i32_568 = arith.constant 180 : i32
    %593 = arith.addi %0, %c180_i32_568 : i32
    %c36_i32_569 = arith.constant 36 : i32
    %594 = arith.addi %593, %c36_i32_569 : i32
    %c1_i32_570 = arith.constant 1 : i32
    %595 = arith.addi %594, %c1_i32_570 : i32
    %c0_571 = arith.constant 0 : index
    %c0_572 = arith.constant 0 : index
    %596 = arith.index_cast %595 : i32 to index
    %c0_573 = arith.constant 0 : index
    %597 = vector.load %arg3[%c0_571, %c0_572, %596, %c0_573] : memref<1x1x328x8xf32, #tpu.memory_space<vmem>>, vector<1x1x16x8xf32>
    %598 = vector.shape_cast %597 : vector<1x1x16x8xf32> to vector<16x8xf32>
    %c180_i32_574 = arith.constant 180 : i32
    %599 = arith.addi %0, %c180_i32_574 : i32
    %c36_i32_575 = arith.constant 36 : i32
    %600 = arith.addi %599, %c36_i32_575 : i32
    %c2_i32_576 = arith.constant 2 : i32
    %601 = arith.addi %600, %c2_i32_576 : i32
    %c0_577 = arith.constant 0 : index
    %c0_578 = arith.constant 0 : index
    %602 = arith.index_cast %601 : i32 to index
    %c0_579 = arith.constant 0 : index
    %603 = vector.load %arg3[%c0_577, %c0_578, %602, %c0_579] : memref<1x1x328x8xf32, #tpu.memory_space<vmem>>, vector<1x1x16x8xf32>
    %604 = vector.shape_cast %603 : vector<1x1x16x8xf32> to vector<16x8xf32>
    %605 = tpu.concatenate %556, %562, %568, %574, %580, %586, %592, %598, %604 in 1 : vector<16x8xf32>, vector<16x8xf32>, vector<16x8xf32>, vector<16x8xf32>, vector<16x8xf32>, vector<16x8xf32>, vector<16x8xf32>, vector<16x8xf32>, vector<16x8xf32> -> vector<16x72xf32>
    %c198_i32 = arith.constant 198 : i32
    %606 = arith.addi %0, %c198_i32 : i32
    %c0_i32_580 = arith.constant 0 : i32
    %607 = arith.addi %606, %c0_i32_580 : i32
    %c0_i32_581 = arith.constant 0 : i32
    %608 = arith.addi %607, %c0_i32_581 : i32
    %c0_582 = arith.constant 0 : index
    %c0_583 = arith.constant 0 : index
    %609 = arith.index_cast %608 : i32 to index
    %c0_584 = arith.constant 0 : index
    %610 = vector.load %arg3[%c0_582, %c0_583, %609, %c0_584] : memref<1x1x328x8xf32, #tpu.memory_space<vmem>>, vector<1x1x16x8xf32>
    %611 = vector.shape_cast %610 : vector<1x1x16x8xf32> to vector<16x8xf32>
    %c198_i32_585 = arith.constant 198 : i32
    %612 = arith.addi %0, %c198_i32_585 : i32
    %c0_i32_586 = arith.constant 0 : i32
    %613 = arith.addi %612, %c0_i32_586 : i32
    %c1_i32_587 = arith.constant 1 : i32
    %614 = arith.addi %613, %c1_i32_587 : i32
    %c0_588 = arith.constant 0 : index
    %c0_589 = arith.constant 0 : index
    %615 = arith.index_cast %614 : i32 to index
    %c0_590 = arith.constant 0 : index
    %616 = vector.load %arg3[%c0_588, %c0_589, %615, %c0_590] : memref<1x1x328x8xf32, #tpu.memory_space<vmem>>, vector<1x1x16x8xf32>
    %617 = vector.shape_cast %616 : vector<1x1x16x8xf32> to vector<16x8xf32>
    %c198_i32_591 = arith.constant 198 : i32
    %618 = arith.addi %0, %c198_i32_591 : i32
    %c0_i32_592 = arith.constant 0 : i32
    %619 = arith.addi %618, %c0_i32_592 : i32
    %c2_i32_593 = arith.constant 2 : i32
    %620 = arith.addi %619, %c2_i32_593 : i32
    %c0_594 = arith.constant 0 : index
    %c0_595 = arith.constant 0 : index
    %621 = arith.index_cast %620 : i32 to index
    %c0_596 = arith.constant 0 : index
    %622 = vector.load %arg3[%c0_594, %c0_595, %621, %c0_596] : memref<1x1x328x8xf32, #tpu.memory_space<vmem>>, vector<1x1x16x8xf32>
    %623 = vector.shape_cast %622 : vector<1x1x16x8xf32> to vector<16x8xf32>
    %c198_i32_597 = arith.constant 198 : i32
    %624 = arith.addi %0, %c198_i32_597 : i32
    %c18_i32_598 = arith.constant 18 : i32
    %625 = arith.addi %624, %c18_i32_598 : i32
    %c0_i32_599 = arith.constant 0 : i32
    %626 = arith.addi %625, %c0_i32_599 : i32
    %c0_600 = arith.constant 0 : index
    %c0_601 = arith.constant 0 : index
    %627 = arith.index_cast %626 : i32 to index
    %c0_602 = arith.constant 0 : index
    %628 = vector.load %arg3[%c0_600, %c0_601, %627, %c0_602] : memref<1x1x328x8xf32, #tpu.memory_space<vmem>>, vector<1x1x16x8xf32>
    %629 = vector.shape_cast %628 : vector<1x1x16x8xf32> to vector<16x8xf32>
    %c198_i32_603 = arith.constant 198 : i32
    %630 = arith.addi %0, %c198_i32_603 : i32
    %c18_i32_604 = arith.constant 18 : i32
    %631 = arith.addi %630, %c18_i32_604 : i32
    %c1_i32_605 = arith.constant 1 : i32
    %632 = arith.addi %631, %c1_i32_605 : i32
    %c0_606 = arith.constant 0 : index
    %c0_607 = arith.constant 0 : index
    %633 = arith.index_cast %632 : i32 to index
    %c0_608 = arith.constant 0 : index
    %634 = vector.load %arg3[%c0_606, %c0_607, %633, %c0_608] : memref<1x1x328x8xf32, #tpu.memory_space<vmem>>, vector<1x1x16x8xf32>
    %635 = vector.shape_cast %634 : vector<1x1x16x8xf32> to vector<16x8xf32>
    %c198_i32_609 = arith.constant 198 : i32
    %636 = arith.addi %0, %c198_i32_609 : i32
    %c18_i32_610 = arith.constant 18 : i32
    %637 = arith.addi %636, %c18_i32_610 : i32
    %c2_i32_611 = arith.constant 2 : i32
    %638 = arith.addi %637, %c2_i32_611 : i32
    %c0_612 = arith.constant 0 : index
    %c0_613 = arith.constant 0 : index
    %639 = arith.index_cast %638 : i32 to index
    %c0_614 = arith.constant 0 : index
    %640 = vector.load %arg3[%c0_612, %c0_613, %639, %c0_614] : memref<1x1x328x8xf32, #tpu.memory_space<vmem>>, vector<1x1x16x8xf32>
    %641 = vector.shape_cast %640 : vector<1x1x16x8xf32> to vector<16x8xf32>
    %c198_i32_615 = arith.constant 198 : i32
    %642 = arith.addi %0, %c198_i32_615 : i32
    %c36_i32_616 = arith.constant 36 : i32
    %643 = arith.addi %642, %c36_i32_616 : i32
    %c0_i32_617 = arith.constant 0 : i32
    %644 = arith.addi %643, %c0_i32_617 : i32
    %c0_618 = arith.constant 0 : index
    %c0_619 = arith.constant 0 : index
    %645 = arith.index_cast %644 : i32 to index
    %c0_620 = arith.constant 0 : index
    %646 = vector.load %arg3[%c0_618, %c0_619, %645, %c0_620] : memref<1x1x328x8xf32, #tpu.memory_space<vmem>>, vector<1x1x16x8xf32>
    %647 = vector.shape_cast %646 : vector<1x1x16x8xf32> to vector<16x8xf32>
    %c198_i32_621 = arith.constant 198 : i32
    %648 = arith.addi %0, %c198_i32_621 : i32
    %c36_i32_622 = arith.constant 36 : i32
    %649 = arith.addi %648, %c36_i32_622 : i32
    %c1_i32_623 = arith.constant 1 : i32
    %650 = arith.addi %649, %c1_i32_623 : i32
    %c0_624 = arith.constant 0 : index
    %c0_625 = arith.constant 0 : index
    %651 = arith.index_cast %650 : i32 to index
    %c0_626 = arith.constant 0 : index
    %652 = vector.load %arg3[%c0_624, %c0_625, %651, %c0_626] : memref<1x1x328x8xf32, #tpu.memory_space<vmem>>, vector<1x1x16x8xf32>
    %653 = vector.shape_cast %652 : vector<1x1x16x8xf32> to vector<16x8xf32>
    %c198_i32_627 = arith.constant 198 : i32
    %654 = arith.addi %0, %c198_i32_627 : i32
    %c36_i32_628 = arith.constant 36 : i32
    %655 = arith.addi %654, %c36_i32_628 : i32
    %c2_i32_629 = arith.constant 2 : i32
    %656 = arith.addi %655, %c2_i32_629 : i32
    %c0_630 = arith.constant 0 : index
    %c0_631 = arith.constant 0 : index
    %657 = arith.index_cast %656 : i32 to index
    %c0_632 = arith.constant 0 : index
    %658 = vector.load %arg3[%c0_630, %c0_631, %657, %c0_632] : memref<1x1x328x8xf32, #tpu.memory_space<vmem>>, vector<1x1x16x8xf32>
    %659 = vector.shape_cast %658 : vector<1x1x16x8xf32> to vector<16x8xf32>
    %660 = tpu.concatenate %611, %617, %623, %629, %635, %641, %647, %653, %659 in 1 : vector<16x8xf32>, vector<16x8xf32>, vector<16x8xf32>, vector<16x8xf32>, vector<16x8xf32>, vector<16x8xf32>, vector<16x8xf32>, vector<16x8xf32>, vector<16x8xf32> -> vector<16x72xf32>
    %c216_i32 = arith.constant 216 : i32
    %661 = arith.addi %0, %c216_i32 : i32
    %c0_i32_633 = arith.constant 0 : i32
    %662 = arith.addi %661, %c0_i32_633 : i32
    %c0_i32_634 = arith.constant 0 : i32
    %663 = arith.addi %662, %c0_i32_634 : i32
    %c0_635 = arith.constant 0 : index
    %c0_636 = arith.constant 0 : index
    %664 = arith.index_cast %663 : i32 to index
    %c0_637 = arith.constant 0 : index
    %665 = vector.load %arg3[%c0_635, %c0_636, %664, %c0_637] : memref<1x1x328x8xf32, #tpu.memory_space<vmem>>, vector<1x1x16x8xf32>
    %666 = vector.shape_cast %665 : vector<1x1x16x8xf32> to vector<16x8xf32>
    %c216_i32_638 = arith.constant 216 : i32
    %667 = arith.addi %0, %c216_i32_638 : i32
    %c0_i32_639 = arith.constant 0 : i32
    %668 = arith.addi %667, %c0_i32_639 : i32
    %c1_i32_640 = arith.constant 1 : i32
    %669 = arith.addi %668, %c1_i32_640 : i32
    %c0_641 = arith.constant 0 : index
    %c0_642 = arith.constant 0 : index
    %670 = arith.index_cast %669 : i32 to index
    %c0_643 = arith.constant 0 : index
    %671 = vector.load %arg3[%c0_641, %c0_642, %670, %c0_643] : memref<1x1x328x8xf32, #tpu.memory_space<vmem>>, vector<1x1x16x8xf32>
    %672 = vector.shape_cast %671 : vector<1x1x16x8xf32> to vector<16x8xf32>
    %c216_i32_644 = arith.constant 216 : i32
    %673 = arith.addi %0, %c216_i32_644 : i32
    %c0_i32_645 = arith.constant 0 : i32
    %674 = arith.addi %673, %c0_i32_645 : i32
    %c2_i32_646 = arith.constant 2 : i32
    %675 = arith.addi %674, %c2_i32_646 : i32
    %c0_647 = arith.constant 0 : index
    %c0_648 = arith.constant 0 : index
    %676 = arith.index_cast %675 : i32 to index
    %c0_649 = arith.constant 0 : index
    %677 = vector.load %arg3[%c0_647, %c0_648, %676, %c0_649] : memref<1x1x328x8xf32, #tpu.memory_space<vmem>>, vector<1x1x16x8xf32>
    %678 = vector.shape_cast %677 : vector<1x1x16x8xf32> to vector<16x8xf32>
    %c216_i32_650 = arith.constant 216 : i32
    %679 = arith.addi %0, %c216_i32_650 : i32
    %c18_i32_651 = arith.constant 18 : i32
    %680 = arith.addi %679, %c18_i32_651 : i32
    %c0_i32_652 = arith.constant 0 : i32
    %681 = arith.addi %680, %c0_i32_652 : i32
    %c0_653 = arith.constant 0 : index
    %c0_654 = arith.constant 0 : index
    %682 = arith.index_cast %681 : i32 to index
    %c0_655 = arith.constant 0 : index
    %683 = vector.load %arg3[%c0_653, %c0_654, %682, %c0_655] : memref<1x1x328x8xf32, #tpu.memory_space<vmem>>, vector<1x1x16x8xf32>
    %684 = vector.shape_cast %683 : vector<1x1x16x8xf32> to vector<16x8xf32>
    %c216_i32_656 = arith.constant 216 : i32
    %685 = arith.addi %0, %c216_i32_656 : i32
    %c18_i32_657 = arith.constant 18 : i32
    %686 = arith.addi %685, %c18_i32_657 : i32
    %c1_i32_658 = arith.constant 1 : i32
    %687 = arith.addi %686, %c1_i32_658 : i32
    %c0_659 = arith.constant 0 : index
    %c0_660 = arith.constant 0 : index
    %688 = arith.index_cast %687 : i32 to index
    %c0_661 = arith.constant 0 : index
    %689 = vector.load %arg3[%c0_659, %c0_660, %688, %c0_661] : memref<1x1x328x8xf32, #tpu.memory_space<vmem>>, vector<1x1x16x8xf32>
    %690 = vector.shape_cast %689 : vector<1x1x16x8xf32> to vector<16x8xf32>
    %c216_i32_662 = arith.constant 216 : i32
    %691 = arith.addi %0, %c216_i32_662 : i32
    %c18_i32_663 = arith.constant 18 : i32
    %692 = arith.addi %691, %c18_i32_663 : i32
    %c2_i32_664 = arith.constant 2 : i32
    %693 = arith.addi %692, %c2_i32_664 : i32
    %c0_665 = arith.constant 0 : index
    %c0_666 = arith.constant 0 : index
    %694 = arith.index_cast %693 : i32 to index
    %c0_667 = arith.constant 0 : index
    %695 = vector.load %arg3[%c0_665, %c0_666, %694, %c0_667] : memref<1x1x328x8xf32, #tpu.memory_space<vmem>>, vector<1x1x16x8xf32>
    %696 = vector.shape_cast %695 : vector<1x1x16x8xf32> to vector<16x8xf32>
    %c216_i32_668 = arith.constant 216 : i32
    %697 = arith.addi %0, %c216_i32_668 : i32
    %c36_i32_669 = arith.constant 36 : i32
    %698 = arith.addi %697, %c36_i32_669 : i32
    %c0_i32_670 = arith.constant 0 : i32
    %699 = arith.addi %698, %c0_i32_670 : i32
    %c0_671 = arith.constant 0 : index
    %c0_672 = arith.constant 0 : index
    %700 = arith.index_cast %699 : i32 to index
    %c0_673 = arith.constant 0 : index
    %701 = vector.load %arg3[%c0_671, %c0_672, %700, %c0_673] : memref<1x1x328x8xf32, #tpu.memory_space<vmem>>, vector<1x1x16x8xf32>
    %702 = vector.shape_cast %701 : vector<1x1x16x8xf32> to vector<16x8xf32>
    %c216_i32_674 = arith.constant 216 : i32
    %703 = arith.addi %0, %c216_i32_674 : i32
    %c36_i32_675 = arith.constant 36 : i32
    %704 = arith.addi %703, %c36_i32_675 : i32
    %c1_i32_676 = arith.constant 1 : i32
    %705 = arith.addi %704, %c1_i32_676 : i32
    %c0_677 = arith.constant 0 : index
    %c0_678 = arith.constant 0 : index
    %706 = arith.index_cast %705 : i32 to index
    %c0_679 = arith.constant 0 : index
    %707 = vector.load %arg3[%c0_677, %c0_678, %706, %c0_679] : memref<1x1x328x8xf32, #tpu.memory_space<vmem>>, vector<1x1x16x8xf32>
    %708 = vector.shape_cast %707 : vector<1x1x16x8xf32> to vector<16x8xf32>
    %c216_i32_680 = arith.constant 216 : i32
    %709 = arith.addi %0, %c216_i32_680 : i32
    %c36_i32_681 = arith.constant 36 : i32
    %710 = arith.addi %709, %c36_i32_681 : i32
    %c2_i32_682 = arith.constant 2 : i32
    %711 = arith.addi %710, %c2_i32_682 : i32
    %c0_683 = arith.constant 0 : index
    %c0_684 = arith.constant 0 : index
    %712 = arith.index_cast %711 : i32 to index
    %c0_685 = arith.constant 0 : index
    %713 = vector.load %arg3[%c0_683, %c0_684, %712, %c0_685] : memref<1x1x328x8xf32, #tpu.memory_space<vmem>>, vector<1x1x16x8xf32>
    %714 = vector.shape_cast %713 : vector<1x1x16x8xf32> to vector<16x8xf32>
    %715 = tpu.concatenate %666, %672, %678, %684, %690, %696, %702, %708, %714 in 1 : vector<16x8xf32>, vector<16x8xf32>, vector<16x8xf32>, vector<16x8xf32>, vector<16x8xf32>, vector<16x8xf32>, vector<16x8xf32>, vector<16x8xf32>, vector<16x8xf32> -> vector<16x72xf32>
    %c234_i32 = arith.constant 234 : i32
    %716 = arith.addi %0, %c234_i32 : i32
    %c0_i32_686 = arith.constant 0 : i32
    %717 = arith.addi %716, %c0_i32_686 : i32
    %c0_i32_687 = arith.constant 0 : i32
    %718 = arith.addi %717, %c0_i32_687 : i32
    %c0_688 = arith.constant 0 : index
    %c0_689 = arith.constant 0 : index
    %719 = arith.index_cast %718 : i32 to index
    %c0_690 = arith.constant 0 : index
    %720 = vector.load %arg3[%c0_688, %c0_689, %719, %c0_690] : memref<1x1x328x8xf32, #tpu.memory_space<vmem>>, vector<1x1x16x8xf32>
    %721 = vector.shape_cast %720 : vector<1x1x16x8xf32> to vector<16x8xf32>
    %c234_i32_691 = arith.constant 234 : i32
    %722 = arith.addi %0, %c234_i32_691 : i32
    %c0_i32_692 = arith.constant 0 : i32
    %723 = arith.addi %722, %c0_i32_692 : i32
    %c1_i32_693 = arith.constant 1 : i32
    %724 = arith.addi %723, %c1_i32_693 : i32
    %c0_694 = arith.constant 0 : index
    %c0_695 = arith.constant 0 : index
    %725 = arith.index_cast %724 : i32 to index
    %c0_696 = arith.constant 0 : index
    %726 = vector.load %arg3[%c0_694, %c0_695, %725, %c0_696] : memref<1x1x328x8xf32, #tpu.memory_space<vmem>>, vector<1x1x16x8xf32>
    %727 = vector.shape_cast %726 : vector<1x1x16x8xf32> to vector<16x8xf32>
    %c234_i32_697 = arith.constant 234 : i32
    %728 = arith.addi %0, %c234_i32_697 : i32
    %c0_i32_698 = arith.constant 0 : i32
    %729 = arith.addi %728, %c0_i32_698 : i32
    %c2_i32_699 = arith.constant 2 : i32
    %730 = arith.addi %729, %c2_i32_699 : i32
    %c0_700 = arith.constant 0 : index
    %c0_701 = arith.constant 0 : index
    %731 = arith.index_cast %730 : i32 to index
    %c0_702 = arith.constant 0 : index
    %732 = vector.load %arg3[%c0_700, %c0_701, %731, %c0_702] : memref<1x1x328x8xf32, #tpu.memory_space<vmem>>, vector<1x1x16x8xf32>
    %733 = vector.shape_cast %732 : vector<1x1x16x8xf32> to vector<16x8xf32>
    %c234_i32_703 = arith.constant 234 : i32
    %734 = arith.addi %0, %c234_i32_703 : i32
    %c18_i32_704 = arith.constant 18 : i32
    %735 = arith.addi %734, %c18_i32_704 : i32
    %c0_i32_705 = arith.constant 0 : i32
    %736 = arith.addi %735, %c0_i32_705 : i32
    %c0_706 = arith.constant 0 : index
    %c0_707 = arith.constant 0 : index
    %737 = arith.index_cast %736 : i32 to index
    %c0_708 = arith.constant 0 : index
    %738 = vector.load %arg3[%c0_706, %c0_707, %737, %c0_708] : memref<1x1x328x8xf32, #tpu.memory_space<vmem>>, vector<1x1x16x8xf32>
    %739 = vector.shape_cast %738 : vector<1x1x16x8xf32> to vector<16x8xf32>
    %c234_i32_709 = arith.constant 234 : i32
    %740 = arith.addi %0, %c234_i32_709 : i32
    %c18_i32_710 = arith.constant 18 : i32
    %741 = arith.addi %740, %c18_i32_710 : i32
    %c1_i32_711 = arith.constant 1 : i32
    %742 = arith.addi %741, %c1_i32_711 : i32
    %c0_712 = arith.constant 0 : index
    %c0_713 = arith.constant 0 : index
    %743 = arith.index_cast %742 : i32 to index
    %c0_714 = arith.constant 0 : index
    %744 = vector.load %arg3[%c0_712, %c0_713, %743, %c0_714] : memref<1x1x328x8xf32, #tpu.memory_space<vmem>>, vector<1x1x16x8xf32>
    %745 = vector.shape_cast %744 : vector<1x1x16x8xf32> to vector<16x8xf32>
    %c234_i32_715 = arith.constant 234 : i32
    %746 = arith.addi %0, %c234_i32_715 : i32
    %c18_i32_716 = arith.constant 18 : i32
    %747 = arith.addi %746, %c18_i32_716 : i32
    %c2_i32_717 = arith.constant 2 : i32
    %748 = arith.addi %747, %c2_i32_717 : i32
    %c0_718 = arith.constant 0 : index
    %c0_719 = arith.constant 0 : index
    %749 = arith.index_cast %748 : i32 to index
    %c0_720 = arith.constant 0 : index
    %750 = vector.load %arg3[%c0_718, %c0_719, %749, %c0_720] : memref<1x1x328x8xf32, #tpu.memory_space<vmem>>, vector<1x1x16x8xf32>
    %751 = vector.shape_cast %750 : vector<1x1x16x8xf32> to vector<16x8xf32>
    %c234_i32_721 = arith.constant 234 : i32
    %752 = arith.addi %0, %c234_i32_721 : i32
    %c36_i32_722 = arith.constant 36 : i32
    %753 = arith.addi %752, %c36_i32_722 : i32
    %c0_i32_723 = arith.constant 0 : i32
    %754 = arith.addi %753, %c0_i32_723 : i32
    %c0_724 = arith.constant 0 : index
    %c0_725 = arith.constant 0 : index
    %755 = arith.index_cast %754 : i32 to index
    %c0_726 = arith.constant 0 : index
    %756 = vector.load %arg3[%c0_724, %c0_725, %755, %c0_726] : memref<1x1x328x8xf32, #tpu.memory_space<vmem>>, vector<1x1x16x8xf32>
    %757 = vector.shape_cast %756 : vector<1x1x16x8xf32> to vector<16x8xf32>
    %c234_i32_727 = arith.constant 234 : i32
    %758 = arith.addi %0, %c234_i32_727 : i32
    %c36_i32_728 = arith.constant 36 : i32
    %759 = arith.addi %758, %c36_i32_728 : i32
    %c1_i32_729 = arith.constant 1 : i32
    %760 = arith.addi %759, %c1_i32_729 : i32
    %c0_730 = arith.constant 0 : index
    %c0_731 = arith.constant 0 : index
    %761 = arith.index_cast %760 : i32 to index
    %c0_732 = arith.constant 0 : index
    %762 = vector.load %arg3[%c0_730, %c0_731, %761, %c0_732] : memref<1x1x328x8xf32, #tpu.memory_space<vmem>>, vector<1x1x16x8xf32>
    %763 = vector.shape_cast %762 : vector<1x1x16x8xf32> to vector<16x8xf32>
    %c234_i32_733 = arith.constant 234 : i32
    %764 = arith.addi %0, %c234_i32_733 : i32
    %c36_i32_734 = arith.constant 36 : i32
    %765 = arith.addi %764, %c36_i32_734 : i32
    %c2_i32_735 = arith.constant 2 : i32
    %766 = arith.addi %765, %c2_i32_735 : i32
    %c0_736 = arith.constant 0 : index
    %c0_737 = arith.constant 0 : index
    %767 = arith.index_cast %766 : i32 to index
    %c0_738 = arith.constant 0 : index
    %768 = vector.load %arg3[%c0_736, %c0_737, %767, %c0_738] : memref<1x1x328x8xf32, #tpu.memory_space<vmem>>, vector<1x1x16x8xf32>
    %769 = vector.shape_cast %768 : vector<1x1x16x8xf32> to vector<16x8xf32>
    %770 = tpu.concatenate %721, %727, %733, %739, %745, %751, %757, %763, %769 in 1 : vector<16x8xf32>, vector<16x8xf32>, vector<16x8xf32>, vector<16x8xf32>, vector<16x8xf32>, vector<16x8xf32>, vector<16x8xf32>, vector<16x8xf32>, vector<16x8xf32> -> vector<16x72xf32>
    %c252_i32 = arith.constant 252 : i32
    %771 = arith.addi %0, %c252_i32 : i32
    %c0_i32_739 = arith.constant 0 : i32
    %772 = arith.addi %771, %c0_i32_739 : i32
    %c0_i32_740 = arith.constant 0 : i32
    %773 = arith.addi %772, %c0_i32_740 : i32
    %c0_741 = arith.constant 0 : index
    %c0_742 = arith.constant 0 : index
    %774 = arith.index_cast %773 : i32 to index
    %c0_743 = arith.constant 0 : index
    %775 = vector.load %arg3[%c0_741, %c0_742, %774, %c0_743] : memref<1x1x328x8xf32, #tpu.memory_space<vmem>>, vector<1x1x16x8xf32>
    %776 = vector.shape_cast %775 : vector<1x1x16x8xf32> to vector<16x8xf32>
    %c252_i32_744 = arith.constant 252 : i32
    %777 = arith.addi %0, %c252_i32_744 : i32
    %c0_i32_745 = arith.constant 0 : i32
    %778 = arith.addi %777, %c0_i32_745 : i32
    %c1_i32_746 = arith.constant 1 : i32
    %779 = arith.addi %778, %c1_i32_746 : i32
    %c0_747 = arith.constant 0 : index
    %c0_748 = arith.constant 0 : index
    %780 = arith.index_cast %779 : i32 to index
    %c0_749 = arith.constant 0 : index
    %781 = vector.load %arg3[%c0_747, %c0_748, %780, %c0_749] : memref<1x1x328x8xf32, #tpu.memory_space<vmem>>, vector<1x1x16x8xf32>
    %782 = vector.shape_cast %781 : vector<1x1x16x8xf32> to vector<16x8xf32>
    %c252_i32_750 = arith.constant 252 : i32
    %783 = arith.addi %0, %c252_i32_750 : i32
    %c0_i32_751 = arith.constant 0 : i32
    %784 = arith.addi %783, %c0_i32_751 : i32
    %c2_i32_752 = arith.constant 2 : i32
    %785 = arith.addi %784, %c2_i32_752 : i32
    %c0_753 = arith.constant 0 : index
    %c0_754 = arith.constant 0 : index
    %786 = arith.index_cast %785 : i32 to index
    %c0_755 = arith.constant 0 : index
    %787 = vector.load %arg3[%c0_753, %c0_754, %786, %c0_755] : memref<1x1x328x8xf32, #tpu.memory_space<vmem>>, vector<1x1x16x8xf32>
    %788 = vector.shape_cast %787 : vector<1x1x16x8xf32> to vector<16x8xf32>
    %c252_i32_756 = arith.constant 252 : i32
    %789 = arith.addi %0, %c252_i32_756 : i32
    %c18_i32_757 = arith.constant 18 : i32
    %790 = arith.addi %789, %c18_i32_757 : i32
    %c0_i32_758 = arith.constant 0 : i32
    %791 = arith.addi %790, %c0_i32_758 : i32
    %c0_759 = arith.constant 0 : index
    %c0_760 = arith.constant 0 : index
    %792 = arith.index_cast %791 : i32 to index
    %c0_761 = arith.constant 0 : index
    %793 = vector.load %arg3[%c0_759, %c0_760, %792, %c0_761] : memref<1x1x328x8xf32, #tpu.memory_space<vmem>>, vector<1x1x16x8xf32>
    %794 = vector.shape_cast %793 : vector<1x1x16x8xf32> to vector<16x8xf32>
    %c252_i32_762 = arith.constant 252 : i32
    %795 = arith.addi %0, %c252_i32_762 : i32
    %c18_i32_763 = arith.constant 18 : i32
    %796 = arith.addi %795, %c18_i32_763 : i32
    %c1_i32_764 = arith.constant 1 : i32
    %797 = arith.addi %796, %c1_i32_764 : i32
    %c0_765 = arith.constant 0 : index
    %c0_766 = arith.constant 0 : index
    %798 = arith.index_cast %797 : i32 to index
    %c0_767 = arith.constant 0 : index
    %799 = vector.load %arg3[%c0_765, %c0_766, %798, %c0_767] : memref<1x1x328x8xf32, #tpu.memory_space<vmem>>, vector<1x1x16x8xf32>
    %800 = vector.shape_cast %799 : vector<1x1x16x8xf32> to vector<16x8xf32>
    %c252_i32_768 = arith.constant 252 : i32
    %801 = arith.addi %0, %c252_i32_768 : i32
    %c18_i32_769 = arith.constant 18 : i32
    %802 = arith.addi %801, %c18_i32_769 : i32
    %c2_i32_770 = arith.constant 2 : i32
    %803 = arith.addi %802, %c2_i32_770 : i32
    %c0_771 = arith.constant 0 : index
    %c0_772 = arith.constant 0 : index
    %804 = arith.index_cast %803 : i32 to index
    %c0_773 = arith.constant 0 : index
    %805 = vector.load %arg3[%c0_771, %c0_772, %804, %c0_773] : memref<1x1x328x8xf32, #tpu.memory_space<vmem>>, vector<1x1x16x8xf32>
    %806 = vector.shape_cast %805 : vector<1x1x16x8xf32> to vector<16x8xf32>
    %c252_i32_774 = arith.constant 252 : i32
    %807 = arith.addi %0, %c252_i32_774 : i32
    %c36_i32_775 = arith.constant 36 : i32
    %808 = arith.addi %807, %c36_i32_775 : i32
    %c0_i32_776 = arith.constant 0 : i32
    %809 = arith.addi %808, %c0_i32_776 : i32
    %c0_777 = arith.constant 0 : index
    %c0_778 = arith.constant 0 : index
    %810 = arith.index_cast %809 : i32 to index
    %c0_779 = arith.constant 0 : index
    %811 = vector.load %arg3[%c0_777, %c0_778, %810, %c0_779] : memref<1x1x328x8xf32, #tpu.memory_space<vmem>>, vector<1x1x16x8xf32>
    %812 = vector.shape_cast %811 : vector<1x1x16x8xf32> to vector<16x8xf32>
    %c252_i32_780 = arith.constant 252 : i32
    %813 = arith.addi %0, %c252_i32_780 : i32
    %c36_i32_781 = arith.constant 36 : i32
    %814 = arith.addi %813, %c36_i32_781 : i32
    %c1_i32_782 = arith.constant 1 : i32
    %815 = arith.addi %814, %c1_i32_782 : i32
    %c0_783 = arith.constant 0 : index
    %c0_784 = arith.constant 0 : index
    %816 = arith.index_cast %815 : i32 to index
    %c0_785 = arith.constant 0 : index
    %817 = vector.load %arg3[%c0_783, %c0_784, %816, %c0_785] : memref<1x1x328x8xf32, #tpu.memory_space<vmem>>, vector<1x1x16x8xf32>
    %818 = vector.shape_cast %817 : vector<1x1x16x8xf32> to vector<16x8xf32>
    %c252_i32_786 = arith.constant 252 : i32
    %819 = arith.addi %0, %c252_i32_786 : i32
    %c36_i32_787 = arith.constant 36 : i32
    %820 = arith.addi %819, %c36_i32_787 : i32
    %c2_i32_788 = arith.constant 2 : i32
    %821 = arith.addi %820, %c2_i32_788 : i32
    %c0_789 = arith.constant 0 : index
    %c0_790 = arith.constant 0 : index
    %822 = arith.index_cast %821 : i32 to index
    %c0_791 = arith.constant 0 : index
    %823 = vector.load %arg3[%c0_789, %c0_790, %822, %c0_791] : memref<1x1x328x8xf32, #tpu.memory_space<vmem>>, vector<1x1x16x8xf32>
    %824 = vector.shape_cast %823 : vector<1x1x16x8xf32> to vector<16x8xf32>
    %825 = tpu.concatenate %776, %782, %788, %794, %800, %806, %812, %818, %824 in 1 : vector<16x8xf32>, vector<16x8xf32>, vector<16x8xf32>, vector<16x8xf32>, vector<16x8xf32>, vector<16x8xf32>, vector<16x8xf32>, vector<16x8xf32>, vector<16x8xf32> -> vector<16x72xf32>
    %c270_i32 = arith.constant 270 : i32
    %826 = arith.addi %0, %c270_i32 : i32
    %c0_i32_792 = arith.constant 0 : i32
    %827 = arith.addi %826, %c0_i32_792 : i32
    %c0_i32_793 = arith.constant 0 : i32
    %828 = arith.addi %827, %c0_i32_793 : i32
    %c0_794 = arith.constant 0 : index
    %c0_795 = arith.constant 0 : index
    %829 = arith.index_cast %828 : i32 to index
    %c0_796 = arith.constant 0 : index
    %830 = vector.load %arg3[%c0_794, %c0_795, %829, %c0_796] : memref<1x1x328x8xf32, #tpu.memory_space<vmem>>, vector<1x1x16x8xf32>
    %831 = vector.shape_cast %830 : vector<1x1x16x8xf32> to vector<16x8xf32>
    %c270_i32_797 = arith.constant 270 : i32
    %832 = arith.addi %0, %c270_i32_797 : i32
    %c0_i32_798 = arith.constant 0 : i32
    %833 = arith.addi %832, %c0_i32_798 : i32
    %c1_i32_799 = arith.constant 1 : i32
    %834 = arith.addi %833, %c1_i32_799 : i32
    %c0_800 = arith.constant 0 : index
    %c0_801 = arith.constant 0 : index
    %835 = arith.index_cast %834 : i32 to index
    %c0_802 = arith.constant 0 : index
    %836 = vector.load %arg3[%c0_800, %c0_801, %835, %c0_802] : memref<1x1x328x8xf32, #tpu.memory_space<vmem>>, vector<1x1x16x8xf32>
    %837 = vector.shape_cast %836 : vector<1x1x16x8xf32> to vector<16x8xf32>
    %c270_i32_803 = arith.constant 270 : i32
    %838 = arith.addi %0, %c270_i32_803 : i32
    %c0_i32_804 = arith.constant 0 : i32
    %839 = arith.addi %838, %c0_i32_804 : i32
    %c2_i32_805 = arith.constant 2 : i32
    %840 = arith.addi %839, %c2_i32_805 : i32
    %c0_806 = arith.constant 0 : index
    %c0_807 = arith.constant 0 : index
    %841 = arith.index_cast %840 : i32 to index
    %c0_808 = arith.constant 0 : index
    %842 = vector.load %arg3[%c0_806, %c0_807, %841, %c0_808] : memref<1x1x328x8xf32, #tpu.memory_space<vmem>>, vector<1x1x16x8xf32>
    %843 = vector.shape_cast %842 : vector<1x1x16x8xf32> to vector<16x8xf32>
    %c270_i32_809 = arith.constant 270 : i32
    %844 = arith.addi %0, %c270_i32_809 : i32
    %c18_i32_810 = arith.constant 18 : i32
    %845 = arith.addi %844, %c18_i32_810 : i32
    %c0_i32_811 = arith.constant 0 : i32
    %846 = arith.addi %845, %c0_i32_811 : i32
    %c0_812 = arith.constant 0 : index
    %c0_813 = arith.constant 0 : index
    %847 = arith.index_cast %846 : i32 to index
    %c0_814 = arith.constant 0 : index
    %848 = vector.load %arg3[%c0_812, %c0_813, %847, %c0_814] : memref<1x1x328x8xf32, #tpu.memory_space<vmem>>, vector<1x1x16x8xf32>
    %849 = vector.shape_cast %848 : vector<1x1x16x8xf32> to vector<16x8xf32>
    %c270_i32_815 = arith.constant 270 : i32
    %850 = arith.addi %0, %c270_i32_815 : i32
    %c18_i32_816 = arith.constant 18 : i32
    %851 = arith.addi %850, %c18_i32_816 : i32
    %c1_i32_817 = arith.constant 1 : i32
    %852 = arith.addi %851, %c1_i32_817 : i32
    %c0_818 = arith.constant 0 : index
    %c0_819 = arith.constant 0 : index
    %853 = arith.index_cast %852 : i32 to index
    %c0_820 = arith.constant 0 : index
    %854 = vector.load %arg3[%c0_818, %c0_819, %853, %c0_820] : memref<1x1x328x8xf32, #tpu.memory_space<vmem>>, vector<1x1x16x8xf32>
    %855 = vector.shape_cast %854 : vector<1x1x16x8xf32> to vector<16x8xf32>
    %c270_i32_821 = arith.constant 270 : i32
    %856 = arith.addi %0, %c270_i32_821 : i32
    %c18_i32_822 = arith.constant 18 : i32
    %857 = arith.addi %856, %c18_i32_822 : i32
    %c2_i32_823 = arith.constant 2 : i32
    %858 = arith.addi %857, %c2_i32_823 : i32
    %c0_824 = arith.constant 0 : index
    %c0_825 = arith.constant 0 : index
    %859 = arith.index_cast %858 : i32 to index
    %c0_826 = arith.constant 0 : index
    %860 = vector.load %arg3[%c0_824, %c0_825, %859, %c0_826] : memref<1x1x328x8xf32, #tpu.memory_space<vmem>>, vector<1x1x16x8xf32>
    %861 = vector.shape_cast %860 : vector<1x1x16x8xf32> to vector<16x8xf32>
    %c270_i32_827 = arith.constant 270 : i32
    %862 = arith.addi %0, %c270_i32_827 : i32
    %c36_i32_828 = arith.constant 36 : i32
    %863 = arith.addi %862, %c36_i32_828 : i32
    %c0_i32_829 = arith.constant 0 : i32
    %864 = arith.addi %863, %c0_i32_829 : i32
    %c0_830 = arith.constant 0 : index
    %c0_831 = arith.constant 0 : index
    %865 = arith.index_cast %864 : i32 to index
    %c0_832 = arith.constant 0 : index
    %866 = vector.load %arg3[%c0_830, %c0_831, %865, %c0_832] : memref<1x1x328x8xf32, #tpu.memory_space<vmem>>, vector<1x1x16x8xf32>
    %867 = vector.shape_cast %866 : vector<1x1x16x8xf32> to vector<16x8xf32>
    %c270_i32_833 = arith.constant 270 : i32
    %868 = arith.addi %0, %c270_i32_833 : i32
    %c36_i32_834 = arith.constant 36 : i32
    %869 = arith.addi %868, %c36_i32_834 : i32
    %c1_i32_835 = arith.constant 1 : i32
    %870 = arith.addi %869, %c1_i32_835 : i32
    %c0_836 = arith.constant 0 : index
    %c0_837 = arith.constant 0 : index
    %871 = arith.index_cast %870 : i32 to index
    %c0_838 = arith.constant 0 : index
    %872 = vector.load %arg3[%c0_836, %c0_837, %871, %c0_838] : memref<1x1x328x8xf32, #tpu.memory_space<vmem>>, vector<1x1x16x8xf32>
    %873 = vector.shape_cast %872 : vector<1x1x16x8xf32> to vector<16x8xf32>
    %c270_i32_839 = arith.constant 270 : i32
    %874 = arith.addi %0, %c270_i32_839 : i32
    %c36_i32_840 = arith.constant 36 : i32
    %875 = arith.addi %874, %c36_i32_840 : i32
    %c2_i32_841 = arith.constant 2 : i32
    %876 = arith.addi %875, %c2_i32_841 : i32
    %c0_842 = arith.constant 0 : index
    %c0_843 = arith.constant 0 : index
    %877 = arith.index_cast %876 : i32 to index
    %c0_844 = arith.constant 0 : index
    %878 = vector.load %arg3[%c0_842, %c0_843, %877, %c0_844] : memref<1x1x328x8xf32, #tpu.memory_space<vmem>>, vector<1x1x16x8xf32>
    %879 = vector.shape_cast %878 : vector<1x1x16x8xf32> to vector<16x8xf32>
    %880 = tpu.concatenate %831, %837, %843, %849, %855, %861, %867, %873, %879 in 1 : vector<16x8xf32>, vector<16x8xf32>, vector<16x8xf32>, vector<16x8xf32>, vector<16x8xf32>, vector<16x8xf32>, vector<16x8xf32>, vector<16x8xf32>, vector<16x8xf32> -> vector<16x72xf32>
    %881 = tpu.concatenate %55, %110, %165, %220, %275, %330, %385, %440, %495, %550, %605, %660, %715, %770, %825, %880 in 0 : vector<16x72xf32>, vector<16x72xf32>, vector<16x72xf32>, vector<16x72xf32>, vector<16x72xf32>, vector<16x72xf32>, vector<16x72xf32>, vector<16x72xf32>, vector<16x72xf32>, vector<16x72xf32>, vector<16x72xf32>, vector<16x72xf32>, vector<16x72xf32>, vector<16x72xf32>, vector<16x72xf32>, vector<16x72xf32> -> vector<256x72xf32>
    %c0_845 = arith.constant 0 : index
    %c0_846 = arith.constant 0 : index
    %c0_847 = arith.constant 0 : index
    %882 = vector.load %arg4[%c0_845, %c0_846, %c0_847] : memref<1x72x128xf32, #tpu.memory_space<vmem>>, vector<1x72x128xf32>
    %883 = vector.shape_cast %882 : vector<1x72x128xf32> to vector<72x128xf32>
    %cst = arith.constant dense<0.000000e+00> : vector<256x128xf32>
    %884 = tpu.matmul %881, %883, %cst {dimension_numbers = #tpu.dot_dimension_numbers<[1], [0], [0], [1], [0, 0, 1, 1], [], []>} : vector<256x72xf32>, vector<72x128xf32>, vector<256x128xf32> -> vector<256x128xf32>
    %c0_848 = arith.constant 0 : index
    %c0_849 = arith.constant 0 : index
    %c0_850 = arith.constant 0 : index
    %885 = vector.load %arg5[%c0_848, %c0_849, %c0_850] : memref<1x1x128xf32, #tpu.memory_space<vmem>>, vector<1x1x128xf32>
    %886 = vector.shape_cast %885 : vector<1x1x128xf32> to vector<1x128xf32>
    %887 = vector.broadcast %886 : vector<1x128xf32> to vector<256x128xf32>
    %888 = arith.addf %884, %887 : vector<256x128xf32>
    %c0_851 = arith.constant 0 : index
    %c0_852 = arith.constant 0 : index
    %c0_853 = arith.constant 0 : index
    %c0_854 = arith.constant 0 : index
    %889 = vector.load %arg6[%c0_851, %c0_852, %c0_853, %c0_854] : memref<1x1x256x128xf32, #tpu.memory_space<vmem>>, vector<1x1x256x128xf32>
    %890 = vector.shape_cast %889 : vector<1x1x256x128xf32> to vector<256x128xf32>
    %891 = vector.shape_cast %888 : vector<256x128xf32> to vector<1x1x256x128xf32>
    tpu.vector_store %arg6[%c0_851, %c0_852, %c0_853, %c0_854], %891 {strides = array<i32>} : memref<1x1x256x128xf32, #tpu.memory_space<vmem>>, vector<1x1x256x128xf32>,
    return
  }
  func.func @transform_0(%arg0: i32, %arg1: i32, %arg2: i32) -> (i32, i32, i32, i32) {
    %c0_i32 = arith.constant 0 : i32
    %c0_i32_0 = arith.constant 0 : i32
    %c0_i32_1 = arith.constant 0 : i32
    return %arg1, %arg0, %c0_i32, %c0_i32_0 : i32, i32, i32, i32
  }
  func.func @transform_1(%arg0: i32, %arg1: i32, %arg2: i32) -> (i32, i32, i32) {
    %c0_i32 = arith.constant 0 : i32
    %c0_i32_0 = arith.constant 0 : i32
    %c0_i32_1 = arith.constant 0 : i32
    return %arg0, %c0_i32, %c0_i32_0 : i32, i32, i32
  }
  func.func @transform_2(%arg0: i32, %arg1: i32, %arg2: i32) -> (i32, i32, i32) {
    %c0_i32 = arith.constant 0 : i32
    %c0_i32_0 = arith.constant 0 : i32
    %c0_i32_1 = arith.constant 0 : i32
    return %arg0, %c0_i32, %c0_i32_0 : i32, i32, i32
  }
  func.func @transform_3(%arg0: i32, %arg1: i32, %arg2: i32) -> (i32, i32, i32, i32) {
    %c0_i32 = arith.constant 0 : i32
    %c0_i32_0 = arith.constant 0 : i32
    return %arg1, %arg0, %arg2, %c0_i32 : i32, i32, i32, i32
  }
}

</mosaic_0001>

<llo_original>
// kernel: conv2d_pallas.1
$region0: #{conv2d_pallas.1}
  #allocation0 [shape = 'u32[]', space=smem, size = 0x4, offset = 0x4, fixed_abs, tag = 'smem constant byte address 0x4 - core index']
  #allocation1 [shape = 'u32[144,128]{1,0:T(1,128)}', space=vmem, size = 0x12000, scoped, tag = 'internal scratch']
  %s0 = inlined_call_operand.vmem [shape: f32[2,1,328,8], index: 0, kind: input, shape index: {}]
  %s1 = inlined_call_operand.vmem [shape: f32[1,72,128], index: 1, kind: input, shape index: {}]
  %s2 = inlined_call_operand.vmem [shape: f32[1,1,128], index: 2, kind: input, shape index: {}]
  %s3 = inlined_call_operand.vmem [shape: f32[2,1,256,128], index: 3, kind: output, shape index: {}]
  %s4 = sld [smem:[#allocation0]]
  $region45: #{conv2d_pallas.1} parent=0
    _
  %s6 = ssub.s32 1, %s4
  %s7 = scalar_select 0, %s6, %s4
  loop: start=0, step=1, limit=4
  $region2: #{conv2d_pallas.1} parent=0 // loop_pre_header
    _
  $region3: #{conv2d_pallas.1} parent=0 // loop_header
    %s9 = sphi 0, %s13
    %p10 = scmp.ge.s32.totalorder %s9, 4
    %s16 = sphi 0, %s35
    %s17 = sphi 0, %s31
    %s18 = sphi 0, %s27
    %s19 = sphi 0, %s16
    %s20 = sphi 0, %s17
    %s21 = sphi 0, %s18
    %s22 = sphi 0, %s19
    %s23 = sphi 0, %s20
    %s24 = sphi 0, %s21
    %s40 = sphi 0, %s42
    %s43 = sphi 0, %s40
    %s44 = sphi 0, %s43
    %s60 = sphi 0, %s44
    %s66 = sphi 0, %s68
    %s69 = sphi 0, %s66
    %s70 = sphi 0, %s69
    %s86 = sphi 0, %s70
    %s92 = sphi 0, %s94
    %s95 = sphi 0, %s92
    %s96 = sphi 0, %s95
    %s112 = sphi 0, %s96
    %s122 = sphi 0, %s124
    %s125 = sphi 0, %s122
    %s126 = sphi 0, %s125
    %s142 = sphi 0, %s126
  $region4: #{conv2d_pallas.1} parent=0 // loop_header_branch
    %12 = sbr.rel (%p10) target = $region8
  $region5: #{conv2d_pallas.1} parent=0 // loop_body
    %s14 = ssub.s32 %s9, 1
    %s15 = ssub.s32 %s9, 2
    %s25 = sadd.s32 1, %s18
    %p26 = scmp.ge.s32.totalorder %s25, 1
    %s27 = scalar_select %p26, 0, %s25
    %s28 = sadd.s32 1, %s17
    %s29 = scalar_select %p26, %s28, %s17
    %p30 = scmp.ge.s32.totalorder %s29, 2
    %s31 = scalar_select %p30, 0, %s29
    %s32 = sadd.s32 1, %s16
    %s33 = scalar_select %p30, %s32, %s16
    %p34 = scmp.ge.s32.totalorder %s33, 1
    %s35 = scalar_select %p34, 0, %s33
    %s36 = ssub.s32 %s17, %s31
    %s37 = ssub.s32 %s16, %s35
    %s38 = sor.u32 %s36, %s37
    %p39 = scmp.eq.s32.totalorder %s38, 0
    %s41 = sadd.s32 %s40, 1
    %s42 = scalar_select %p39, %s40, %s41
    %p45 = pneg %p39
    %p46 = scmp.eq.s32.totalorder %s9, 1
    %p47 = por %p45, %p46
    %p48 = scmp.ne.s32.totalorder %s40, %s43
    %p49 = scmp.eq.s32.totalorder %s9, 0
    %p50 = por %p48, %p49
    %p51 = scmp.ne.s32.totalorder %s40, %s43
    %p52 = scmp.eq.s32.totalorder %s14, 1
    %p53 = por %p51, %p52
    %p54 = scmp.ne.s32.totalorder %s43, %s44
    %p55 = scmp.eq.s32.totalorder %s14, 0
    %p56 = por %p54, %p55
    %p57 = scmp.ne.s32.totalorder %s43, %s44
    %p58 = scmp.eq.s32.totalorder %s15, 1
    %p59 = por %p57, %p58
    %p61 = scmp.ne.s32.totalorder %s44, %s60
    %p62 = scmp.eq.s32.totalorder %s15, 0
    %p63 = por %p61, %p62
    %s64 = ssub.s32 %s16, %s35
    %p65 = scmp.eq.s32.totalorder %s64, 0
    %s67 = sadd.s32 %s66, 1
    %s68 = scalar_select %p65, %s66, %s67
    %p71 = pneg %p65
    %p72 = scmp.eq.s32.totalorder %s9, 1
    %p73 = por %p71, %p72
    %p74 = scmp.ne.s32.totalorder %s66, %s69
    %p75 = scmp.eq.s32.totalorder %s9, 0
    %p76 = por %p74, %p75
    %p77 = scmp.ne.s32.totalorder %s66, %s69
    %p78 = scmp.eq.s32.totalorder %s14, 1
    %p79 = por %p77, %p78
    %p80 = scmp.ne.s32.totalorder %s69, %s70
    %p81 = scmp.eq.s32.totalorder %s14, 0
    %p82 = por %p80, %p81
    %p83 = scmp.ne.s32.totalorder %s69, %s70
    %p84 = scmp.eq.s32.totalorder %s15, 1
    %p85 = por %p83, %p84
    %p87 = scmp.ne.s32.totalorder %s70, %s86
    %p88 = scmp.eq.s32.totalorder %s15, 0
    %p89 = por %p87, %p88
    %s90 = ssub.s32 %s16, %s35
    %p91 = scmp.eq.s32.totalorder %s90, 0
    %s93 = sadd.s32 %s92, 1
    %s94 = scalar_select %p91, %s92, %s93
    %p97 = pneg %p91
    %p98 = scmp.eq.s32.totalorder %s9, 1
    %p99 = por %p97, %p98
    %p100 = scmp.ne.s32.totalorder %s92, %s95
    %p101 = scmp.eq.s32.totalorder %s9, 0
    %p102 = por %p100, %p101
    %p103 = scmp.ne.s32.totalorder %s92, %s95
    %p104 = scmp.eq.s32.totalorder %s14, 1
    %p105 = por %p103, %p104
    %p106 = scmp.ne.s32.totalorder %s95, %s96
    %p107 = scmp.eq.s32.totalorder %s14, 0
    %p108 = por %p106, %p107
    %p109 = scmp.ne.s32.totalorder %s95, %s96
    %p110 = scmp.eq.s32.totalorder %s15, 1
    %p111 = por %p109, %p110
    %p113 = scmp.ne.s32.totalorder %s96, %s112
    %p114 = scmp.eq.s32.totalorder %s15, 0
    %p115 = por %p113, %p114
    %s116 = ssub.s32 %s17, %s31
    %s117 = ssub.s32 %s16, %s35
    %s118 = sor.u32 %s116, %s117
    %s119 = ssub.s32 %s18, %s27
    %s120 = sor.u32 %s118, %s119
    %p121 = scmp.eq.s32.totalorder %s120, 0
    %s123 = sadd.s32 %s122, 1
    %s124 = scalar_select %p121, %s122, %s123
    %p127 = pneg %p121
    %p128 = scmp.eq.s32.totalorder %s9, 1
    %p129 = por %p127, %p128
    %p130 = scmp.ne.s32.totalorder %s122, %s125
    %p131 = scmp.eq.s32.totalorder %s9, 0
    %p132 = por %p130, %p131
    %p133 = scmp.ne.s32.totalorder %s122, %s125
    %p134 = scmp.eq.s32.totalorder %s14, 1
    %p135 = por %p133, %p134
    %p136 = scmp.ne.s32.totalorder %s125, %s126
    %p137 = scmp.eq.s32.totalorder %s14, 0
    %p138 = por %p136, %p137
    %p139 = scmp.ne.s32.totalorder %s125, %s126
    %p140 = scmp.eq.s32.totalorder %s15, 1
    %p141 = por %p139, %p140
    %p143 = scmp.ne.s32.totalorder %s126, %s142
    %p144 = scmp.eq.s32.totalorder %s15, 0
    %p145 = por %p143, %p144
    %p146 = scmp.le.s32.totalorder 1, %s9
    %p147 = scmp.lt.s32.totalorder %s9, 3
    %p148 = pnand %p146, %p147
    %p149 = pneg %p148
    // Predicated region
    $region9: #{conv2d_pallas.1} parent=5 // pred_check
      _
    $region10: #{conv2d_pallas.1} parent=5 // pred_check_branch
      %151 = sbr.rel (%p148) target = $region12
    $region11: #{conv2d_pallas.1} parent=5 // pred_region
      %s152 = ssub.s32 %s9, 1
      // Predicated region
      $region13: #{conv2d_pallas.1} parent=11 // pred_check
        %p153 = pneg %p82
      $region14: #{conv2d_pallas.1} parent=11 // pred_check_branch
        %155 = sbr.rel (%p153) target = $region16
      $region15: #{conv2d_pallas.1} parent=11 // pred_region
        %p156 = scmp.lt.s32.totalorder %s19, 0
        %s157 = scalar_select %p156, %s19, 0
        %s158 = smul.addr %s157, 9
        %s159 = smul.addr %s158, 8
        %s160 = scalar_lea.vmem %s1, %s159
      $region16: #{conv2d_pallas.1} parent=11 // pred_fallthru
        _
      // Predicated region
      $region17: #{conv2d_pallas.1} parent=11 // pred_check
        %p161 = pneg %p108
      $region18: #{conv2d_pallas.1} parent=11 // pred_check_branch
        %163 = sbr.rel (%p161) target = $region20
      $region19: #{conv2d_pallas.1} parent=11 // pred_region
        %p164 = scmp.lt.s32.totalorder %s19, 0
        %s165 = scalar_select %p164, %s19, 0
        %s166 = scalar_lea.vmem %s2, %s165
      $region20: #{conv2d_pallas.1} parent=11 // pred_fallthru
        _
    $region12: #{conv2d_pallas.1} parent=5 // pred_fallthru
      _
    %p167 = scmp.lt.s32.totalorder %s9, 2
    // Predicated region
    $region21: #{conv2d_pallas.1} parent=5 // pred_check
      %p168 = pneg %p167
    $region22: #{conv2d_pallas.1} parent=5 // pred_check_branch
      %170 = sbr.rel (%p168) target = $region24
    $region23: #{conv2d_pallas.1} parent=5 // pred_region
      // Predicated region
      $region25: #{conv2d_pallas.1} parent=23 // pred_check
        %p171 = pneg %p50
      $region26: #{conv2d_pallas.1} parent=23 // pred_check_branch
        %173 = sbr.rel (%p171) target = $region28
      $region27: #{conv2d_pallas.1} parent=23 // pred_region
        %p174 = scmp.lt.s32.totalorder %s17, 1
        %s175 = scalar_select %p174, %s17, 1
        %p176 = scmp.lt.s32.totalorder %s16, 0
        %s177 = scalar_select %p176, %s16, 0
        %s178 = smul.addr %s177, 41
        %s179 = smul.addr %s175, 41
        %s180 = sadd.s32 %s178, %s179
        %s181 = smul.addr %s180, 8
        %s182 = scalar_lea.vmem %s0, %s181
      $region28: #{conv2d_pallas.1} parent=23 // pred_fallthru
        _
    $region24: #{conv2d_pallas.1} parent=5 // pred_fallthru
      _
    %p183 = scmp.le.s32.totalorder 1, %s9
    %p184 = scmp.lt.s32.totalorder %s9, 3
    %p185 = pnand %p183, %p184
    %p186 = pneg %p185
    // Predicated region
    $region29: #{conv2d_pallas.1} parent=5 // pred_check
      _
    $region30: #{conv2d_pallas.1} parent=5 // pred_check_branch
      %188 = sbr.rel (%p185) target = $region32
    $region31: #{conv2d_pallas.1} parent=5 // pred_region
      %s189 = ssub.s32 %s9, 1
      %p190 = scmp.lt.s32.totalorder %s20, 1
      %s191 = scalar_select %p190, %s20, 1
      %p192 = scmp.lt.s32.totalorder %s19, 0
      %s193 = scalar_select %p192, %s19, 0
      %s194 = smul.addr %s193, 41
      %s195 = smul.addr %s191, 41
      %s196 = sadd.s32 %s194, %s195
      %s197 = smul.addr %s196, 8
      %s198 = scalar_lea.vmem %s0, %s197
      %p199 = pneg %p56
      %p200 = pneg %p53
      %p201 = scmp.lt.s32.totalorder %s19, 0
      %s202 = scalar_select %p201, %s19, 0
      %s203 = smul.addr %s202, 9
      %s204 = smul.addr %s203, 8
      %s205 = scalar_lea.vmem %s1, %s204
      %p206 = pneg %p82
      %p207 = pneg %p79
      %p208 = scmp.lt.s32.totalorder %s19, 0
      %s209 = scalar_select %p208, %s19, 0
      %s210 = scalar_lea.vmem %s2, %s209
      %p211 = pneg %p108
      %p212 = pneg %p105
      %p213 = pneg %p138
      %p214 = pneg %p135
      %s215 = smul.u32 32, %s21
      %p216 = scmp.lt.s32.totalorder %s20, 1
      %s217 = scalar_select %p216, %s20, 1
      %p218 = scmp.lt.s32.totalorder %s19, 0
      %s219 = scalar_select %p218, %s19, 0
      %p220 = scmp.lt.s32.totalorder %s215, 31
      %s221 = scalar_select %p220, %s215, 31
      %s222 = smul.addr %s219, 32
      %s223 = sadd.s32 %s221, %s222
      %s224 = smul.addr %s217, 32
      %s225 = sadd.s32 %s223, %s224
      %s226 = smul.addr %s225, 8
      %s227 = scalar_lea.vmem %s3, %s226
      %p228 = scmp.lt.s32.totalorder %s20, 1
      %s229 = scalar_select %p228, %s20, 1
      %p230 = scmp.lt.s32.totalorder %s19, 0
      %s231 = scalar_select %p230, %s19, 0
      %s232 = smul.addr %s231, 41
      %s233 = smul.addr %s229, 41
      %s234 = sadd.s32 %s232, %s233
      %s235 = smul.addr %s234, 8
      %s236 = scalar_lea.vmem %s0, %s235
      %p237 = scmp.lt.s32.totalorder %s19, 0
      %s238 = scalar_select %p237, %s19, 0
      %s239 = smul.addr %s238, 9
      %s240 = smul.addr %s239, 8
      %s241 = scalar_lea.vmem %s1, %s240
      %p242 = scmp.lt.s32.totalorder %s19, 0
      %s243 = scalar_select %p242, %s19, 0
      %s244 = scalar_lea.vmem %s2, %s243
      %s245 = smul.u32 32, %s21
      %p246 = scmp.lt.s32.totalorder %s20, 1
      %s247 = scalar_select %p246, %s20, 1
      %p248 = scmp.lt.s32.totalorder %s19, 0
      %s249 = scalar_select %p248, %s19, 0
      %p250 = scmp.lt.s32.totalorder %s245, 31
      %s251 = scalar_select %p250, %s245, 31
      %s252 = smul.addr %s249, 32
      %s253 = sadd.s32 %s251, %s252
      %s254 = smul.addr %s247, 32
      %s255 = sadd.s32 %s253, %s254
      %s256 = smul.addr %s255, 8
      %s257 = scalar_lea.vmem %s3, %s256
      %s258 = smul.u32 32, %s21
      %s259 = smul.u32 %s21, 288
      %s260 = scalar_lea.vmem %s236, %s259
      %v261 = vld [vmem:[%s260] sm:$0xff]
      %v262 = vld [vmem:[%s260 + $0x8] sm:$0xff]
      %s263 = sadd.s32 %s259, 1
      %s264 = scalar_lea.vmem %s236, %s263
      %v265 = vld [vmem:[%s264] sm:$0xff]
      %v266 = vld [vmem:[%s264 + $0x8] sm:$0xff]
      %s267 = sadd.s32 %s259, 2
      %s268 = scalar_lea.vmem %s236, %s267
      %v269 = vld [vmem:[%s268] sm:$0xff]
      %v270 = vld [vmem:[%s268 + $0x8] sm:$0xff]
      %s271 = sadd.s32 %s259, 18
      %s272 = scalar_lea.vmem %s236, %s271
      %v273 = vld [vmem:[%s272] sm:$0xff]
      %v274 = vld [vmem:[%s272 + $0x8] sm:$0xff]
      %s275 = sadd.s32 %s259, 19
      %s276 = scalar_lea.vmem %s236, %s275
      %v277 = vld [vmem:[%s276] sm:$0xff]
      %v278 = vld [vmem:[%s276 + $0x8] sm:$0xff]
      %s279 = sadd.s32 %s259, 20
      %s280 = scalar_lea.vmem %s236, %s279
      %v281 = vld [vmem:[%s280] sm:$0xff]
      %v282 = vld [vmem:[%s280 + $0x8] sm:$0xff]
      %s283 = sadd.s32 %s259, 36
      %s284 = scalar_lea.vmem %s236, %s283
      %v285 = vld [vmem:[%s284] sm:$0xff]
      %v286 = vld [vmem:[%s284 + $0x8] sm:$0xff]
      %s287 = sadd.s32 %s259, 37
      %s288 = scalar_lea.vmem %s236, %s287
      %v289 = vld [vmem:[%s288] sm:$0xff]
      %v290 = vld [vmem:[%s288 + $0x8] sm:$0xff]
      %s291 = sadd.s32 %s259, 38
      %s292 = scalar_lea.vmem %s236, %s291
      %v293 = vld [vmem:[%s292] sm:$0xff]
      %v294 = vld [vmem:[%s292 + $0x8] sm:$0xff]
      %297 = vrot.lane.b32.xlu0 %v265, 8
      %v298 = vpop.permute.xlu0 %297
      %299 = vrot.lane.b32.xlu0 %v266, 8
      %v300 = vpop.permute.xlu0 %299
      %305 = vrot.lane.b32.xlu0 %v269, 16
      %v306 = vpop.permute.xlu0 %305
      %307 = vrot.lane.b32.xlu0 %v270, 16
      %v308 = vpop.permute.xlu0 %307
      %313 = vrot.lane.b32.xlu0 %v273, 24
      %v314 = vpop.permute.xlu0 %313
      %315 = vrot.lane.b32.xlu0 %v274, 24
      %v316 = vpop.permute.xlu0 %315
      %321 = vrot.lane.b32.xlu0 %v277, 32
      %v322 = vpop.permute.xlu0 %321
      %323 = vrot.lane.b32.xlu0 %v278, 32
      %v324 = vpop.permute.xlu0 %323
      %329 = vrot.lane.b32.xlu0 %v281, 40
      %v330 = vpop.permute.xlu0 %329
      %331 = vrot.lane.b32.xlu0 %v282, 40
      %v332 = vpop.permute.xlu0 %331
      %337 = vrot.lane.b32.xlu0 %v285, 48
      %v338 = vpop.permute.xlu0 %337
      %339 = vrot.lane.b32.xlu0 %v286, 48
      %v340 = vpop.permute.xlu0 %339
      %345 = vrot.lane.b32.xlu0 %v289, 56
      %v346 = vpop.permute.xlu0 %345
      %347 = vrot.lane.b32.xlu0 %v290, 56
      %v348 = vpop.permute.xlu0 %347
      %353 = vrot.lane.b32.xlu0 %v293, 64
      %v354 = vpop.permute.xlu0 %353
      %355 = vrot.lane.b32.xlu0 %v294, 64
      %v356 = vpop.permute.xlu0 %355
      %vm359 = vcmask 64512
      %v360 = vsel %vm359, %v261, %v298
      %v361 = vsel %vm359, %v262, %v300
      %vm362 = vcmask 130048
      %v363 = vsel %vm362, %v360, %v306
      %v364 = vsel %vm362, %v361, %v308
      %vm365 = vcmask 195584
      %v366 = vsel %vm365, %v363, %v314
      %v367 = vsel %vm365, %v364, %v316
      %vm368 = vcmask 261120
      %v369 = vsel %vm368, %v366, %v322
      %v370 = vsel %vm368, %v367, %v324
      %vm371 = vcmask 326656
      %v372 = vsel %vm371, %v369, %v330
      %v373 = vsel %vm371, %v370, %v332
      %vm374 = vcmask 392192
      %v375 = vsel %vm374, %v372, %v338
      %v376 = vsel %vm374, %v373, %v340
      %vm377 = vcmask 457728
      %v378 = vsel %vm377, %v375, %v346
      %v379 = vsel %vm377, %v376, %v348
      %vm380 = vcmask 523264
      %v381 = vsel %vm380, %v378, %v354
      %v382 = vsel %vm380, %v379, %v356
      %s383 = sadd.s32 %s259, 54
      %s384 = scalar_lea.vmem %s236, %s383
      %v385 = vld [vmem:[%s384] sm:$0xff]
      %v386 = vld [vmem:[%s384 + $0x8] sm:$0xff]
      %s387 = sadd.s32 %s259, 55
      %s388 = scalar_lea.vmem %s236, %s387
      %v389 = vld [vmem:[%s388] sm:$0xff]
      %v390 = vld [vmem:[%s388 + $0x8] sm:$0xff]
      %s391 = sadd.s32 %s259, 56
      %s392 = scalar_lea.vmem %s236, %s391
      %v393 = vld [vmem:[%s392] sm:$0xff]
      %v394 = vld [vmem:[%s392 + $0x8] sm:$0xff]
      %395 = vrot.lane.b32.xlu0 %v277, 8
      %v396 = vpop.permute.xlu0 %395
      %397 = vrot.lane.b32.xlu0 %v278, 8
      %v398 = vpop.permute.xlu0 %397
      %401 = vrot.lane.b32.xlu0 %v281, 16
      %v402 = vpop.permute.xlu0 %401
      %403 = vrot.lane.b32.xlu0 %v282, 16
      %v404 = vpop.permute.xlu0 %403
      %407 = vrot.lane.b32.xlu0 %v285, 24
      %v408 = vpop.permute.xlu0 %407
      %409 = vrot.lane.b32.xlu0 %v286, 24
      %v410 = vpop.permute.xlu0 %409
      %413 = vrot.lane.b32.xlu0 %v289, 32
      %v414 = vpop.permute.xlu0 %413
      %415 = vrot.lane.b32.xlu0 %v290, 32
      %v416 = vpop.permute.xlu0 %415
      %419 = vrot.lane.b32.xlu0 %v293, 40
      %v420 = vpop.permute.xlu0 %419
      %421 = vrot.lane.b32.xlu0 %v294, 40
      %v422 = vpop.permute.xlu0 %421
      %427 = vrot.lane.b32.xlu0 %v385, 48
      %v428 = vpop.permute.xlu0 %427
      %429 = vrot.lane.b32.xlu0 %v386, 48
      %v430 = vpop.permute.xlu0 %429
      %435 = vrot.lane.b32.xlu0 %v389, 56
      %v436 = vpop.permute.xlu0 %435
      %437 = vrot.lane.b32.xlu0 %v390, 56
      %v438 = vpop.permute.xlu0 %437
      %443 = vrot.lane.b32.xlu0 %v393, 64
      %v444 = vpop.permute.xlu0 %443
      %445 = vrot.lane.b32.xlu0 %v394, 64
      %v446 = vpop.permute.xlu0 %445
      %v449 = vsel %vm359, %v273, %v396
      %v450 = vsel %vm359, %v274, %v398
      %v451 = vsel %vm362, %v449, %v402
      %v452 = vsel %vm362, %v450, %v404
      %v453 = vsel %vm365, %v451, %v408
      %v454 = vsel %vm365, %v452, %v410
      %v455 = vsel %vm368, %v453, %v414
      %v456 = vsel %vm368, %v454, %v416
      %v457 = vsel %vm371, %v455, %v420
      %v458 = vsel %vm371, %v456, %v422
      %v459 = vsel %vm374, %v457, %v428
      %v460 = vsel %vm374, %v458, %v430
      %v461 = vsel %vm377, %v459, %v436
      %v462 = vsel %vm377, %v460, %v438
      %v463 = vsel %vm380, %v461, %v444
      %v464 = vsel %vm380, %v462, %v446
      %s465 = sadd.s32 %s259, 72
      %s466 = scalar_lea.vmem %s236, %s465
      %v467 = vld [vmem:[%s466] sm:$0xff]
      %v468 = vld [vmem:[%s466 + $0x8] sm:$0xff]
      %s469 = sadd.s32 %s259, 73
      %s470 = scalar_lea.vmem %s236, %s469
      %v471 = vld [vmem:[%s470] sm:$0xff]
      %v472 = vld [vmem:[%s470 + $0x8] sm:$0xff]
      %s473 = sadd.s32 %s259, 74
      %s474 = scalar_lea.vmem %s236, %s473
      %v475 = vld [vmem:[%s474] sm:$0xff]
      %v476 = vld [vmem:[%s474 + $0x8] sm:$0xff]
      %477 = vrot.lane.b32.xlu0 %v289, 8
      %v478 = vpop.permute.xlu0 %477
      %479 = vrot.lane.b32.xlu0 %v290, 8
      %v480 = vpop.permute.xlu0 %479
      %483 = vrot.lane.b32.xlu0 %v293, 16
      %v484 = vpop.permute.xlu0 %483
      %485 = vrot.lane.b32.xlu0 %v294, 16
      %v486 = vpop.permute.xlu0 %485
      %489 = vrot.lane.b32.xlu0 %v385, 24
      %v490 = vpop.permute.xlu0 %489
      %491 = vrot.lane.b32.xlu0 %v386, 24
      %v492 = vpop.permute.xlu0 %491
      %495 = vrot.lane.b32.xlu0 %v389, 32
      %v496 = vpop.permute.xlu0 %495
      %497 = vrot.lane.b32.xlu0 %v390, 32
      %v498 = vpop.permute.xlu0 %497
      %501 = vrot.lane.b32.xlu0 %v393, 40
      %v502 = vpop.permute.xlu0 %501
      %503 = vrot.lane.b32.xlu0 %v394, 40
      %v504 = vpop.permute.xlu0 %503
      %509 = vrot.lane.b32.xlu0 %v467, 48
      %v510 = vpop.permute.xlu0 %509
      %511 = vrot.lane.b32.xlu0 %v468, 48
      %v512 = vpop.permute.xlu0 %511
      %517 = vrot.lane.b32.xlu0 %v471, 56
      %v518 = vpop.permute.xlu0 %517
      %519 = vrot.lane.b32.xlu0 %v472, 56
      %v520 = vpop.permute.xlu0 %519
      %525 = vrot.lane.b32.xlu0 %v475, 64
      %v526 = vpop.permute.xlu0 %525
      %527 = vrot.lane.b32.xlu0 %v476, 64
      %v528 = vpop.permute.xlu0 %527
      %v531 = vsel %vm359, %v285, %v478
      %v532 = vsel %vm359, %v286, %v480
      %v533 = vsel %vm362, %v531, %v484
      %v534 = vsel %vm362, %v532, %v486
      %v535 = vsel %vm365, %v533, %v490
      %v536 = vsel %vm365, %v534, %v492
      %v537 = vsel %vm368, %v535, %v496
      %v538 = vsel %vm368, %v536, %v498
      %v539 = vsel %vm371, %v537, %v502
      %v540 = vsel %vm371, %v538, %v504
      %v541 = vsel %vm374, %v539, %v510
      %v542 = vsel %vm374, %v540, %v512
      %v543 = vsel %vm377, %v541, %v518
      %v544 = vsel %vm377, %v542, %v520
      %v545 = vsel %vm380, %v543, %v526
      %v546 = vsel %vm380, %v544, %v528
      %s547 = sadd.s32 %s259, 90
      %s548 = scalar_lea.vmem %s236, %s547
      %v549 = vld [vmem:[%s548] sm:$0xff]
      %v550 = vld [vmem:[%s548 + $0x8] sm:$0xff]
      %s551 = sadd.s32 %s259, 91
      %s552 = scalar_lea.vmem %s236, %s551
      %v553 = vld [vmem:[%s552] sm:$0xff]
      %v554 = vld [vmem:[%s552 + $0x8] sm:$0xff]
      %s555 = sadd.s32 %s259, 92
      %s556 = scalar_lea.vmem %s236, %s555
      %v557 = vld [vmem:[%s556] sm:$0xff]
      %v558 = vld [vmem:[%s556 + $0x8] sm:$0xff]
      %559 = vrot.lane.b32.xlu0 %v389, 8
      %v560 = vpop.permute.xlu0 %559
      %561 = vrot.lane.b32.xlu0 %v390, 8
      %v562 = vpop.permute.xlu0 %561
      %565 = vrot.lane.b32.xlu0 %v393, 16
      %v566 = vpop.permute.xlu0 %565
      %567 = vrot.lane.b32.xlu0 %v394, 16
      %v568 = vpop.permute.xlu0 %567
      %571 = vrot.lane.b32.xlu0 %v467, 24
      %v572 = vpop.permute.xlu0 %571
      %573 = vrot.lane.b32.xlu0 %v468, 24
      %v574 = vpop.permute.xlu0 %573
      %577 = vrot.lane.b32.xlu0 %v471, 32
      %v578 = vpop.permute.xlu0 %577
      %579 = vrot.lane.b32.xlu0 %v472, 32
      %v580 = vpop.permute.xlu0 %579
      %583 = vrot.lane.b32.xlu0 %v475, 40
      %v584 = vpop.permute.xlu0 %583
      %585 = vrot.lane.b32.xlu0 %v476, 40
      %v586 = vpop.permute.xlu0 %585
      %591 = vrot.lane.b32.xlu0 %v549, 48
      %v592 = vpop.permute.xlu0 %591
      %593 = vrot.lane.b32.xlu0 %v550, 48
      %v594 = vpop.permute.xlu0 %593
      %599 = vrot.lane.b32.xlu0 %v553, 56
      %v600 = vpop.permute.xlu0 %599
      %601 = vrot.lane.b32.xlu0 %v554, 56
      %v602 = vpop.permute.xlu0 %601
      %607 = vrot.lane.b32.xlu0 %v557, 64
      %v608 = vpop.permute.xlu0 %607
      %609 = vrot.lane.b32.xlu0 %v558, 64
      %v610 = vpop.permute.xlu0 %609
      %v613 = vsel %vm359, %v385, %v560
      %v614 = vsel %vm359, %v386, %v562
      %v615 = vsel %vm362, %v613, %v566
      %v616 = vsel %vm362, %v614, %v568
      %v617 = vsel %vm365, %v615, %v572
      %v618 = vsel %vm365, %v616, %v574
      %v619 = vsel %vm368, %v617, %v578
      %v620 = vsel %vm368, %v618, %v580
      %v621 = vsel %vm371, %v619, %v584
      %v622 = vsel %vm371, %v620, %v586
      %v623 = vsel %vm374, %v621, %v592
      %v624 = vsel %vm374, %v622, %v594
      %v625 = vsel %vm377, %v623, %v600
      %v626 = vsel %vm377, %v624, %v602
      %v627 = vsel %vm380, %v625, %v608
      %v628 = vsel %vm380, %v626, %v610
      %s629 = sadd.s32 %s259, 108
      %s630 = scalar_lea.vmem %s236, %s629
      %v631 = vld [vmem:[%s630] sm:$0xff]
      %v632 = vld [vmem:[%s630 + $0x8] sm:$0xff]
      %s633 = sadd.s32 %s259, 109
      %s634 = scalar_lea.vmem %s236, %s633
      %v635 = vld [vmem:[%s634] sm:$0xff]
      %v636 = vld [vmem:[%s634 + $0x8] sm:$0xff]
      %s637 = sadd.s32 %s259, 110
      %s638 = scalar_lea.vmem %s236, %s637
      %v639 = vld [vmem:[%s638] sm:$0xff]
      %v640 = vld [vmem:[%s638 + $0x8] sm:$0xff]
      %641 = vrot.lane.b32.xlu0 %v471, 8
      %v642 = vpop.permute.xlu0 %641
      %643 = vrot.lane.b32.xlu0 %v472, 8
      %v644 = vpop.permute.xlu0 %643
      %647 = vrot.lane.b32.xlu0 %v475, 16
      %v648 = vpop.permute.xlu0 %647
      %649 = vrot.lane.b32.xlu0 %v476, 16
      %v650 = vpop.permute.xlu0 %649
      %653 = vrot.lane.b32.xlu0 %v549, 24
      %v654 = vpop.permute.xlu0 %653
      %655 = vrot.lane.b32.xlu0 %v550, 24
      %v656 = vpop.permute.xlu0 %655
      %659 = vrot.lane.b32.xlu0 %v553, 32
      %v660 = vpop.permute.xlu0 %659
      %661 = vrot.lane.b32.xlu0 %v554, 32
      %v662 = vpop.permute.xlu0 %661
      %665 = vrot.lane.b32.xlu0 %v557, 40
      %v666 = vpop.permute.xlu0 %665
      %667 = vrot.lane.b32.xlu0 %v558, 40
      %v668 = vpop.permute.xlu0 %667
      %673 = vrot.lane.b32.xlu0 %v631, 48
      %v674 = vpop.permute.xlu0 %673
      %675 = vrot.lane.b32.xlu0 %v632, 48
      %v676 = vpop.permute.xlu0 %675
      %681 = vrot.lane.b32.xlu0 %v635, 56
      %v682 = vpop.permute.xlu0 %681
      %683 = vrot.lane.b32.xlu0 %v636, 56
      %v684 = vpop.permute.xlu0 %683
      %689 = vrot.lane.b32.xlu0 %v639, 64
      %v690 = vpop.permute.xlu0 %689
      %691 = vrot.lane.b32.xlu0 %v640, 64
      %v692 = vpop.permute.xlu0 %691
      %v695 = vsel %vm359, %v467, %v642
      %v696 = vsel %vm359, %v468, %v644
      %v697 = vsel %vm362, %v695, %v648
      %v698 = vsel %vm362, %v696, %v650
      %v699 = vsel %vm365, %v697, %v654
      %v700 = vsel %vm365, %v698, %v656
      %v701 = vsel %vm368, %v699, %v660
      %v702 = vsel %vm368, %v700, %v662
      %v703 = vsel %vm371, %v701, %v666
      %v704 = vsel %vm371, %v702, %v668
      %v705 = vsel %vm374, %v703, %v674
      %v706 = vsel %vm374, %v704, %v676
      %v707 = vsel %vm377, %v705, %v682
      %v708 = vsel %vm377, %v706, %v684
      %v709 = vsel %vm380, %v707, %v690
      %v710 = vsel %vm380, %v708, %v692
      %s711 = sadd.s32 %s259, 126
      %s712 = scalar_lea.vmem %s236, %s711
      %v713 = vld [vmem:[%s712] sm:$0xff]
      %v714 = vld [vmem:[%s712 + $0x8] sm:$0xff]
      %s715 = sadd.s32 %s259, 127
      %s716 = scalar_lea.vmem %s236, %s715
      %v717 = vld [vmem:[%s716] sm:$0xff]
      %v718 = vld [vmem:[%s716 + $0x8] sm:$0xff]
      %s719 = sadd.s32 %s259, 128
      %s720 = scalar_lea.vmem %s236, %s719
      %v721 = vld [vmem:[%s720] sm:$0xff]
      %v722 = vld [vmem:[%s720 + $0x8] sm:$0xff]
      %723 = vrot.lane.b32.xlu0 %v553, 8
      %v724 = vpop.permute.xlu0 %723
      %725 = vrot.lane.b32.xlu0 %v554, 8
      %v726 = vpop.permute.xlu0 %725
      %729 = vrot.lane.b32.xlu0 %v557, 16
      %v730 = vpop.permute.xlu0 %729
      %731 = vrot.lane.b32.xlu0 %v558, 16
      %v732 = vpop.permute.xlu0 %731
      %735 = vrot.lane.b32.xlu0 %v631, 24
      %v736 = vpop.permute.xlu0 %735
      %737 = vrot.lane.b32.xlu0 %v632, 24
      %v738 = vpop.permute.xlu0 %737
      %741 = vrot.lane.b32.xlu0 %v635, 32
      %v742 = vpop.permute.xlu0 %741
      %743 = vrot.lane.b32.xlu0 %v636, 32
      %v744 = vpop.permute.xlu0 %743
      %747 = vrot.lane.b32.xlu0 %v639, 40
      %v748 = vpop.permute.xlu0 %747
      %749 = vrot.lane.b32.xlu0 %v640, 40
      %v750 = vpop.permute.xlu0 %749
      %755 = vrot.lane.b32.xlu0 %v713, 48
      %v756 = vpop.permute.xlu0 %755
      %757 = vrot.lane.b32.xlu0 %v714, 48
      %v758 = vpop.permute.xlu0 %757
      %763 = vrot.lane.b32.xlu0 %v717, 56
      %v764 = vpop.permute.xlu0 %763
      %765 = vrot.lane.b32.xlu0 %v718, 56
      %v766 = vpop.permute.xlu0 %765
      %771 = vrot.lane.b32.xlu0 %v721, 64
      %v772 = vpop.permute.xlu0 %771
      %773 = vrot.lane.b32.xlu0 %v722, 64
      %v774 = vpop.permute.xlu0 %773
      %v777 = vsel %vm359, %v549, %v724
      %v778 = vsel %vm359, %v550, %v726
      %v779 = vsel %vm362, %v777, %v730
      %v780 = vsel %vm362, %v778, %v732
      %v781 = vsel %vm365, %v779, %v736
      %v782 = vsel %vm365, %v780, %v738
      %v783 = vsel %vm368, %v781, %v742
      %v784 = vsel %vm368, %v782, %v744
      %v785 = vsel %vm371, %v783, %v748
      %v786 = vsel %vm371, %v784, %v750
      %v787 = vsel %vm374, %v785, %v756
      %v788 = vsel %vm374, %v786, %v758
      %v789 = vsel %vm377, %v787, %v764
      %v790 = vsel %vm377, %v788, %v766
      %v791 = vsel %vm380, %v789, %v772
      %v792 = vsel %vm380, %v790, %v774
      %s793 = sadd.s32 %s259, 144
      %s794 = scalar_lea.vmem %s236, %s793
      %v795 = vld [vmem:[%s794] sm:$0xff]
      %v796 = vld [vmem:[%s794 + $0x8] sm:$0xff]
      %s797 = sadd.s32 %s259, 145
      %s798 = scalar_lea.vmem %s236, %s797
      %v799 = vld [vmem:[%s798] sm:$0xff]
      %v800 = vld [vmem:[%s798 + $0x8] sm:$0xff]
      %s801 = sadd.s32 %s259, 146
      %s802 = scalar_lea.vmem %s236, %s801
      %v803 = vld [vmem:[%s802] sm:$0xff]
      %v804 = vld [vmem:[%s802 + $0x8] sm:$0xff]
      %805 = vrot.lane.b32.xlu0 %v635, 8
      %v806 = vpop.permute.xlu0 %805
      %807 = vrot.lane.b32.xlu0 %v636, 8
      %v808 = vpop.permute.xlu0 %807
      %811 = vrot.lane.b32.xlu0 %v639, 16
      %v812 = vpop.permute.xlu0 %811
      %813 = vrot.lane.b32.xlu0 %v640, 16
      %v814 = vpop.permute.xlu0 %813
      %817 = vrot.lane.b32.xlu0 %v713, 24
      %v818 = vpop.permute.xlu0 %817
      %819 = vrot.lane.b32.xlu0 %v714, 24
      %v820 = vpop.permute.xlu0 %819
      %823 = vrot.lane.b32.xlu0 %v717, 32
      %v824 = vpop.permute.xlu0 %823
      %825 = vrot.lane.b32.xlu0 %v718, 32
      %v826 = vpop.permute.xlu0 %825
      %829 = vrot.lane.b32.xlu0 %v721, 40
      %v830 = vpop.permute.xlu0 %829
      %831 = vrot.lane.b32.xlu0 %v722, 40
      %v832 = vpop.permute.xlu0 %831
      %837 = vrot.lane.b32.xlu0 %v795, 48
      %v838 = vpop.permute.xlu0 %837
      %839 = vrot.lane.b32.xlu0 %v796, 48
      %v840 = vpop.permute.xlu0 %839
      %845 = vrot.lane.b32.xlu0 %v799, 56
      %v846 = vpop.permute.xlu0 %845
      %847 = vrot.lane.b32.xlu0 %v800, 56
      %v848 = vpop.permute.xlu0 %847
      %853 = vrot.lane.b32.xlu0 %v803, 64
      %v854 = vpop.permute.xlu0 %853
      %855 = vrot.lane.b32.xlu0 %v804, 64
      %v856 = vpop.permute.xlu0 %855
      %v859 = vsel %vm359, %v631, %v806
      %v860 = vsel %vm359, %v632, %v808
      %v861 = vsel %vm362, %v859, %v812
      %v862 = vsel %vm362, %v860, %v814
      %v863 = vsel %vm365, %v861, %v818
      %v864 = vsel %vm365, %v862, %v820
      %v865 = vsel %vm368, %v863, %v824
      %v866 = vsel %vm368, %v864, %v826
      %v867 = vsel %vm371, %v865, %v830
      %v868 = vsel %vm371, %v866, %v832
      %v869 = vsel %vm374, %v867, %v838
      %v870 = vsel %vm374, %v868, %v840
      %v871 = vsel %vm377, %v869, %v846
      %v872 = vsel %vm377, %v870, %v848
      %v873 = vsel %vm380, %v871, %v854
      %v874 = vsel %vm380, %v872, %v856
      %s875 = sadd.s32 %s259, 162
      %s876 = scalar_lea.vmem %s236, %s875
      %v877 = vld [vmem:[%s876] sm:$0xff]
      %v878 = vld [vmem:[%s876 + $0x8] sm:$0xff]
      %s879 = sadd.s32 %s259, 163
      %s880 = scalar_lea.vmem %s236, %s879
      %v881 = vld [vmem:[%s880] sm:$0xff]
      %v882 = vld [vmem:[%s880 + $0x8] sm:$0xff]
      %s883 = sadd.s32 %s259, 164
      %s884 = scalar_lea.vmem %s236, %s883
      %v885 = vld [vmem:[%s884] sm:$0xff]
      %v886 = vld [vmem:[%s884 + $0x8] sm:$0xff]
      %887 = vrot.lane.b32.xlu0 %v717, 8
      %v888 = vpop.permute.xlu0 %887
      %889 = vrot.lane.b32.xlu0 %v718, 8
      %v890 = vpop.permute.xlu0 %889
      %893 = vrot.lane.b32.xlu0 %v721, 16
      %v894 = vpop.permute.xlu0 %893
      %895 = vrot.lane.b32.xlu0 %v722, 16
      %v896 = vpop.permute.xlu0 %895
      %899 = vrot.lane.b32.xlu0 %v795, 24
      %v900 = vpop.permute.xlu0 %899
      %901 = vrot.lane.b32.xlu0 %v796, 24
      %v902 = vpop.permute.xlu0 %901
      %905 = vrot.lane.b32.xlu0 %v799, 32
      %v906 = vpop.permute.xlu0 %905
      %907 = vrot.lane.b32.xlu0 %v800, 32
      %v908 = vpop.permute.xlu0 %907
      %911 = vrot.lane.b32.xlu0 %v803, 40
      %v912 = vpop.permute.xlu0 %911
      %913 = vrot.lane.b32.xlu0 %v804, 40
      %v914 = vpop.permute.xlu0 %913
      %919 = vrot.lane.b32.xlu0 %v877, 48
      %v920 = vpop.permute.xlu0 %919
      %921 = vrot.lane.b32.xlu0 %v878, 48
      %v922 = vpop.permute.xlu0 %921
      %927 = vrot.lane.b32.xlu0 %v881, 56
      %v928 = vpop.permute.xlu0 %927
      %929 = vrot.lane.b32.xlu0 %v882, 56
      %v930 = vpop.permute.xlu0 %929
      %935 = vrot.lane.b32.xlu0 %v885, 64
      %v936 = vpop.permute.xlu0 %935
      %937 = vrot.lane.b32.xlu0 %v886, 64
      %v938 = vpop.permute.xlu0 %937
      %v941 = vsel %vm359, %v713, %v888
      %v942 = vsel %vm359, %v714, %v890
      %v943 = vsel %vm362, %v941, %v894
      %v944 = vsel %vm362, %v942, %v896
      %v945 = vsel %vm365, %v943, %v900
      %v946 = vsel %vm365, %v944, %v902
      %v947 = vsel %vm368, %v945, %v906
      %v948 = vsel %vm368, %v946, %v908
      %v949 = vsel %vm371, %v947, %v912
      %v950 = vsel %vm371, %v948, %v914
      %v951 = vsel %vm374, %v949, %v920
      %v952 = vsel %vm374, %v950, %v922
      %v953 = vsel %vm377, %v951, %v928
      %v954 = vsel %vm377, %v952, %v930
      %v955 = vsel %vm380, %v953, %v936
      %v956 = vsel %vm380, %v954, %v938
      %s957 = sadd.s32 %s259, 180
      %s958 = scalar_lea.vmem %s236, %s957
      %v959 = vld [vmem:[%s958] sm:$0xff]
      %v960 = vld [vmem:[%s958 + $0x8] sm:$0xff]
      %s961 = sadd.s32 %s259, 181
      %s962 = scalar_lea.vmem %s236, %s961
      %v963 = vld [vmem:[%s962] sm:$0xff]
      %v964 = vld [vmem:[%s962 + $0x8] sm:$0xff]
      %s965 = sadd.s32 %s259, 182
      %s966 = scalar_lea.vmem %s236, %s965
      %v967 = vld [vmem:[%s966] sm:$0xff]
      %v968 = vld [vmem:[%s966 + $0x8] sm:$0xff]
      %969 = vrot.lane.b32.xlu0 %v799, 8
      %v970 = vpop.permute.xlu0 %969
      %971 = vrot.lane.b32.xlu0 %v800, 8
      %v972 = vpop.permute.xlu0 %971
      %975 = vrot.lane.b32.xlu0 %v803, 16
      %v976 = vpop.permute.xlu0 %975
      %977 = vrot.lane.b32.xlu0 %v804, 16
      %v978 = vpop.permute.xlu0 %977
      %981 = vrot.lane.b32.xlu0 %v877, 24
      %v982 = vpop.permute.xlu0 %981
      %983 = vrot.lane.b32.xlu0 %v878, 24
      %v984 = vpop.permute.xlu0 %983
      %987 = vrot.lane.b32.xlu0 %v881, 32
      %v988 = vpop.permute.xlu0 %987
      %989 = vrot.lane.b32.xlu0 %v882, 32
      %v990 = vpop.permute.xlu0 %989
      %993 = vrot.lane.b32.xlu0 %v885, 40
      %v994 = vpop.permute.xlu0 %993
      %995 = vrot.lane.b32.xlu0 %v886, 40
      %v996 = vpop.permute.xlu0 %995
      %1001 = vrot.lane.b32.xlu0 %v959, 48
      %v1002 = vpop.permute.xlu0 %1001
      %1003 = vrot.lane.b32.xlu0 %v960, 48
      %v1004 = vpop.permute.xlu0 %1003
      %1009 = vrot.lane.b32.xlu0 %v963, 56
      %v1010 = vpop.permute.xlu0 %1009
      %1011 = vrot.lane.b32.xlu0 %v964, 56
      %v1012 = vpop.permute.xlu0 %1011
      %1017 = vrot.lane.b32.xlu0 %v967, 64
      %v1018 = vpop.permute.xlu0 %1017
      %1019 = vrot.lane.b32.xlu0 %v968, 64
      %v1020 = vpop.permute.xlu0 %1019
      %v1023 = vsel %vm359, %v795, %v970
      %v1024 = vsel %vm359, %v796, %v972
      %v1025 = vsel %vm362, %v1023, %v976
      %v1026 = vsel %vm362, %v1024, %v978
      %v1027 = vsel %vm365, %v1025, %v982
      %v1028 = vsel %vm365, %v1026, %v984
      %v1029 = vsel %vm368, %v1027, %v988
      %v1030 = vsel %vm368, %v1028, %v990
      %v1031 = vsel %vm371, %v1029, %v994
      %v1032 = vsel %vm371, %v1030, %v996
      %v1033 = vsel %vm374, %v1031, %v1002
      %v1034 = vsel %vm374, %v1032, %v1004
      %v1035 = vsel %vm377, %v1033, %v1010
      %v1036 = vsel %vm377, %v1034, %v1012
      %v1037 = vsel %vm380, %v1035, %v1018
      %v1038 = vsel %vm380, %v1036, %v1020
      %s1039 = sadd.s32 %s259, 198
      %s1040 = scalar_lea.vmem %s236, %s1039
      %v1041 = vld [vmem:[%s1040] sm:$0xff]
      %v1042 = vld [vmem:[%s1040 + $0x8] sm:$0xff]
      %s1043 = sadd.s32 %s259, 199
      %s1044 = scalar_lea.vmem %s236, %s1043
      %v1045 = vld [vmem:[%s1044] sm:$0xff]
      %v1046 = vld [vmem:[%s1044 + $0x8] sm:$0xff]
      %s1047 = sadd.s32 %s259, 200
      %s1048 = scalar_lea.vmem %s236, %s1047
      %v1049 = vld [vmem:[%s1048] sm:$0xff]
      %v1050 = vld [vmem:[%s1048 + $0x8] sm:$0xff]
      %1051 = vrot.lane.b32.xlu0 %v881, 8
      %v1052 = vpop.permute.xlu0 %1051
      %1053 = vrot.lane.b32.xlu0 %v882, 8
      %v1054 = vpop.permute.xlu0 %1053
      %1057 = vrot.lane.b32.xlu0 %v885, 16
      %v1058 = vpop.permute.xlu0 %1057
      %1059 = vrot.lane.b32.xlu0 %v886, 16
      %v1060 = vpop.permute.xlu0 %1059
      %1063 = vrot.lane.b32.xlu0 %v959, 24
      %v1064 = vpop.permute.xlu0 %1063
      %1065 = vrot.lane.b32.xlu0 %v960, 24
      %v1066 = vpop.permute.xlu0 %1065
      %1069 = vrot.lane.b32.xlu0 %v963, 32
      %v1070 = vpop.permute.xlu0 %1069
      %1071 = vrot.lane.b32.xlu0 %v964, 32
      %v1072 = vpop.permute.xlu0 %1071
      %1075 = vrot.lane.b32.xlu0 %v967, 40
      %v1076 = vpop.permute.xlu0 %1075
      %1077 = vrot.lane.b32.xlu0 %v968, 40
      %v1078 = vpop.permute.xlu0 %1077
      %1083 = vrot.lane.b32.xlu0 %v1041, 48
      %v1084 = vpop.permute.xlu0 %1083
      %1085 = vrot.lane.b32.xlu0 %v1042, 48
      %v1086 = vpop.permute.xlu0 %1085
      %1091 = vrot.lane.b32.xlu0 %v1045, 56
      %v1092 = vpop.permute.xlu0 %1091
      %1093 = vrot.lane.b32.xlu0 %v1046, 56
      %v1094 = vpop.permute.xlu0 %1093
      %1099 = vrot.lane.b32.xlu0 %v1049, 64
      %v1100 = vpop.permute.xlu0 %1099
      %1101 = vrot.lane.b32.xlu0 %v1050, 64
      %v1102 = vpop.permute.xlu0 %1101
      %v1105 = vsel %vm359, %v877, %v1052
      %v1106 = vsel %vm359, %v878, %v1054
      %v1107 = vsel %vm362, %v1105, %v1058
      %v1108 = vsel %vm362, %v1106, %v1060
      %v1109 = vsel %vm365, %v1107, %v1064
      %v1110 = vsel %vm365, %v1108, %v1066
      %v1111 = vsel %vm368, %v1109, %v1070
      %v1112 = vsel %vm368, %v1110, %v1072
      %v1113 = vsel %vm371, %v1111, %v1076
      %v1114 = vsel %vm371, %v1112, %v1078
      %v1115 = vsel %vm374, %v1113, %v1084
      %v1116 = vsel %vm374, %v1114, %v1086
      %v1117 = vsel %vm377, %v1115, %v1092
      %v1118 = vsel %vm377, %v1116, %v1094
      %v1119 = vsel %vm380, %v1117, %v1100
      %v1120 = vsel %vm380, %v1118, %v1102
      %s1121 = sadd.s32 %s259, 216
      %s1122 = scalar_lea.vmem %s236, %s1121
      %v1123 = vld [vmem:[%s1122] sm:$0xff]
      %v1124 = vld [vmem:[%s1122 + $0x8] sm:$0xff]
      %s1125 = sadd.s32 %s259, 217
      %s1126 = scalar_lea.vmem %s236, %s1125
      %v1127 = vld [vmem:[%s1126] sm:$0xff]
      %v1128 = vld [vmem:[%s1126 + $0x8] sm:$0xff]
      %s1129 = sadd.s32 %s259, 218
      %s1130 = scalar_lea.vmem %s236, %s1129
      %v1131 = vld [vmem:[%s1130] sm:$0xff]
      %v1132 = vld [vmem:[%s1130 + $0x8] sm:$0xff]
      %1133 = vrot.lane.b32.xlu0 %v963, 8
      %v1134 = vpop.permute.xlu0 %1133
      %1135 = vrot.lane.b32.xlu0 %v964, 8
      %v1136 = vpop.permute.xlu0 %1135
      %1139 = vrot.lane.b32.xlu0 %v967, 16
      %v1140 = vpop.permute.xlu0 %1139
      %1141 = vrot.lane.b32.xlu0 %v968, 16
      %v1142 = vpop.permute.xlu0 %1141
      %1145 = vrot.lane.b32.xlu0 %v1041, 24
      %v1146 = vpop.permute.xlu0 %1145
      %1147 = vrot.lane.b32.xlu0 %v1042, 24
      %v1148 = vpop.permute.xlu0 %1147
      %1151 = vrot.lane.b32.xlu0 %v1045, 32
      %v1152 = vpop.permute.xlu0 %1151
      %1153 = vrot.lane.b32.xlu0 %v1046, 32
      %v1154 = vpop.permute.xlu0 %1153
      %1157 = vrot.lane.b32.xlu0 %v1049, 40
      %v1158 = vpop.permute.xlu0 %1157
      %1159 = vrot.lane.b32.xlu0 %v1050, 40
      %v1160 = vpop.permute.xlu0 %1159
      %1165 = vrot.lane.b32.xlu0 %v1123, 48
      %v1166 = vpop.permute.xlu0 %1165
      %1167 = vrot.lane.b32.xlu0 %v1124, 48
      %v1168 = vpop.permute.xlu0 %1167
      %1173 = vrot.lane.b32.xlu0 %v1127, 56
      %v1174 = vpop.permute.xlu0 %1173
      %1175 = vrot.lane.b32.xlu0 %v1128, 56
      %v1176 = vpop.permute.xlu0 %1175
      %1181 = vrot.lane.b32.xlu0 %v1131, 64
      %v1182 = vpop.permute.xlu0 %1181
      %1183 = vrot.lane.b32.xlu0 %v1132, 64
      %v1184 = vpop.permute.xlu0 %1183
      %v1187 = vsel %vm359, %v959, %v1134
      %v1188 = vsel %vm359, %v960, %v1136
      %v1189 = vsel %vm362, %v1187, %v1140
      %v1190 = vsel %vm362, %v1188, %v1142
      %v1191 = vsel %vm365, %v1189, %v1146
      %v1192 = vsel %vm365, %v1190, %v1148
      %v1193 = vsel %vm368, %v1191, %v1152
      %v1194 = vsel %vm368, %v1192, %v1154
      %v1195 = vsel %vm371, %v1193, %v1158
      %v1196 = vsel %vm371, %v1194, %v1160
      %v1197 = vsel %vm374, %v1195, %v1166
      %v1198 = vsel %vm374, %v1196, %v1168
      %v1199 = vsel %vm377, %v1197, %v1174
      %v1200 = vsel %vm377, %v1198, %v1176
      %v1201 = vsel %vm380, %v1199, %v1182
      %v1202 = vsel %vm380, %v1200, %v1184
      %s1203 = sadd.s32 %s259, 234
      %s1204 = scalar_lea.vmem %s236, %s1203
      %v1205 = vld [vmem:[%s1204] sm:$0xff]
      %v1206 = vld [vmem:[%s1204 + $0x8] sm:$0xff]
      %s1207 = sadd.s32 %s259, 235
      %s1208 = scalar_lea.vmem %s236, %s1207
      %v1209 = vld [vmem:[%s1208] sm:$0xff]
      %v1210 = vld [vmem:[%s1208 + $0x8] sm:$0xff]
      %s1211 = sadd.s32 %s259, 236
      %s1212 = scalar_lea.vmem %s236, %s1211
      %v1213 = vld [vmem:[%s1212] sm:$0xff]
      %v1214 = vld [vmem:[%s1212 + $0x8] sm:$0xff]
      %1215 = vrot.lane.b32.xlu0 %v1045, 8
      %v1216 = vpop.permute.xlu0 %1215
      %1217 = vrot.lane.b32.xlu0 %v1046, 8
      %v1218 = vpop.permute.xlu0 %1217
      %1221 = vrot.lane.b32.xlu0 %v1049, 16
      %v1222 = vpop.permute.xlu0 %1221
      %1223 = vrot.lane.b32.xlu0 %v1050, 16
      %v1224 = vpop.permute.xlu0 %1223
      %1227 = vrot.lane.b32.xlu0 %v1123, 24
      %v1228 = vpop.permute.xlu0 %1227
      %1229 = vrot.lane.b32.xlu0 %v1124, 24
      %v1230 = vpop.permute.xlu0 %1229
      %1233 = vrot.lane.b32.xlu0 %v1127, 32
      %v1234 = vpop.permute.xlu0 %1233
      %1235 = vrot.lane.b32.xlu0 %v1128, 32
      %v1236 = vpop.permute.xlu0 %1235
      %1239 = vrot.lane.b32.xlu0 %v1131, 40
      %v1240 = vpop.permute.xlu0 %1239
      %1241 = vrot.lane.b32.xlu0 %v1132, 40
      %v1242 = vpop.permute.xlu0 %1241
      %1247 = vrot.lane.b32.xlu0 %v1205, 48
      %v1248 = vpop.permute.xlu0 %1247
      %1249 = vrot.lane.b32.xlu0 %v1206, 48
      %v1250 = vpop.permute.xlu0 %1249
      %1255 = vrot.lane.b32.xlu0 %v1209, 56
      %v1256 = vpop.permute.xlu0 %1255
      %1257 = vrot.lane.b32.xlu0 %v1210, 56
      %v1258 = vpop.permute.xlu0 %1257
      %1263 = vrot.lane.b32.xlu0 %v1213, 64
      %v1264 = vpop.permute.xlu0 %1263
      %1265 = vrot.lane.b32.xlu0 %v1214, 64
      %v1266 = vpop.permute.xlu0 %1265
      %v1269 = vsel %vm359, %v1041, %v1216
      %v1270 = vsel %vm359, %v1042, %v1218
      %v1271 = vsel %vm362, %v1269, %v1222
      %v1272 = vsel %vm362, %v1270, %v1224
      %v1273 = vsel %vm365, %v1271, %v1228
      %v1274 = vsel %vm365, %v1272, %v1230
      %v1275 = vsel %vm368, %v1273, %v1234
      %v1276 = vsel %vm368, %v1274, %v1236
      %v1277 = vsel %vm371, %v1275, %v1240
      %v1278 = vsel %vm371, %v1276, %v1242
      %v1279 = vsel %vm374, %v1277, %v1248
      %v1280 = vsel %vm374, %v1278, %v1250
      %v1281 = vsel %vm377, %v1279, %v1256
      %v1282 = vsel %vm377, %v1280, %v1258
      %v1283 = vsel %vm380, %v1281, %v1264
      %v1284 = vsel %vm380, %v1282, %v1266
      %s1285 = sadd.s32 %s259, 252
      %s1286 = scalar_lea.vmem %s236, %s1285
      %v1287 = vld [vmem:[%s1286] sm:$0xff]
      %v1288 = vld [vmem:[%s1286 + $0x8] sm:$0xff]
      %s1289 = sadd.s32 %s259, 253
      %s1290 = scalar_lea.vmem %s236, %s1289
      %v1291 = vld [vmem:[%s1290] sm:$0xff]
      %v1292 = vld [vmem:[%s1290 + $0x8] sm:$0xff]
      %s1293 = sadd.s32 %s259, 254
      %s1294 = scalar_lea.vmem %s236, %s1293
      %v1295 = vld [vmem:[%s1294] sm:$0xff]
      %v1296 = vld [vmem:[%s1294 + $0x8] sm:$0xff]
      %1297 = vrot.lane.b32.xlu0 %v1127, 8
      %v1298 = vpop.permute.xlu0 %1297
      %1299 = vrot.lane.b32.xlu0 %v1128, 8
      %v1300 = vpop.permute.xlu0 %1299
      %1303 = vrot.lane.b32.xlu0 %v1131, 16
      %v1304 = vpop.permute.xlu0 %1303
      %1305 = vrot.lane.b32.xlu0 %v1132, 16
      %v1306 = vpop.permute.xlu0 %1305
      %1309 = vrot.lane.b32.xlu0 %v1205, 24
      %v1310 = vpop.permute.xlu0 %1309
      %1311 = vrot.lane.b32.xlu0 %v1206, 24
      %v1312 = vpop.permute.xlu0 %1311
      %1315 = vrot.lane.b32.xlu0 %v1209, 32
      %v1316 = vpop.permute.xlu0 %1315
      %1317 = vrot.lane.b32.xlu0 %v1210, 32
      %v1318 = vpop.permute.xlu0 %1317
      %1321 = vrot.lane.b32.xlu0 %v1213, 40
      %v1322 = vpop.permute.xlu0 %1321
      %1323 = vrot.lane.b32.xlu0 %v1214, 40
      %v1324 = vpop.permute.xlu0 %1323
      %1329 = vrot.lane.b32.xlu0 %v1287, 48
      %v1330 = vpop.permute.xlu0 %1329
      %1331 = vrot.lane.b32.xlu0 %v1288, 48
      %v1332 = vpop.permute.xlu0 %1331
      %1337 = vrot.lane.b32.xlu0 %v1291, 56
      %v1338 = vpop.permute.xlu0 %1337
      %1339 = vrot.lane.b32.xlu0 %v1292, 56
      %v1340 = vpop.permute.xlu0 %1339
      %1345 = vrot.lane.b32.xlu0 %v1295, 64
      %v1346 = vpop.permute.xlu0 %1345
      %1347 = vrot.lane.b32.xlu0 %v1296, 64
      %v1348 = vpop.permute.xlu0 %1347
      %v1351 = vsel %vm359, %v1123, %v1298
      %v1352 = vsel %vm359, %v1124, %v1300
      %v1353 = vsel %vm362, %v1351, %v1304
      %v1354 = vsel %vm362, %v1352, %v1306
      %v1355 = vsel %vm365, %v1353, %v1310
      %v1356 = vsel %vm365, %v1354, %v1312
      %v1357 = vsel %vm368, %v1355, %v1316
      %v1358 = vsel %vm368, %v1356, %v1318
      %v1359 = vsel %vm371, %v1357, %v1322
      %v1360 = vsel %vm371, %v1358, %v1324
      %v1361 = vsel %vm374, %v1359, %v1330
      %v1362 = vsel %vm374, %v1360, %v1332
      %v1363 = vsel %vm377, %v1361, %v1338
      %v1364 = vsel %vm377, %v1362, %v1340
      %v1365 = vsel %vm380, %v1363, %v1346
      %v1366 = vsel %vm380, %v1364, %v1348
      %s1367 = sadd.s32 %s259, 270
      %s1368 = scalar_lea.vmem %s236, %s1367
      %v1369 = vld [vmem:[%s1368] sm:$0xff]
      %v1370 = vld [vmem:[%s1368 + $0x8] sm:$0xff]
      %s1371 = sadd.s32 %s259, 271
      %s1372 = scalar_lea.vmem %s236, %s1371
      %v1373 = vld [vmem:[%s1372] sm:$0xff]
      %v1374 = vld [vmem:[%s1372 + $0x8] sm:$0xff]
      %s1375 = sadd.s32 %s259, 272
      %s1376 = scalar_lea.vmem %s236, %s1375
      %v1377 = vld [vmem:[%s1376] sm:$0xff]
      %v1378 = vld [vmem:[%s1376 + $0x8] sm:$0xff]
      %1379 = vrot.lane.b32.xlu0 %v1209, 8
      %v1380 = vpop.permute.xlu0 %1379
      %1381 = vrot.lane.b32.xlu0 %v1210, 8
      %v1382 = vpop.permute.xlu0 %1381
      %1385 = vrot.lane.b32.xlu0 %v1213, 16
      %v1386 = vpop.permute.xlu0 %1385
      %1387 = vrot.lane.b32.xlu0 %v1214, 16
      %v1388 = vpop.permute.xlu0 %1387
      %1391 = vrot.lane.b32.xlu0 %v1287, 24
      %v1392 = vpop.permute.xlu0 %1391
      %1393 = vrot.lane.b32.xlu0 %v1288, 24
      %v1394 = vpop.permute.xlu0 %1393
      %1397 = vrot.lane.b32.xlu0 %v1291, 32
      %v1398 = vpop.permute.xlu0 %1397
      %1399 = vrot.lane.b32.xlu0 %v1292, 32
      %v1400 = vpop.permute.xlu0 %1399
      %1403 = vrot.lane.b32.xlu0 %v1295, 40
      %v1404 = vpop.permute.xlu0 %1403
      %1405 = vrot.lane.b32.xlu0 %v1296, 40
      %v1406 = vpop.permute.xlu0 %1405
      %1411 = vrot.lane.b32.xlu0 %v1369, 48
      %v1412 = vpop.permute.xlu0 %1411
      %1413 = vrot.lane.b32.xlu0 %v1370, 48
      %v1414 = vpop.permute.xlu0 %1413
      %1419 = vrot.lane.b32.xlu0 %v1373, 56
      %v1420 = vpop.permute.xlu0 %1419
      %1421 = vrot.lane.b32.xlu0 %v1374, 56
      %v1422 = vpop.permute.xlu0 %1421
      %1427 = vrot.lane.b32.xlu0 %v1377, 64
      %v1428 = vpop.permute.xlu0 %1427
      %1429 = vrot.lane.b32.xlu0 %v1378, 64
      %v1430 = vpop.permute.xlu0 %1429
      %v1433 = vsel %vm359, %v1205, %v1380
      %v1434 = vsel %vm359, %v1206, %v1382
      %v1435 = vsel %vm362, %v1433, %v1386
      %v1436 = vsel %vm362, %v1434, %v1388
      %v1437 = vsel %vm365, %v1435, %v1392
      %v1438 = vsel %vm365, %v1436, %v1394
      %v1439 = vsel %vm368, %v1437, %v1398
      %v1440 = vsel %vm368, %v1438, %v1400
      %v1441 = vsel %vm371, %v1439, %v1404
      %v1442 = vsel %vm371, %v1440, %v1406
      %v1443 = vsel %vm374, %v1441, %v1412
      %v1444 = vsel %vm374, %v1442, %v1414
      %v1445 = vsel %vm377, %v1443, %v1420
      %v1446 = vsel %vm377, %v1444, %v1422
      %v1447 = vsel %vm380, %v1445, %v1428
      %v1448 = vsel %vm380, %v1446, %v1430
      %s1449 = sadd.s32 %s259, 288
      %s1450 = scalar_lea.vmem %s236, %s1449
      %v1451 = vld [vmem:[%s1450] sm:$0xff]
      %v1452 = vld [vmem:[%s1450 + $0x8] sm:$0xff]
      %s1453 = sadd.s32 %s259, 289
      %s1454 = scalar_lea.vmem %s236, %s1453
      %v1455 = vld [vmem:[%s1454] sm:$0xff]
      %v1456 = vld [vmem:[%s1454 + $0x8] sm:$0xff]
      %s1457 = sadd.s32 %s259, 290
      %s1458 = scalar_lea.vmem %s236, %s1457
      %v1459 = vld [vmem:[%s1458] sm:$0xff]
      %v1460 = vld [vmem:[%s1458 + $0x8] sm:$0xff]
      %1461 = vrot.lane.b32.xlu0 %v1291, 8
      %v1462 = vpop.permute.xlu0 %1461
      %1463 = vrot.lane.b32.xlu0 %v1292, 8
      %v1464 = vpop.permute.xlu0 %1463
      %1467 = vrot.lane.b32.xlu0 %v1295, 16
      %v1468 = vpop.permute.xlu0 %1467
      %1469 = vrot.lane.b32.xlu0 %v1296, 16
      %v1470 = vpop.permute.xlu0 %1469
      %1473 = vrot.lane.b32.xlu0 %v1369, 24
      %v1474 = vpop.permute.xlu0 %1473
      %1475 = vrot.lane.b32.xlu0 %v1370, 24
      %v1476 = vpop.permute.xlu0 %1475
      %1479 = vrot.lane.b32.xlu0 %v1373, 32
      %v1480 = vpop.permute.xlu0 %1479
      %1481 = vrot.lane.b32.xlu0 %v1374, 32
      %v1482 = vpop.permute.xlu0 %1481
      %1485 = vrot.lane.b32.xlu0 %v1377, 40
      %v1486 = vpop.permute.xlu0 %1485
      %1487 = vrot.lane.b32.xlu0 %v1378, 40
      %v1488 = vpop.permute.xlu0 %1487
      %1493 = vrot.lane.b32.xlu0 %v1451, 48
      %v1494 = vpop.permute.xlu0 %1493
      %1495 = vrot.lane.b32.xlu0 %v1452, 48
      %v1496 = vpop.permute.xlu0 %1495
      %1501 = vrot.lane.b32.xlu0 %v1455, 56
      %v1502 = vpop.permute.xlu0 %1501
      %1503 = vrot.lane.b32.xlu0 %v1456, 56
      %v1504 = vpop.permute.xlu0 %1503
      %1509 = vrot.lane.b32.xlu0 %v1459, 64
      %v1510 = vpop.permute.xlu0 %1509
      %1511 = vrot.lane.b32.xlu0 %v1460, 64
      %v1512 = vpop.permute.xlu0 %1511
      %v1515 = vsel %vm359, %v1287, %v1462
      %v1516 = vsel %vm359, %v1288, %v1464
      %v1517 = vsel %vm362, %v1515, %v1468
      %v1518 = vsel %vm362, %v1516, %v1470
      %v1519 = vsel %vm365, %v1517, %v1474
      %v1520 = vsel %vm365, %v1518, %v1476
      %v1521 = vsel %vm368, %v1519, %v1480
      %v1522 = vsel %vm368, %v1520, %v1482
      %v1523 = vsel %vm371, %v1521, %v1486
      %v1524 = vsel %vm371, %v1522, %v1488
      %v1525 = vsel %vm374, %v1523, %v1494
      %v1526 = vsel %vm374, %v1524, %v1496
      %v1527 = vsel %vm377, %v1525, %v1502
      %v1528 = vsel %vm377, %v1526, %v1504
      %v1529 = vsel %vm380, %v1527, %v1510
      %v1530 = vsel %vm380, %v1528, %v1512
      %s1531 = sadd.s32 %s259, 306
      %s1532 = scalar_lea.vmem %s236, %s1531
      %v1533 = vld [vmem:[%s1532] sm:$0xff]
      %v1534 = vld [vmem:[%s1532 + $0x8] sm:$0xff]
      %s1535 = sadd.s32 %s259, 307
      %s1536 = scalar_lea.vmem %s236, %s1535
      %v1537 = vld [vmem:[%s1536] sm:$0xff]
      %v1538 = vld [vmem:[%s1536 + $0x8] sm:$0xff]
      %s1539 = sadd.s32 %s259, 308
      %s1540 = scalar_lea.vmem %s236, %s1539
      %v1541 = vld [vmem:[%s1540] sm:$0xff]
      %v1542 = vld [vmem:[%s1540 + $0x8] sm:$0xff]
      %1543 = vrot.lane.b32.xlu0 %v1373, 8
      %v1544 = vpop.permute.xlu0 %1543
      %1545 = vrot.lane.b32.xlu0 %v1374, 8
      %v1546 = vpop.permute.xlu0 %1545
      %1549 = vrot.lane.b32.xlu0 %v1377, 16
      %v1550 = vpop.permute.xlu0 %1549
      %1551 = vrot.lane.b32.xlu0 %v1378, 16
      %v1552 = vpop.permute.xlu0 %1551
      %1555 = vrot.lane.b32.xlu0 %v1451, 24
      %v1556 = vpop.permute.xlu0 %1555
      %1557 = vrot.lane.b32.xlu0 %v1452, 24
      %v1558 = vpop.permute.xlu0 %1557
      %1561 = vrot.lane.b32.xlu0 %v1455, 32
      %v1562 = vpop.permute.xlu0 %1561
      %1563 = vrot.lane.b32.xlu0 %v1456, 32
      %v1564 = vpop.permute.xlu0 %1563
      %1567 = vrot.lane.b32.xlu0 %v1459, 40
      %v1568 = vpop.permute.xlu0 %1567
      %1569 = vrot.lane.b32.xlu0 %v1460, 40
      %v1570 = vpop.permute.xlu0 %1569
      %1575 = vrot.lane.b32.xlu0 %v1533, 48
      %v1576 = vpop.permute.xlu0 %1575
      %1577 = vrot.lane.b32.xlu0 %v1534, 48
      %v1578 = vpop.permute.xlu0 %1577
      %1583 = vrot.lane.b32.xlu0 %v1537, 56
      %v1584 = vpop.permute.xlu0 %1583
      %1585 = vrot.lane.b32.xlu0 %v1538, 56
      %v1586 = vpop.permute.xlu0 %1585
      %1591 = vrot.lane.b32.xlu0 %v1541, 64
      %v1592 = vpop.permute.xlu0 %1591
      %1593 = vrot.lane.b32.xlu0 %v1542, 64
      %v1594 = vpop.permute.xlu0 %1593
      %v1597 = vsel %vm359, %v1369, %v1544
      %v1598 = vsel %vm359, %v1370, %v1546
      %v1599 = vsel %vm362, %v1597, %v1550
      %v1600 = vsel %vm362, %v1598, %v1552
      %v1601 = vsel %vm365, %v1599, %v1556
      %v1602 = vsel %vm365, %v1600, %v1558
      %v1603 = vsel %vm368, %v1601, %v1562
      %v1604 = vsel %vm368, %v1602, %v1564
      %v1605 = vsel %vm371, %v1603, %v1568
      %v1606 = vsel %vm371, %v1604, %v1570
      %v1607 = vsel %vm374, %v1605, %v1576
      %v1608 = vsel %vm374, %v1606, %v1578
      %v1609 = vsel %vm377, %v1607, %v1584
      %v1610 = vsel %vm377, %v1608, %v1586
      %v1611 = vsel %vm380, %v1609, %v1592
      %v1612 = vsel %vm380, %v1610, %v1594
      %v1613 = vld [vmem:[%s241] sm:$0xff]
      %v1614 = vld [vmem:[%s241 + $0x8] sm:$0xff]
      %v1615 = vld [vmem:[%s241 + $0x10] sm:$0xff]
      %v1616 = vld [vmem:[%s241 + $0x18] sm:$0xff]
      %v1617 = vld [vmem:[%s241 + $0x20] sm:$0xff]
      %v1618 = vld [vmem:[%s241 + $0x28] sm:$0xff]
      %v1619 = vld [vmem:[%s241 + $0x30] sm:$0xff]
      %v1620 = vld [vmem:[%s241 + $0x38] sm:$0xff]
      %v1621 = vld [vmem:[%s241 + $0x40] sm:$0xff]
      %v1622 = vld [vmem:[%s244] sm:$0x1]
      %v1624 = vlaneseq
      %v1625 = vshrl.u32 %v1624, 7
      %v1626 = vsub.s32 0, %v1625
      %v1627 = vrot.slane %v1622, %v1626
      %vm1629 = vcmask 588800
      %v1631 = vsel %vm1629, %v381, 0
      %v1634 = vsel %vm1629, %v382, 0
      %v1637 = vsel %vm1629, %v463, 0
      %v1640 = vsel %vm1629, %v464, 0
      %v1643 = vsel %vm1629, %v545, 0
      %v1646 = vsel %vm1629, %v546, 0
      %v1649 = vsel %vm1629, %v627, 0
      %v1652 = vsel %vm1629, %v628, 0
      %v1655 = vsel %vm1629, %v709, 0
      %v1658 = vsel %vm1629, %v710, 0
      %v1661 = vsel %vm1629, %v791, 0
      %v1664 = vsel %vm1629, %v792, 0
      %v1667 = vsel %vm1629, %v873, 0
      %v1670 = vsel %vm1629, %v874, 0
      %v1673 = vsel %vm1629, %v955, 0
      %v1676 = vsel %vm1629, %v956, 0
      %v1679 = vsel %vm1629, %v1037, 0
      %v1682 = vsel %vm1629, %v1038, 0
      %v1685 = vsel %vm1629, %v1119, 0
      %v1688 = vsel %vm1629, %v1120, 0
      %v1691 = vsel %vm1629, %v1201, 0
      %v1694 = vsel %vm1629, %v1202, 0
      %v1697 = vsel %vm1629, %v1283, 0
      %v1700 = vsel %vm1629, %v1284, 0
      %v1703 = vsel %vm1629, %v1365, 0
      %v1706 = vsel %vm1629, %v1366, 0
      %v1709 = vsel %vm1629, %v1447, 0
      %v1712 = vsel %vm1629, %v1448, 0
      %v1715 = vsel %vm1629, %v1529, 0
      %v1718 = vsel %vm1629, %v1530, 0
      %v1721 = vsel %vm1629, %v1611, 0
      %v1724 = vsel %vm1629, %v1612, 0
      %1726 = vmatprep.subr.mxu0 0.0
      %1727 = vmatpush1.msra.mxu0 %v1613
      %1728 = vmatprep.subr.mxu0 0.0
      %1729 = vmatpush1.msra.mxu0 %v1614
      %1730 = vmatprep.subr.mxu0 0.0
      %1731 = vmatpush1.msra.mxu0 %v1615
      %1732 = vmatprep.subr.mxu0 0.0
      %1733 = vmatpush1.msra.mxu0 %v1616
      %1734 = vmatprep.subr.mxu0 0.0
      %1735 = vmatpush1.msra.mxu0 %v1617
      %1736 = vmatprep.subr.mxu0 0.0
      %1737 = vmatpush1.msra.mxu0 %v1618
      %1738 = vmatprep.subr.mxu0 0.0
      %1739 = vmatpush1.msra.mxu0 %v1619
      %1740 = vmatprep.subr.mxu0 0.0
      %1741 = vmatpush1.msra.mxu0 %v1620
      %1742 = vmatprep.subr.mxu0 0.0
      %1743 = vmatpush1.msra.mxu0 %v1621
      %1744 = vmatprep.subr.mxu0 0.0
      %1745 = vmatpush1.msra.mxu0 0.0
      %1746 = vmatprep.subr.mxu0 0.0
      %1747 = vmatpush1.msra.mxu0 0.0
      %1748 = vmatprep.subr.mxu0 0.0
      %1749 = vmatpush1.msra.mxu0 0.0
      %1750 = vmatprep.subr.mxu0 0.0
      %1751 = vmatpush1.msra.mxu0 0.0
      %1752 = vmatprep.subr.mxu0 0.0
      %1753 = vmatpush1.msra.mxu0 0.0
      %1754 = vmatprep.subr.mxu0 0.0
      %1755 = vmatpush1.msra.mxu0 0.0
      %1756 = vmatprep.subr.mxu0 0.0
      %1757 = vmatpush1.msra.mxu0 0.0
      %1758 = vmatprep.subr.mxu0 0.0
      %1759 = vmatpush1.msra.mxu0 0.0
      %1760 = vmatprep.subr.mxu0 0.0
      %1761 = vmatpush1.msra.mxu0 0.0
      %1762 = vmatprep.subr.mxu0 0.0
      %1763 = vmatpush1.msra.mxu0 0.0
      %1764 = vmatprep.subr.mxu0 0.0
      %1765 = vmatpush1.msra.mxu0 0.0
      %1766 = vmatprep.subr.mxu0 0.0
      %1767 = vmatpush1.msra.mxu0 0.0
      %1768 = vmatprep.subr.mxu0 0.0
      %1769 = vmatpush1.msra.mxu0 0.0
      %1770 = vmatprep.subr.mxu0 0.0
      %1771 = vmatpush1.msra.mxu0 0.0
      %1772 = vmatprep.subr.mxu0 0.0
      %1773 = vmatpush1.msra.mxu0 0.0
      %1774 = vmatprep.subr.mxu0 0.0
      %1775 = vmatpush1.msra.mxu0 0.0
      %1776 = vmatprep.subr.mxu0 0.0
      %1777 = vmatpush1.msra.mxu0 0.0
      %1778 = vmatprep.subr.mxu0 0.0
      %1779 = vmatpush1.msra.mxu0 0.0
      %1780 = vmatprep.subr.mxu0 0.0
      %1781 = vmatpush1.msra.mxu0 0.0
      %1782 = vmatprep.subr.mxu0 0.0
      %1783 = vmatpush1.msra.mxu0 0.0
      %1784 = vmatprep.subr.mxu0 0.0
      %1785 = vmatpush1.msra.mxu0 0.0
      %1786 = vmatprep.subr.mxu0 0.0
      %1787 = vmatpush1.msra.mxu0 0.0
      %1788 = vmatprep.subr.mxu0 0.0
      %1789 = vmatpush1.msra.mxu0 0.0
      %1790 = vmatprep.mubr.f32.mxu0 0.0
      %1791 = vmatmul.mubr.f32.gmra.mrb[0].mxu0 %v1631
      %v1792 = vpop.f32.mrb[0].mxu0
      %v1793 = vadd.f32 %v1627, %v1792
      %v1794 = vpop.f32.mrb[0].mxu0
      %1795 = vmatprep.mubr.f32.mxu0 0.0
      %1796 = vmatmul.mubr.f32.gmra.mrb[0].mxu0 %v1634
      %v1797 = vpop.f32.mrb[0].mxu0
      %v1798 = vadd.f32 %v1627, %v1797
      %v1799 = vpop.f32.mrb[0].mxu0
      %1800 = vmatprep.mubr.f32.mxu0 0.0
      %1801 = vmatmul.mubr.f32.gmra.mrb[0].mxu0 %v1637
      %v1802 = vpop.f32.mrb[0].mxu0
      %v1803 = vadd.f32 %v1627, %v1802
      %v1804 = vpop.f32.mrb[0].mxu0
      %1805 = vmatprep.mubr.f32.mxu0 0.0
      %1806 = vmatmul.mubr.f32.gmra.mrb[0].mxu0 %v1640
      %v1807 = vpop.f32.mrb[0].mxu0
      %v1808 = vadd.f32 %v1627, %v1807
      %v1809 = vpop.f32.mrb[0].mxu0
      %1810 = vmatprep.mubr.f32.mxu0 0.0
      %1811 = vmatmul.mubr.f32.gmra.mrb[0].mxu0 %v1643
      %v1812 = vpop.f32.mrb[0].mxu0
      %v1813 = vadd.f32 %v1627, %v1812
      %v1814 = vpop.f32.mrb[0].mxu0
      %1815 = vmatprep.mubr.f32.mxu0 0.0
      %1816 = vmatmul.mubr.f32.gmra.mrb[0].mxu0 %v1646
      %v1817 = vpop.f32.mrb[0].mxu0
      %v1818 = vadd.f32 %v1627, %v1817
      %v1819 = vpop.f32.mrb[0].mxu0
      %1820 = vmatprep.mubr.f32.mxu0 0.0
      %1821 = vmatmul.mubr.f32.gmra.mrb[0].mxu0 %v1649
      %v1822 = vpop.f32.mrb[0].mxu0
      %v1823 = vadd.f32 %v1627, %v1822
      %v1824 = vpop.f32.mrb[0].mxu0
      %1825 = vmatprep.mubr.f32.mxu0 0.0
      %1826 = vmatmul.mubr.f32.gmra.mrb[0].mxu0 %v1652
      %v1827 = vpop.f32.mrb[0].mxu0
      %v1828 = vadd.f32 %v1627, %v1827
      %v1829 = vpop.f32.mrb[0].mxu0
      %1830 = vmatprep.mubr.f32.mxu0 0.0
      %1831 = vmatmul.mubr.f32.gmra.mrb[0].mxu0 %v1655
      %v1832 = vpop.f32.mrb[0].mxu0
      %v1833 = vadd.f32 %v1627, %v1832
      %v1834 = vpop.f32.mrb[0].mxu0
      %1835 = vmatprep.mubr.f32.mxu0 0.0
      %1836 = vmatmul.mubr.f32.gmra.mrb[0].mxu0 %v1658
      %v1837 = vpop.f32.mrb[0].mxu0
      %v1838 = vadd.f32 %v1627, %v1837
      %v1839 = vpop.f32.mrb[0].mxu0
      %1840 = vmatprep.mubr.f32.mxu0 0.0
      %1841 = vmatmul.mubr.f32.gmra.mrb[0].mxu0 %v1661
      %v1842 = vpop.f32.mrb[0].mxu0
      %v1843 = vadd.f32 %v1627, %v1842
      %v1844 = vpop.f32.mrb[0].mxu0
      %1845 = vmatprep.mubr.f32.mxu0 0.0
      %1846 = vmatmul.mubr.f32.gmra.mrb[0].mxu0 %v1664
      %v1847 = vpop.f32.mrb[0].mxu0
      %v1848 = vadd.f32 %v1627, %v1847
      %v1849 = vpop.f32.mrb[0].mxu0
      %1850 = vmatprep.mubr.f32.mxu0 0.0
      %1851 = vmatmul.mubr.f32.gmra.mrb[0].mxu0 %v1667
      %v1852 = vpop.f32.mrb[0].mxu0
      %v1853 = vadd.f32 %v1627, %v1852
      %v1854 = vpop.f32.mrb[0].mxu0
      %1855 = vmatprep.mubr.f32.mxu0 0.0
      %1856 = vmatmul.mubr.f32.gmra.mrb[0].mxu0 %v1670
      %v1857 = vpop.f32.mrb[0].mxu0
      %v1858 = vadd.f32 %v1627, %v1857
      %v1859 = vpop.f32.mrb[0].mxu0
      %1860 = vmatprep.mubr.f32.mxu0 0.0
      %1861 = vmatmul.mubr.f32.gmra.mrb[0].mxu0 %v1673
      %v1862 = vpop.f32.mrb[0].mxu0
      %v1863 = vadd.f32 %v1627, %v1862
      %v1864 = vpop.f32.mrb[0].mxu0
      %1865 = vmatprep.mubr.f32.mxu0 0.0
      %1866 = vmatmul.mubr.f32.gmra.mrb[0].mxu0 %v1676
      %v1867 = vpop.f32.mrb[0].mxu0
      %v1868 = vadd.f32 %v1627, %v1867
      %v1869 = vpop.f32.mrb[0].mxu0
      %1870 = vmatprep.mubr.f32.mxu0 0.0
      %1871 = vmatmul.mubr.f32.gmra.mrb[0].mxu0 %v1679
      %v1872 = vpop.f32.mrb[0].mxu0
      %v1873 = vadd.f32 %v1627, %v1872
      %v1874 = vpop.f32.mrb[0].mxu0
      %1875 = vmatprep.mubr.f32.mxu0 0.0
      %1876 = vmatmul.mubr.f32.gmra.mrb[0].mxu0 %v1682
      %v1877 = vpop.f32.mrb[0].mxu0
      %v1878 = vadd.f32 %v1627, %v1877
      %v1879 = vpop.f32.mrb[0].mxu0
      %1880 = vmatprep.mubr.f32.mxu0 0.0
      %1881 = vmatmul.mubr.f32.gmra.mrb[0].mxu0 %v1685
      %v1882 = vpop.f32.mrb[0].mxu0
      %v1883 = vadd.f32 %v1627, %v1882
      %v1884 = vpop.f32.mrb[0].mxu0
      %1885 = vmatprep.mubr.f32.mxu0 0.0
      %1886 = vmatmul.mubr.f32.gmra.mrb[0].mxu0 %v1688
      %v1887 = vpop.f32.mrb[0].mxu0
      %v1888 = vadd.f32 %v1627, %v1887
      %v1889 = vpop.f32.mrb[0].mxu0
      %1890 = vmatprep.mubr.f32.mxu0 0.0
      %1891 = vmatmul.mubr.f32.gmra.mrb[0].mxu0 %v1691
      %v1892 = vpop.f32.mrb[0].mxu0
      %v1893 = vadd.f32 %v1627, %v1892
      %v1894 = vpop.f32.mrb[0].mxu0
      %1895 = vmatprep.mubr.f32.mxu0 0.0
      %1896 = vmatmul.mubr.f32.gmra.mrb[0].mxu0 %v1694
      %v1897 = vpop.f32.mrb[0].mxu0
      %v1898 = vadd.f32 %v1627, %v1897
      %v1899 = vpop.f32.mrb[0].mxu0
      %1900 = vmatprep.mubr.f32.mxu0 0.0
      %1901 = vmatmul.mubr.f32.gmra.mrb[0].mxu0 %v1697
      %v1902 = vpop.f32.mrb[0].mxu0
      %v1903 = vadd.f32 %v1627, %v1902
      %v1904 = vpop.f32.mrb[0].mxu0
      %1905 = vmatprep.mubr.f32.mxu0 0.0
      %1906 = vmatmul.mubr.f32.gmra.mrb[0].mxu0 %v1700
      %v1907 = vpop.f32.mrb[0].mxu0
      %v1908 = vadd.f32 %v1627, %v1907
      %v1909 = vpop.f32.mrb[0].mxu0
      %1910 = vmatprep.mubr.f32.mxu0 0.0
      %1911 = vmatmul.mubr.f32.gmra.mrb[0].mxu0 %v1703
      %v1912 = vpop.f32.mrb[0].mxu0
      %v1913 = vadd.f32 %v1627, %v1912
      %v1914 = vpop.f32.mrb[0].mxu0
      %1915 = vmatprep.mubr.f32.mxu0 0.0
      %1916 = vmatmul.mubr.f32.gmra.mrb[0].mxu0 %v1706
      %v1917 = vpop.f32.mrb[0].mxu0
      %v1918 = vadd.f32 %v1627, %v1917
      %v1919 = vpop.f32.mrb[0].mxu0
      %1920 = vmatprep.mubr.f32.mxu0 0.0
      %1921 = vmatmul.mubr.f32.gmra.mrb[0].mxu0 %v1709
      %v1922 = vpop.f32.mrb[0].mxu0
      %v1923 = vadd.f32 %v1627, %v1922
      %v1924 = vpop.f32.mrb[0].mxu0
      %1925 = vmatprep.mubr.f32.mxu0 0.0
      %1926 = vmatmul.mubr.f32.gmra.mrb[0].mxu0 %v1712
      %v1927 = vpop.f32.mrb[0].mxu0
      %v1928 = vadd.f32 %v1627, %v1927
      %v1929 = vpop.f32.mrb[0].mxu0
      %1930 = vmatprep.mubr.f32.mxu0 0.0
      %1931 = vmatmul.mubr.f32.gmra.mrb[0].mxu0 %v1715
      %v1932 = vpop.f32.mrb[0].mxu0
      %v1933 = vadd.f32 %v1627, %v1932
      %v1934 = vpop.f32.mrb[0].mxu0
      %1935 = vmatprep.mubr.f32.mxu0 0.0
      %1936 = vmatmul.mubr.f32.gmra.mrb[0].mxu0 %v1718
      %v1937 = vpop.f32.mrb[0].mxu0
      %v1938 = vadd.f32 %v1627, %v1937
      %v1939 = vpop.f32.mrb[0].mxu0
      %1940 = vmatprep.mubr.f32.mxu0 0.0
      %1941 = vmatmul.mubr.f32.gmra.mrb[0].mxu0 %v1721
      %v1942 = vpop.f32.mrb[0].mxu0
      %v1943 = vadd.f32 %v1627, %v1942
      %v1944 = vpop.f32.mrb[0].mxu0
      %1945 = vmatprep.mubr.f32.mxu0 0.0
      %1946 = vmatmul.mubr.f32.gmra.mrb[0].mxu0 %v1724
      %v1947 = vpop.f32.mrb[0].mxu0
      %v1948 = vadd.f32 %v1627, %v1947
      %v1949 = vpop.f32.mrb[0].mxu0
      %1950 = vdwg.mxu0
      %1951 = vst [vmem:[%s257] sm:$0xff] %v1793
      %1952 = vst [vmem:[%s257 + $0x8] sm:$0xff] %v1798
      %1953 = vst [vmem:[%s257 + $0x10] sm:$0xff] %v1803
      %1954 = vst [vmem:[%s257 + $0x18] sm:$0xff] %v1808
      %1955 = vst [vmem:[%s257 + $0x20] sm:$0xff] %v1813
      %1956 = vst [vmem:[%s257 + $0x28] sm:$0xff] %v1818
      %1957 = vst [vmem:[%s257 + $0x30] sm:$0xff] %v1823
      %1958 = vst [vmem:[%s257 + $0x38] sm:$0xff] %v1828
      %1959 = vst [vmem:[%s257 + $0x40] sm:$0xff] %v1833
      %1960 = vst [vmem:[%s257 + $0x48] sm:$0xff] %v1838
      %1961 = vst [vmem:[%s257 + $0x50] sm:$0xff] %v1843
      %1962 = vst [vmem:[%s257 + $0x58] sm:$0xff] %v1848
      %1963 = vst [vmem:[%s257 + $0x60] sm:$0xff] %v1853
      %1964 = vst [vmem:[%s257 + $0x68] sm:$0xff] %v1858
      %1965 = vst [vmem:[%s257 + $0x70] sm:$0xff] %v1863
      %1966 = vst [vmem:[%s257 + $0x78] sm:$0xff] %v1868
      %1967 = vst [vmem:[%s257 + $0x80] sm:$0xff] %v1873
      %1968 = vst [vmem:[%s257 + $0x88] sm:$0xff] %v1878
      %1969 = vst [vmem:[%s257 + $0x90] sm:$0xff] %v1883
      %1970 = vst [vmem:[%s257 + $0x98] sm:$0xff] %v1888
      %1971 = vst [vmem:[%s257 + $0xa0] sm:$0xff] %v1893
      %1972 = vst [vmem:[%s257 + $0xa8] sm:$0xff] %v1898
      %1973 = vst [vmem:[%s257 + $0xb0] sm:$0xff] %v1903
      %1974 = vst [vmem:[%s257 + $0xb8] sm:$0xff] %v1908
      %1975 = vst [vmem:[%s257 + $0xc0] sm:$0xff] %v1913
      %1976 = vst [vmem:[%s257 + $0xc8] sm:$0xff] %v1918
      %1977 = vst [vmem:[%s257 + $0xd0] sm:$0xff] %v1923
      %1978 = vst [vmem:[%s257 + $0xd8] sm:$0xff] %v1928
      %1979 = vst [vmem:[%s257 + $0xe0] sm:$0xff] %v1933
      %1980 = vst [vmem:[%s257 + $0xe8] sm:$0xff] %v1938
      %1981 = vst [vmem:[%s257 + $0xf0] sm:$0xff] %v1943
      %1982 = vst [vmem:[%s257 + $0xf8] sm:$0xff] %v1948
      %s1983 = smul.u32 32, %s21
      %p1984 = scmp.lt.s32.totalorder %s20, 1
      %s1985 = scalar_select %p1984, %s20, 1
      %p1986 = scmp.lt.s32.totalorder %s19, 0
      %s1987 = scalar_select %p1986, %s19, 0
      %p1988 = scmp.lt.s32.totalorder %s1983, 31
      %s1989 = scalar_select %p1988, %s1983, 31
      %s1990 = smul.addr %s1987, 32
      %s1991 = sadd.s32 %s1989, %s1990
      %s1992 = smul.addr %s1985, 32
      %s1993 = sadd.s32 %s1991, %s1992
      %s1994 = smul.addr %s1993, 8
      %s1995 = scalar_lea.vmem %s3, %s1994
      // Predicated region
      $region33: #{conv2d_pallas.1} parent=31 // pred_check
        %p1996 = pneg %p135
      $region34: #{conv2d_pallas.1} parent=31 // pred_check_branch
        %1998 = sbr.rel (%p1996) target = $region36
      $region35: #{conv2d_pallas.1} parent=31 // pred_region
        %s1999 = smul.u32 32, %s21
      $region36: #{conv2d_pallas.1} parent=31 // pred_fallthru
        _
    $region32: #{conv2d_pallas.1} parent=5 // pred_fallthru
      _
    %p2000 = scmp.le.s32.totalorder 2, %s9
    // Predicated region
    $region37: #{conv2d_pallas.1} parent=5 // pred_check
      %p2001 = pneg %p2000
    $region38: #{conv2d_pallas.1} parent=5 // pred_check_branch
      %2003 = sbr.rel (%p2001) target = $region40
    $region39: #{conv2d_pallas.1} parent=5 // pred_region
      %s2004 = ssub.s32 %s9, 2
      // Predicated region
      $region41: #{conv2d_pallas.1} parent=39 // pred_check
        %p2005 = pneg %p141
      $region42: #{conv2d_pallas.1} parent=39 // pred_check_branch
        %2007 = sbr.rel (%p2005) target = $region44
      $region43: #{conv2d_pallas.1} parent=39 // pred_region
        %s2008 = smul.u32 32, %s24
        %p2009 = scmp.lt.s32.totalorder %s23, 1
        %s2010 = scalar_select %p2009, %s23, 1
        %p2011 = scmp.lt.s32.totalorder %s22, 0
        %s2012 = scalar_select %p2011, %s22, 0
        %p2013 = scmp.lt.s32.totalorder %s2008, 31
        %s2014 = scalar_select %p2013, %s2008, 31
        %s2015 = smul.addr %s2012, 32
        %s2016 = sadd.s32 %s2014, %s2015
        %s2017 = smul.addr %s2010, 32
        %s2018 = sadd.s32 %s2016, %s2017
        %s2019 = smul.addr %s2018, 8
        %s2020 = scalar_lea.vmem %s3, %s2019
      $region44: #{conv2d_pallas.1} parent=39 // pred_fallthru
        _
    $region40: #{conv2d_pallas.1} parent=5 // pred_fallthru
      _
  $region6: #{conv2d_pallas.1} parent=0 // loop_footer
    %s13 = sadd.s32 1, %s9
  $region7: #{conv2d_pallas.1} parent=0 // loop_footer_branch
    %8 = sbr.rel target = $region3
  $region8: #{conv2d_pallas.1} parent=0 // loop_exit
    _

</llo_original>
